<compile_context>
chip_gen: v5e
topology: v5e:2x2
jax: 0.10.0
libtpu: 0.0.40
codegen_flags: <defaults>
</compile_context>

<pallas_src>
import jax
import jax.numpy as jnp
from jax.experimental import pallas as pl
from jax.experimental.pallas import tpu as pltpu  # noqa: F401  (TPU backend assumed)

# ---------------- config (small, structure-identical to ViT-B/16) ----------------
IMAGE = 32          # image size (ViT-B/16 uses 224; scaled down)
PATCH = 16          # patch size (same as ViT-B/16)
CHANS = 3           # RGB
HIDDEN = 32         # hidden dim (768 in ViT-B/16)
HEADS = 4           # attention heads (12 in ViT-B/16)
LAYERS = 2          # encoder layers (12 in ViT-B/16)
MLP = 64            # MLP dim (3072 in ViT-B/16)
NUM_CLASSES = 1     # replaced head -> Linear(num_ftrs, 1)
BATCH = 8           # chosen so B*S = 40 is a multiple of 8 (full f32 sublane tiles)

EPS = 1e-6          # torchvision ViT uses LayerNorm(eps=1e-6)
SEQ = (IMAGE // PATCH) ** 2 + 1   # patches + class token
HEAD_DIM = HIDDEN // HEADS
NEG_INF = -1e30


# ---------------- in-kernel helpers ----------------
def _layernorm(x, w, b):
    # one-pass statistics: mean and E[x^2] are independent cross-lane reductions
    mu = jnp.mean(x, axis=-1, keepdims=True)
    m2 = jnp.mean(x * x, axis=-1, keepdims=True)
    var = m2 - mu * mu
    return (x - mu) * jax.lax.rsqrt(var + EPS) * w + b


def _gelu(x):
    # TODO(synk): nn.GELU default is the exact erf form; using tanh approximation in-kernel.
    return 0.5 * x * (1.0 + jnp.tanh(0.7978845608028654 * (x + 0.044715 * x * x * x)))


# ---------------- the single fused kernel ----------------
def vit_fused_kernel(patches_ref, base_ref, conv_w_ref, attn_w_ref,
                     fc1_w_ref, fc2_w_ref, small_ref, o_ref):
    bf16 = jnp.bfloat16
    BS, H = base_ref.shape                   # (B*S, hidden)
    B = o_ref.shape[0]
    S = BS // B
    L = attn_w_ref.shape[0]
    nh = HEADS
    d = H // nh
    MLPD = fc1_w_ref.shape[-1]

    # ---- patch embedding; cls token, conv bias and positional embedding folded into `base`
    x = jnp.dot(patches_ref[...], conv_w_ref[...],
                preferred_element_type=jnp.float32) + base_ref[...]          # (BS, H) f32

    # ---- block-diagonal attention mask built in-kernel (no DMA operand, no int division)
    r = jax.lax.broadcasted_iota(jnp.int32, (BS, BS), 0)
    c = jax.lax.broadcasted_iota(jnp.int32, (BS, BS), 1)
    rb = jnp.zeros((BS, BS), jnp.int32)
    cb = jnp.zeros((BS, BS), jnp.int32)
    for b in range(1, B):                    # static unroll: batch-id via compare-sum
        rb = rb + (r >= b * S).astype(jnp.int32)
        cb = cb + (c >= b * S).astype(jnp.int32)
    mask = jnp.where(rb == cb, 0.0, NEG_INF).astype(jnp.float32)

    for l in range(L):                       # static unroll (2 layers)
        sp = small_ref[l]                    # (8, 3H) f32 small-params slab
        ln1_w, ln1_b = sp[0:1, 0:H], sp[1:2, 0:H]
        qkv_b = sp[2:3, :]                   # (1, 3H); q-part pre-scaled by 1/sqrt(d)
        out_b = sp[3:4, 0:H]
        ln2_w, ln2_b = sp[4:5, 0:H], sp[5:6, 0:H]
        fc1_b = sp[6:7, 0:MLPD]
        fc2_b = sp[7:8, 0:H]

        aw = attn_w_ref[l]                   # (H, 4H) bf16 = [Wq*s | Wk | Wv | Wout]
        qkv_w = aw[:, 0:3 * H]
        out_w = aw[:, 3 * H:4 * H]

        # ---- pre-LN multi-head self-attention: one fused QKV matmul, per-head lane slices
        h1 = _layernorm(x, ln1_w, ln1_b)
        qkv = jnp.dot(h1.astype(bf16), qkv_w,
                      preferred_element_type=jnp.float32) + qkv_b            # (BS, 3H)
        heads_out = []
        for h in range(nh):                  # static unroll
            qh = qkv[:, h * d:(h + 1) * d]
            kh = qkv[:, H + h * d:H + (h + 1) * d]
            vh = qkv[:, 2 * H + h * d:2 * H + (h + 1) * d]
            s = jax.lax.dot_general(qh.astype(bf16), kh.astype(bf16),
                                    (((1,), (1,)), ((), ())),
                                    preferred_element_type=jnp.float32)      # (BS, BS)
            s = s + mask
            s = s - jnp.max(s, axis=-1, keepdims=True)
            p = jnp.exp(s)
            p = p * pl.reciprocal(jnp.sum(p, axis=-1, keepdims=True), approx=True)
            heads_out.append(jnp.dot(p.astype(bf16), vh.astype(bf16),
                                     preferred_element_type=jnp.float32))    # (BS, d)
        attn = jnp.concatenate(heads_out, axis=-1)                           # (BS, H)
        proj = jnp.dot(attn.astype(bf16), out_w,
                       preferred_element_type=jnp.float32)
        x = x + proj + out_b                 # residual 1 (+ out_proj bias)

        # ---- pre-LN MLP ----
        h2 = _layernorm(x, ln2_w, ln2_b)
        y = jnp.dot(h2.astype(bf16), fc1_w_ref[l],
                    preferred_element_type=jnp.float32) + fc1_b
        y = _gelu(y)
        y = jnp.dot(y.astype(bf16), fc2_w_ref[l],
                    preferred_element_type=jnp.float32) + fc2_b
        x = x + y                            # residual 2

    # ---- final LN on class-token rows only, then linear head (NUM_CLASSES = 1) ----
    spf = small_ref[L]
    lnf_w, lnf_b = spf[0:1, 0:H], spf[1:2, 0:H]
    head_w = spf[2:3, 0:H]                   # (1, H) = head weight column
    head_b = spf[3:4, 0:1]                   # (1, 1)
    rowi = jax.lax.broadcasted_iota(jnp.int32, (B, BS), 0)
    coli = jax.lax.broadcasted_iota(jnp.int32, (B, BS), 1)
    sel = (coli == rowi * S).astype(jnp.float32)                             # (B, BS)
    cls = jnp.dot(sel, x, preferred_element_type=jnp.float32)                # exact row select
    cls = _layernorm(cls, lnf_w, lnf_b)
    out = jnp.sum(cls * head_w, axis=-1, keepdims=True) + head_b             # (B, 1)
    o_ref[...] = out.astype(o_ref.dtype)


# ---------------- wrapper-side packing (pure layout, done once at trace time) ----------------
def pack_params(params):
    H, L, W = HIDDEN, LAYERS, 3 * HIDDEN
    scale = 1.0 / (HEAD_DIM ** 0.5)

    def pad_row(v):
        v = jnp.asarray(v, jnp.float32).reshape(-1)
        return jnp.pad(v, (0, W - v.shape[0]))

    attn_w, fc1_w, fc2_w, small = [], [], [], []
    for lp in params["layers"]:
        # fold 1/sqrt(head_dim) into the Q weights/bias
        qkv_w = jnp.concatenate([lp["qkv_w"][:, :H] * scale, lp["qkv_w"][:, H:]], axis=1)
        qkv_b = jnp.concatenate([lp["qkv_b"][:, :H] * scale, lp["qkv_b"][:, H:]], axis=1)
        attn_w.append(jnp.concatenate([qkv_w, lp["out_w"]], axis=1))         # (H, 4H)
        fc1_w.append(lp["fc1_w"])
        fc2_w.append(lp["fc2_w"])
        small.append(jnp.stack([
            pad_row(lp["ln1_w"]), pad_row(lp["ln1_b"]),
            pad_row(qkv_b), pad_row(lp["out_b"]),
            pad_row(lp["ln2_w"]), pad_row(lp["ln2_b"]),
            pad_row(lp["fc1_b"]), pad_row(lp["fc2_b"])], axis=0))            # (8, 3H)
    # final slab: final LayerNorm + classification head
    zero = jnp.zeros((W,), jnp.float32)
    small.append(jnp.stack([
        pad_row(params["ln_f_w"]), pad_row(params["ln_f_b"]),
        pad_row(params["head_w"][:, 0]), pad_row(params["head_b"]),
        zero, zero, zero, zero], axis=0))
    return {
        "attn_w": jnp.stack(attn_w).astype(jnp.bfloat16),    # (L, H, 4H)
        "fc1_w": jnp.stack(fc1_w).astype(jnp.bfloat16),      # (L, H, MLP)
        "fc2_w": jnp.stack(fc2_w).astype(jnp.bfloat16),      # (L, MLP, H)
        "small": jnp.stack(small).astype(jnp.float32),       # (L+1, 8, 3H)
    }


# ---------------- forward (mirrors torchvision VisionTransformer.forward, eval mode) ----------
def vit_forward(x, params):
    B, C, Hi, Wi = x.shape
    gh, gw = Hi // PATCH, Wi // PATCH
    P = gh * gw
    S = P + 1
    K = C * PATCH * PATCH
    BS = B * S

    # TODO(synk): patch extraction (conv_proj as a per-patch linear) is a pure layout
    # transform kept in XLA; the projection matmul itself runs inside the fused kernel.
    p = x.reshape(B, C, gh, PATCH, gw, PATCH)
    p = p.transpose(0, 2, 4, 1, 3, 5).reshape(B, P, K).astype(jnp.float32)
    # zero row at each batch's class-token position -> (B*S, K)
    patches = jnp.concatenate([jnp.zeros((B, 1, K), jnp.float32), p], axis=1)
    patches = patches.reshape(BS, K).astype(jnp.bfloat16)

    # Additive base: cls rows get class_token + pos[0]; patch rows get conv bias + pos[1:]
    pos = params["pos_embedding"][0]                      # (S, H)
    cls_row = params["class_token"][0] + pos[0:1]         # (1, H)
    patch_rows = params["conv_b"] + pos[1:]               # (P, H)
    base = jnp.tile(jnp.concatenate([cls_row, patch_rows], axis=0), (B, 1))  # (B*S, H) f32

    pk = pack_params(params)

    out = pl.pallas_call(
        vit_fused_kernel,
        out_shape=jax.ShapeDtypeStruct((B, NUM_CLASSES), jnp.float32),
    )(patches, base, params["conv_w"].astype(jnp.bfloat16),
      pk["attn_w"], pk["fc1_w"], pk["fc2_w"], pk["small"])
    return out                                            # (B, NUM_CLASSES)


# ---------------- parameters (deterministic in-script init; no checkpoint) ----------------
def init_params(key):
    K = CHANS * PATCH * PATCH

    def nrm(key, shape, scale=0.02):
        return (scale * jax.random.normal(key, shape)).astype(jnp.float32)

    keys = iter(jax.random.split(key, 6 + LAYERS * 6))
    params = {
        # conv_proj weight (hidden, C, p, p) stored flattened+transposed as (C*p*p, hidden)
        "conv_w": nrm(next(keys), (K, HIDDEN)),
        "conv_b": jnp.zeros((1, HIDDEN), jnp.float32),
        "class_token": nrm(next(keys), (1, 1, HIDDEN)),
        "pos_embedding": nrm(next(keys), (1, SEQ, HIDDEN)),
        "ln_f_w": jnp.ones((1, HIDDEN), jnp.float32),
        "ln_f_b": jnp.zeros((1, HIDDEN), jnp.float32),
        "head_w": nrm(next(keys), (HIDDEN, NUM_CLASSES)),
        "head_b": jnp.zeros((1, NUM_CLASSES), jnp.float32),
        "layers": [],
    }
    for _ in range(LAYERS):
        params["layers"].append({
            "ln1_w": jnp.ones((1, HIDDEN), jnp.float32),
            "ln1_b": jnp.zeros((1, HIDDEN), jnp.float32),
            "qkv_w": nrm(next(keys), (HIDDEN, 3 * HIDDEN)),   # = in_proj_weight.T
            "qkv_b": jnp.zeros((1, 3 * HIDDEN), jnp.float32),
            "out_w": nrm(next(keys), (HIDDEN, HIDDEN)),       # = out_proj.weight.T
            "out_b": jnp.zeros((1, HIDDEN), jnp.float32),
            "ln2_w": jnp.ones((1, HIDDEN), jnp.float32),
            "ln2_b": jnp.zeros((1, HIDDEN), jnp.float32),
            "fc1_w": nrm(next(keys), (HIDDEN, MLP)),
            "fc1_b": jnp.zeros((1, MLP), jnp.float32),
            "fc2_w": nrm(next(keys), (MLP, HIDDEN)),
            "fc2_b": jnp.zeros((1, HIDDEN), jnp.float32),
        })
    return params


if __name__ == "__main__":
    key = jax.random.PRNGKey(0)
    k_x, k_p = jax.random.split(key)
    x = jax.random.normal(k_x, (BATCH, CHANS, IMAGE, IMAGE), jnp.float32)
    params = init_params(k_p)
    out = jax.block_until_ready(jax.jit(vit_forward)(x, params))
    assert out.shape == (BATCH, NUM_CLASSES) and bool(jnp.all(jnp.isfinite(out)))
    print("KERNEL_OK")
</pallas_src>

<mosaic_0001>
module attributes {stable_mosaic.version = 11 : i64} {
  func.func @vit_fused_kernel(%arg0: memref<40x768xbf16, #tpu.memory_space<vmem>>, %arg1: memref<40x32xf32, #tpu.memory_space<vmem>>, %arg2: memref<768x32xbf16, #tpu.memory_space<vmem>>, %arg3: memref<2x32x128xbf16, #tpu.memory_space<vmem>>, %arg4: memref<2x32x64xbf16, #tpu.memory_space<vmem>>, %arg5: memref<2x64x32xbf16, #tpu.memory_space<vmem>>, %arg6: memref<3x8x96xf32, #tpu.memory_space<vmem>>, %arg7: memref<8x1xf32, #tpu.memory_space<vmem>>) attributes {dimension_semantics = [], scalar_prefetch = 0 : i64, scratch_operands = 0 : i64, tpu.core_type = #tpu.core_type<tc>} {
    %c0 = arith.constant 0 : index
    %c0_0 = arith.constant 0 : index
    %0 = vector.load %arg0[%c0, %c0_0] : memref<40x768xbf16, #tpu.memory_space<vmem>>, vector<40x768xbf16>
    %c0_1 = arith.constant 0 : index
    %c0_2 = arith.constant 0 : index
    %1 = vector.load %arg2[%c0_1, %c0_2] : memref<768x32xbf16, #tpu.memory_space<vmem>>, vector<768x32xbf16>
    %cst = arith.constant dense<0.000000e+00> : vector<40x32xf32>
    %2 = tpu.matmul %0, %1, %cst {dimension_numbers = #tpu.dot_dimension_numbers<[1], [0], [0], [1], [0, 0, 1, 1], [], []>} : vector<40x768xbf16>, vector<768x32xbf16>, vector<40x32xf32> -> vector<40x32xf32>
    %c0_3 = arith.constant 0 : index
    %c0_4 = arith.constant 0 : index
    %3 = vector.load %arg1[%c0_3, %c0_4] : memref<40x32xf32, #tpu.memory_space<vmem>>, vector<40x32xf32>
    %4 = arith.addf %2, %3 : vector<40x32xf32>
    %5 = tpu.iota {dimensions = array<i32: 0>} : vector<40x40xi32>
    %6 = tpu.iota {dimensions = array<i32: 1>} : vector<40x40xi32>
    %c0_i32 = arith.constant 0 : i32
    %7 = vector.broadcast %c0_i32 : i32 to vector<40x40xi32>
    %c0_i32_5 = arith.constant 0 : i32
    %8 = vector.broadcast %c0_i32_5 : i32 to vector<40x40xi32>
    %c5_i32 = arith.constant 5 : i32
    %9 = vector.broadcast %c5_i32 : i32 to vector<40x40xi32>
    %10 = arith.cmpi sge, %5, %9 : vector<40x40xi32>
    %11 = arith.extui %10 : vector<40x40xi1> to vector<40x40xi32>
    %12 = arith.addi %7, %11 : vector<40x40xi32>
    %c5_i32_6 = arith.constant 5 : i32
    %13 = vector.broadcast %c5_i32_6 : i32 to vector<40x40xi32>
    %14 = arith.cmpi sge, %6, %13 : vector<40x40xi32>
    %15 = arith.extui %14 : vector<40x40xi1> to vector<40x40xi32>
    %16 = arith.addi %8, %15 : vector<40x40xi32>
    %c10_i32 = arith.constant 10 : i32
    %17 = vector.broadcast %c10_i32 : i32 to vector<40x40xi32>
    %18 = arith.cmpi sge, %5, %17 : vector<40x40xi32>
    %19 = arith.extui %18 : vector<40x40xi1> to vector<40x40xi32>
    %20 = arith.addi %12, %19 : vector<40x40xi32>
    %c10_i32_7 = arith.constant 10 : i32
    %21 = vector.broadcast %c10_i32_7 : i32 to vector<40x40xi32>
    %22 = arith.cmpi sge, %6, %21 : vector<40x40xi32>
    %23 = arith.extui %22 : vector<40x40xi1> to vector<40x40xi32>
    %24 = arith.addi %16, %23 : vector<40x40xi32>
    %c15_i32 = arith.constant 15 : i32
    %25 = vector.broadcast %c15_i32 : i32 to vector<40x40xi32>
    %26 = arith.cmpi sge, %5, %25 : vector<40x40xi32>
    %27 = arith.extui %26 : vector<40x40xi1> to vector<40x40xi32>
    %28 = arith.addi %20, %27 : vector<40x40xi32>
    %c15_i32_8 = arith.constant 15 : i32
    %29 = vector.broadcast %c15_i32_8 : i32 to vector<40x40xi32>
    %30 = arith.cmpi sge, %6, %29 : vector<40x40xi32>
    %31 = arith.extui %30 : vector<40x40xi1> to vector<40x40xi32>
    %32 = arith.addi %24, %31 : vector<40x40xi32>
    %c20_i32 = arith.constant 20 : i32
    %33 = vector.broadcast %c20_i32 : i32 to vector<40x40xi32>
    %34 = arith.cmpi sge, %5, %33 : vector<40x40xi32>
    %35 = arith.extui %34 : vector<40x40xi1> to vector<40x40xi32>
    %36 = arith.addi %28, %35 : vector<40x40xi32>
    %c20_i32_9 = arith.constant 20 : i32
    %37 = vector.broadcast %c20_i32_9 : i32 to vector<40x40xi32>
    %38 = arith.cmpi sge, %6, %37 : vector<40x40xi32>
    %39 = arith.extui %38 : vector<40x40xi1> to vector<40x40xi32>
    %40 = arith.addi %32, %39 : vector<40x40xi32>
    %c25_i32 = arith.constant 25 : i32
    %41 = vector.broadcast %c25_i32 : i32 to vector<40x40xi32>
    %42 = arith.cmpi sge, %5, %41 : vector<40x40xi32>
    %43 = arith.extui %42 : vector<40x40xi1> to vector<40x40xi32>
    %44 = arith.addi %36, %43 : vector<40x40xi32>
    %c25_i32_10 = arith.constant 25 : i32
    %45 = vector.broadcast %c25_i32_10 : i32 to vector<40x40xi32>
    %46 = arith.cmpi sge, %6, %45 : vector<40x40xi32>
    %47 = arith.extui %46 : vector<40x40xi1> to vector<40x40xi32>
    %48 = arith.addi %40, %47 : vector<40x40xi32>
    %c30_i32 = arith.constant 30 : i32
    %49 = vector.broadcast %c30_i32 : i32 to vector<40x40xi32>
    %50 = arith.cmpi sge, %5, %49 : vector<40x40xi32>
    %51 = arith.extui %50 : vector<40x40xi1> to vector<40x40xi32>
    %52 = arith.addi %44, %51 : vector<40x40xi32>
    %c30_i32_11 = arith.constant 30 : i32
    %53 = vector.broadcast %c30_i32_11 : i32 to vector<40x40xi32>
    %54 = arith.cmpi sge, %6, %53 : vector<40x40xi32>
    %55 = arith.extui %54 : vector<40x40xi1> to vector<40x40xi32>
    %56 = arith.addi %48, %55 : vector<40x40xi32>
    %c35_i32 = arith.constant 35 : i32
    %57 = vector.broadcast %c35_i32 : i32 to vector<40x40xi32>
    %58 = arith.cmpi sge, %5, %57 : vector<40x40xi32>
    %59 = arith.extui %58 : vector<40x40xi1> to vector<40x40xi32>
    %60 = arith.addi %52, %59 : vector<40x40xi32>
    %c35_i32_12 = arith.constant 35 : i32
    %61 = vector.broadcast %c35_i32_12 : i32 to vector<40x40xi32>
    %62 = arith.cmpi sge, %6, %61 : vector<40x40xi32>
    %63 = arith.extui %62 : vector<40x40xi1> to vector<40x40xi32>
    %64 = arith.addi %56, %63 : vector<40x40xi32>
    %65 = arith.cmpi eq, %60, %64 : vector<40x40xi32>
    %cst_13 = arith.constant 0.000000e+00 : f32
    %cst_14 = arith.constant -1.000000e+30 : f32
    %66 = vector.broadcast %cst_13 : f32 to vector<40x40xf32>
    %67 = vector.broadcast %cst_14 : f32 to vector<40x40xf32>
    %68 = arith.select %65, %66, %67 : vector<40x40xi1>, vector<40x40xf32>
    %c0_15 = arith.constant 0 : index
    %c0_16 = arith.constant 0 : index
    %c0_17 = arith.constant 0 : index
    %69 = vector.load %arg6[%c0_15, %c0_16, %c0_17] : memref<3x8x96xf32, #tpu.memory_space<vmem>>, vector<1x8x96xf32>
    %70 = vector.shape_cast %69 : vector<1x8x96xf32> to vector<8x96xf32>
    %71 = vector.extract_strided_slice %70 {offsets = [0, 0], sizes = [1, 32], strides = [1, 1]} : vector<8x96xf32> to vector<1x32xf32>
    %72 = vector.extract_strided_slice %70 {offsets = [1, 0], sizes = [1, 32], strides = [1, 1]} : vector<8x96xf32> to vector<1x32xf32>
    %73 = vector.extract_strided_slice %70 {offsets = [2, 0], sizes = [1, 96], strides = [1, 1]} : vector<8x96xf32> to vector<1x96xf32>
    %74 = vector.extract_strided_slice %70 {offsets = [3, 0], sizes = [1, 32], strides = [1, 1]} : vector<8x96xf32> to vector<1x32xf32>
    %75 = vector.extract_strided_slice %70 {offsets = [4, 0], sizes = [1, 32], strides = [1, 1]} : vector<8x96xf32> to vector<1x32xf32>
    %76 = vector.extract_strided_slice %70 {offsets = [5, 0], sizes = [1, 32], strides = [1, 1]} : vector<8x96xf32> to vector<1x32xf32>
    %77 = vector.extract_strided_slice %70 {offsets = [6, 0], sizes = [1, 64], strides = [1, 1]} : vector<8x96xf32> to vector<1x64xf32>
    %78 = vector.extract_strided_slice %70 {offsets = [7, 0], sizes = [1, 32], strides = [1, 1]} : vector<8x96xf32> to vector<1x32xf32>
    %c0_18 = arith.constant 0 : index
    %c0_19 = arith.constant 0 : index
    %c0_20 = arith.constant 0 : index
    %79 = vector.load %arg3[%c0_18, %c0_19, %c0_20] : memref<2x32x128xbf16, #tpu.memory_space<vmem>>, vector<1x32x128xbf16>
    %80 = vector.shape_cast %79 : vector<1x32x128xbf16> to vector<32x128xbf16>
    %81 = vector.extract_strided_slice %80 {offsets = [0, 0], sizes = [32, 96], strides = [1, 1]} : vector<32x128xbf16> to vector<32x96xbf16>
    %82 = vector.extract_strided_slice %80 {offsets = [0, 96], sizes = [32, 32], strides = [1, 1]} : vector<32x128xbf16> to vector<32x32xbf16>
    %cst_21 = arith.constant dense<0.000000e+00> : vector<40xf32>
    %83 = vector.multi_reduction <add>, %4, %cst_21 [1] : vector<40x32xf32> to vector<40xf32>
    %84 = vector.shape_cast %83 : vector<40xf32> to vector<40x1xf32>
    %cst_22 = arith.constant 3.200000e+01 : f32
    %85 = vector.broadcast %cst_22 : f32 to vector<40x1xf32>
    %86 = arith.divf %84, %85 : vector<40x1xf32>
    %87 = arith.mulf %4, %4 : vector<40x32xf32>
    %cst_23 = arith.constant dense<0.000000e+00> : vector<40xf32>
    %88 = vector.multi_reduction <add>, %87, %cst_23 [1] : vector<40x32xf32> to vector<40xf32>
    %89 = vector.shape_cast %88 : vector<40xf32> to vector<40x1xf32>
    %cst_24 = arith.constant 3.200000e+01 : f32
    %90 = vector.broadcast %cst_24 : f32 to vector<40x1xf32>
    %91 = arith.divf %89, %90 : vector<40x1xf32>
    %92 = arith.mulf %86, %86 : vector<40x1xf32>
    %93 = arith.subf %91, %92 : vector<40x1xf32>
    %94 = vector.broadcast %86 : vector<40x1xf32> to vector<40x32xf32>
    %95 = arith.subf %4, %94 : vector<40x32xf32>
    %cst_25 = arith.constant 9.99999997E-7 : f32
    %96 = vector.broadcast %cst_25 : f32 to vector<40x1xf32>
    %97 = arith.addf %93, %96 : vector<40x1xf32>
    %98 = math.rsqrt %97 : vector<40x1xf32>
    %99 = vector.broadcast %98 : vector<40x1xf32> to vector<40x32xf32>
    %100 = arith.mulf %95, %99 : vector<40x32xf32>
    %101 = vector.broadcast %71 : vector<1x32xf32> to vector<40x32xf32>
    %102 = arith.mulf %100, %101 : vector<40x32xf32>
    %103 = vector.broadcast %72 : vector<1x32xf32> to vector<40x32xf32>
    %104 = arith.addf %102, %103 : vector<40x32xf32>
    %105 = arith.truncf %104 : vector<40x32xf32> to vector<40x32xbf16>
    %cst_26 = arith.constant dense<0.000000e+00> : vector<40x96xf32>
    %106 = tpu.matmul %105, %81, %cst_26 {dimension_numbers = #tpu.dot_dimension_numbers<[1], [0], [0], [1], [0, 0, 1, 1], [], []>} : vector<40x32xbf16>, vector<32x96xbf16>, vector<40x96xf32> -> vector<40x96xf32>
    %107 = vector.broadcast %73 : vector<1x96xf32> to vector<40x96xf32>
    %108 = arith.addf %106, %107 : vector<40x96xf32>
    %109 = vector.extract_strided_slice %108 {offsets = [0, 0], sizes = [40, 8], strides = [1, 1]} : vector<40x96xf32> to vector<40x8xf32>
    %110 = vector.extract_strided_slice %108 {offsets = [0, 32], sizes = [40, 8], strides = [1, 1]} : vector<40x96xf32> to vector<40x8xf32>
    %111 = vector.extract_strided_slice %108 {offsets = [0, 64], sizes = [40, 8], strides = [1, 1]} : vector<40x96xf32> to vector<40x8xf32>
    %112 = arith.truncf %109 : vector<40x8xf32> to vector<40x8xbf16>
    %113 = arith.truncf %110 : vector<40x8xf32> to vector<40x8xbf16>
    %cst_27 = arith.constant dense<0.000000e+00> : vector<40x40xf32>
    %114 = tpu.matmul %112, %113, %cst_27 {dimension_numbers = #tpu.dot_dimension_numbers<[1], [1], [0], [0], [0, 0, 1, 0], [], []>} : vector<40x8xbf16>, vector<40x8xbf16>, vector<40x40xf32> -> vector<40x40xf32>
    %115 = arith.addf %114, %68 : vector<40x40xf32>
    %cst_28 = arith.constant dense<0xFF800000> : vector<40xf32>
    %116 = vector.multi_reduction <maximumf>, %115, %cst_28 [1] : vector<40x40xf32> to vector<40xf32>
    %117 = vector.shape_cast %116 : vector<40xf32> to vector<40x1xf32>
    %118 = vector.broadcast %117 : vector<40x1xf32> to vector<40x40xf32>
    %119 = arith.subf %115, %118 : vector<40x40xf32>
    %120 = math.exp %119 : vector<40x40xf32>
    %cst_29 = arith.constant dense<0.000000e+00> : vector<40xf32>
    %121 = vector.multi_reduction <add>, %120, %cst_29 [1] : vector<40x40xf32> to vector<40xf32>
    %122 = vector.shape_cast %121 : vector<40xf32> to vector<40x1xf32>
    %123 = tpu.reciprocal %122 {approx = true} : vector<40x1xf32> -> vector<40x1xf32>
    %124 = vector.broadcast %123 : vector<40x1xf32> to vector<40x40xf32>
    %125 = arith.mulf %120, %124 : vector<40x40xf32>
    %126 = arith.truncf %125 : vector<40x40xf32> to vector<40x40xbf16>
    %127 = arith.truncf %111 : vector<40x8xf32> to vector<40x8xbf16>
    %cst_30 = arith.constant dense<0.000000e+00> : vector<40x8xf32>
    %128 = tpu.matmul %126, %127, %cst_30 {dimension_numbers = #tpu.dot_dimension_numbers<[1], [0], [0], [1], [0, 0, 1, 1], [], []>} : vector<40x40xbf16>, vector<40x8xbf16>, vector<40x8xf32> -> vector<40x8xf32>
    %129 = vector.extract_strided_slice %108 {offsets = [0, 8], sizes = [40, 8], strides = [1, 1]} : vector<40x96xf32> to vector<40x8xf32>
    %130 = vector.extract_strided_slice %108 {offsets = [0, 40], sizes = [40, 8], strides = [1, 1]} : vector<40x96xf32> to vector<40x8xf32>
    %131 = vector.extract_strided_slice %108 {offsets = [0, 72], sizes = [40, 8], strides = [1, 1]} : vector<40x96xf32> to vector<40x8xf32>
    %132 = arith.truncf %129 : vector<40x8xf32> to vector<40x8xbf16>
    %133 = arith.truncf %130 : vector<40x8xf32> to vector<40x8xbf16>
    %cst_31 = arith.constant dense<0.000000e+00> : vector<40x40xf32>
    %134 = tpu.matmul %132, %133, %cst_31 {dimension_numbers = #tpu.dot_dimension_numbers<[1], [1], [0], [0], [0, 0, 1, 0], [], []>} : vector<40x8xbf16>, vector<40x8xbf16>, vector<40x40xf32> -> vector<40x40xf32>
    %135 = arith.addf %134, %68 : vector<40x40xf32>
    %cst_32 = arith.constant dense<0xFF800000> : vector<40xf32>
    %136 = vector.multi_reduction <maximumf>, %135, %cst_32 [1] : vector<40x40xf32> to vector<40xf32>
    %137 = vector.shape_cast %136 : vector<40xf32> to vector<40x1xf32>
    %138 = vector.broadcast %137 : vector<40x1xf32> to vector<40x40xf32>
    %139 = arith.subf %135, %138 : vector<40x40xf32>
    %140 = math.exp %139 : vector<40x40xf32>
    %cst_33 = arith.constant dense<0.000000e+00> : vector<40xf32>
    %141 = vector.multi_reduction <add>, %140, %cst_33 [1] : vector<40x40xf32> to vector<40xf32>
    %142 = vector.shape_cast %141 : vector<40xf32> to vector<40x1xf32>
    %143 = tpu.reciprocal %142 {approx = true} : vector<40x1xf32> -> vector<40x1xf32>
    %144 = vector.broadcast %143 : vector<40x1xf32> to vector<40x40xf32>
    %145 = arith.mulf %140, %144 : vector<40x40xf32>
    %146 = arith.truncf %145 : vector<40x40xf32> to vector<40x40xbf16>
    %147 = arith.truncf %131 : vector<40x8xf32> to vector<40x8xbf16>
    %cst_34 = arith.constant dense<0.000000e+00> : vector<40x8xf32>
    %148 = tpu.matmul %146, %147, %cst_34 {dimension_numbers = #tpu.dot_dimension_numbers<[1], [0], [0], [1], [0, 0, 1, 1], [], []>} : vector<40x40xbf16>, vector<40x8xbf16>, vector<40x8xf32> -> vector<40x8xf32>
    %149 = vector.extract_strided_slice %108 {offsets = [0, 16], sizes = [40, 8], strides = [1, 1]} : vector<40x96xf32> to vector<40x8xf32>
    %150 = vector.extract_strided_slice %108 {offsets = [0, 48], sizes = [40, 8], strides = [1, 1]} : vector<40x96xf32> to vector<40x8xf32>
    %151 = vector.extract_strided_slice %108 {offsets = [0, 80], sizes = [40, 8], strides = [1, 1]} : vector<40x96xf32> to vector<40x8xf32>
    %152 = arith.truncf %149 : vector<40x8xf32> to vector<40x8xbf16>
    %153 = arith.truncf %150 : vector<40x8xf32> to vector<40x8xbf16>
    %cst_35 = arith.constant dense<0.000000e+00> : vector<40x40xf32>
    %154 = tpu.matmul %152, %153, %cst_35 {dimension_numbers = #tpu.dot_dimension_numbers<[1], [1], [0], [0], [0, 0, 1, 0], [], []>} : vector<40x8xbf16>, vector<40x8xbf16>, vector<40x40xf32> -> vector<40x40xf32>
    %155 = arith.addf %154, %68 : vector<40x40xf32>
    %cst_36 = arith.constant dense<0xFF800000> : vector<40xf32>
    %156 = vector.multi_reduction <maximumf>, %155, %cst_36 [1] : vector<40x40xf32> to vector<40xf32>
    %157 = vector.shape_cast %156 : vector<40xf32> to vector<40x1xf32>
    %158 = vector.broadcast %157 : vector<40x1xf32> to vector<40x40xf32>
    %159 = arith.subf %155, %158 : vector<40x40xf32>
    %160 = math.exp %159 : vector<40x40xf32>
    %cst_37 = arith.constant dense<0.000000e+00> : vector<40xf32>
    %161 = vector.multi_reduction <add>, %160, %cst_37 [1] : vector<40x40xf32> to vector<40xf32>
    %162 = vector.shape_cast %161 : vector<40xf32> to vector<40x1xf32>
    %163 = tpu.reciprocal %162 {approx = true} : vector<40x1xf32> -> vector<40x1xf32>
    %164 = vector.broadcast %163 : vector<40x1xf32> to vector<40x40xf32>
    %165 = arith.mulf %160, %164 : vector<40x40xf32>
    %166 = arith.truncf %165 : vector<40x40xf32> to vector<40x40xbf16>
    %167 = arith.truncf %151 : vector<40x8xf32> to vector<40x8xbf16>
    %cst_38 = arith.constant dense<0.000000e+00> : vector<40x8xf32>
    %168 = tpu.matmul %166, %167, %cst_38 {dimension_numbers = #tpu.dot_dimension_numbers<[1], [0], [0], [1], [0, 0, 1, 1], [], []>} : vector<40x40xbf16>, vector<40x8xbf16>, vector<40x8xf32> -> vector<40x8xf32>
    %169 = vector.extract_strided_slice %108 {offsets = [0, 24], sizes = [40, 8], strides = [1, 1]} : vector<40x96xf32> to vector<40x8xf32>
    %170 = vector.extract_strided_slice %108 {offsets = [0, 56], sizes = [40, 8], strides = [1, 1]} : vector<40x96xf32> to vector<40x8xf32>
    %171 = vector.extract_strided_slice %108 {offsets = [0, 88], sizes = [40, 8], strides = [1, 1]} : vector<40x96xf32> to vector<40x8xf32>
    %172 = arith.truncf %169 : vector<40x8xf32> to vector<40x8xbf16>
    %173 = arith.truncf %170 : vector<40x8xf32> to vector<40x8xbf16>
    %cst_39 = arith.constant dense<0.000000e+00> : vector<40x40xf32>
    %174 = tpu.matmul %172, %173, %cst_39 {dimension_numbers = #tpu.dot_dimension_numbers<[1], [1], [0], [0], [0, 0, 1, 0], [], []>} : vector<40x8xbf16>, vector<40x8xbf16>, vector<40x40xf32> -> vector<40x40xf32>
    %175 = arith.addf %174, %68 : vector<40x40xf32>
    %cst_40 = arith.constant dense<0xFF800000> : vector<40xf32>
    %176 = vector.multi_reduction <maximumf>, %175, %cst_40 [1] : vector<40x40xf32> to vector<40xf32>
    %177 = vector.shape_cast %176 : vector<40xf32> to vector<40x1xf32>
    %178 = vector.broadcast %177 : vector<40x1xf32> to vector<40x40xf32>
    %179 = arith.subf %175, %178 : vector<40x40xf32>
    %180 = math.exp %179 : vector<40x40xf32>
    %cst_41 = arith.constant dense<0.000000e+00> : vector<40xf32>
    %181 = vector.multi_reduction <add>, %180, %cst_41 [1] : vector<40x40xf32> to vector<40xf32>
    %182 = vector.shape_cast %181 : vector<40xf32> to vector<40x1xf32>
    %183 = tpu.reciprocal %182 {approx = true} : vector<40x1xf32> -> vector<40x1xf32>
    %184 = vector.broadcast %183 : vector<40x1xf32> to vector<40x40xf32>
    %185 = arith.mulf %180, %184 : vector<40x40xf32>
    %186 = arith.truncf %185 : vector<40x40xf32> to vector<40x40xbf16>
    %187 = arith.truncf %171 : vector<40x8xf32> to vector<40x8xbf16>
    %cst_42 = arith.constant dense<0.000000e+00> : vector<40x8xf32>
    %188 = tpu.matmul %186, %187, %cst_42 {dimension_numbers = #tpu.dot_dimension_numbers<[1], [0], [0], [1], [0, 0, 1, 1], [], []>} : vector<40x40xbf16>, vector<40x8xbf16>, vector<40x8xf32> -> vector<40x8xf32>
    %189 = tpu.concatenate %128, %148, %168, %188 in 1 : vector<40x8xf32>, vector<40x8xf32>, vector<40x8xf32>, vector<40x8xf32> -> vector<40x32xf32>
    %190 = arith.truncf %189 : vector<40x32xf32> to vector<40x32xbf16>
    %cst_43 = arith.constant dense<0.000000e+00> : vector<40x32xf32>
    %191 = tpu.matmul %190, %82, %cst_43 {dimension_numbers = #tpu.dot_dimension_numbers<[1], [0], [0], [1], [0, 0, 1, 1], [], []>} : vector<40x32xbf16>, vector<32x32xbf16>, vector<40x32xf32> -> vector<40x32xf32>
    %192 = arith.addf %4, %191 : vector<40x32xf32>
    %193 = vector.broadcast %74 : vector<1x32xf32> to vector<40x32xf32>
    %194 = arith.addf %192, %193 : vector<40x32xf32>
    %cst_44 = arith.constant dense<0.000000e+00> : vector<40xf32>
    %195 = vector.multi_reduction <add>, %194, %cst_44 [1] : vector<40x32xf32> to vector<40xf32>
    %196 = vector.shape_cast %195 : vector<40xf32> to vector<40x1xf32>
    %cst_45 = arith.constant 3.200000e+01 : f32
    %197 = vector.broadcast %cst_45 : f32 to vector<40x1xf32>
    %198 = arith.divf %196, %197 : vector<40x1xf32>
    %199 = arith.mulf %194, %194 : vector<40x32xf32>
    %cst_46 = arith.constant dense<0.000000e+00> : vector<40xf32>
    %200 = vector.multi_reduction <add>, %199, %cst_46 [1] : vector<40x32xf32> to vector<40xf32>
    %201 = vector.shape_cast %200 : vector<40xf32> to vector<40x1xf32>
    %cst_47 = arith.constant 3.200000e+01 : f32
    %202 = vector.broadcast %cst_47 : f32 to vector<40x1xf32>
    %203 = arith.divf %201, %202 : vector<40x1xf32>
    %204 = arith.mulf %198, %198 : vector<40x1xf32>
    %205 = arith.subf %203, %204 : vector<40x1xf32>
    %206 = vector.broadcast %198 : vector<40x1xf32> to vector<40x32xf32>
    %207 = arith.subf %194, %206 : vector<40x32xf32>
    %cst_48 = arith.constant 9.99999997E-7 : f32
    %208 = vector.broadcast %cst_48 : f32 to vector<40x1xf32>
    %209 = arith.addf %205, %208 : vector<40x1xf32>
    %210 = math.rsqrt %209 : vector<40x1xf32>
    %211 = vector.broadcast %210 : vector<40x1xf32> to vector<40x32xf32>
    %212 = arith.mulf %207, %211 : vector<40x32xf32>
    %213 = vector.broadcast %75 : vector<1x32xf32> to vector<40x32xf32>
    %214 = arith.mulf %212, %213 : vector<40x32xf32>
    %215 = vector.broadcast %76 : vector<1x32xf32> to vector<40x32xf32>
    %216 = arith.addf %214, %215 : vector<40x32xf32>
    %217 = arith.truncf %216 : vector<40x32xf32> to vector<40x32xbf16>
    %c0_49 = arith.constant 0 : index
    %c0_50 = arith.constant 0 : index
    %c0_51 = arith.constant 0 : index
    %218 = vector.load %arg4[%c0_49, %c0_50, %c0_51] : memref<2x32x64xbf16, #tpu.memory_space<vmem>>, vector<1x32x64xbf16>
    %219 = vector.shape_cast %218 : vector<1x32x64xbf16> to vector<32x64xbf16>
    %cst_52 = arith.constant dense<0.000000e+00> : vector<40x64xf32>
    %220 = tpu.matmul %217, %219, %cst_52 {dimension_numbers = #tpu.dot_dimension_numbers<[1], [0], [0], [1], [0, 0, 1, 1], [], []>} : vector<40x32xbf16>, vector<32x64xbf16>, vector<40x64xf32> -> vector<40x64xf32>
    %221 = vector.broadcast %77 : vector<1x64xf32> to vector<40x64xf32>
    %222 = arith.addf %220, %221 : vector<40x64xf32>
    %cst_53 = arith.constant 5.000000e-01 : f32
    %223 = vector.broadcast %cst_53 : f32 to vector<40x64xf32>
    %224 = arith.mulf %223, %222 : vector<40x64xf32>
    %cst_54 = arith.constant 4.471500e-02 : f32
    %225 = vector.broadcast %cst_54 : f32 to vector<40x64xf32>
    %226 = arith.mulf %225, %222 : vector<40x64xf32>
    %227 = arith.mulf %226, %222 : vector<40x64xf32>
    %228 = arith.mulf %227, %222 : vector<40x64xf32>
    %229 = arith.addf %222, %228 : vector<40x64xf32>
    %cst_55 = arith.constant 0.797884583 : f32
    %230 = vector.broadcast %cst_55 : f32 to vector<40x64xf32>
    %231 = arith.mulf %230, %229 : vector<40x64xf32>
    %232 = math.tanh %231 : vector<40x64xf32>
    %cst_56 = arith.constant 1.000000e+00 : f32
    %233 = vector.broadcast %cst_56 : f32 to vector<40x64xf32>
    %234 = arith.addf %233, %232 : vector<40x64xf32>
    %235 = arith.mulf %224, %234 : vector<40x64xf32>
    %236 = arith.truncf %235 : vector<40x64xf32> to vector<40x64xbf16>
    %c0_57 = arith.constant 0 : index
    %c0_58 = arith.constant 0 : index
    %c0_59 = arith.constant 0 : index
    %237 = vector.load %arg5[%c0_57, %c0_58, %c0_59] : memref<2x64x32xbf16, #tpu.memory_space<vmem>>, vector<1x64x32xbf16>
    %238 = vector.shape_cast %237 : vector<1x64x32xbf16> to vector<64x32xbf16>
    %cst_60 = arith.constant dense<0.000000e+00> : vector<40x32xf32>
    %239 = tpu.matmul %236, %238, %cst_60 {dimension_numbers = #tpu.dot_dimension_numbers<[1], [0], [0], [1], [0, 0, 1, 1], [], []>} : vector<40x64xbf16>, vector<64x32xbf16>, vector<40x32xf32> -> vector<40x32xf32>
    %240 = vector.broadcast %78 : vector<1x32xf32> to vector<40x32xf32>
    %241 = arith.addf %239, %240 : vector<40x32xf32>
    %242 = arith.addf %194, %241 : vector<40x32xf32>
    %c1 = arith.constant 1 : index
    %c0_61 = arith.constant 0 : index
    %c0_62 = arith.constant 0 : index
    %243 = vector.load %arg6[%c1, %c0_61, %c0_62] : memref<3x8x96xf32, #tpu.memory_space<vmem>>, vector<1x8x96xf32>
    %244 = vector.shape_cast %243 : vector<1x8x96xf32> to vector<8x96xf32>
    %245 = vector.extract_strided_slice %244 {offsets = [0, 0], sizes = [1, 32], strides = [1, 1]} : vector<8x96xf32> to vector<1x32xf32>
    %246 = vector.extract_strided_slice %244 {offsets = [1, 0], sizes = [1, 32], strides = [1, 1]} : vector<8x96xf32> to vector<1x32xf32>
    %247 = vector.extract_strided_slice %244 {offsets = [2, 0], sizes = [1, 96], strides = [1, 1]} : vector<8x96xf32> to vector<1x96xf32>
    %248 = vector.extract_strided_slice %244 {offsets = [3, 0], sizes = [1, 32], strides = [1, 1]} : vector<8x96xf32> to vector<1x32xf32>
    %249 = vector.extract_strided_slice %244 {offsets = [4, 0], sizes = [1, 32], strides = [1, 1]} : vector<8x96xf32> to vector<1x32xf32>
    %250 = vector.extract_strided_slice %244 {offsets = [5, 0], sizes = [1, 32], strides = [1, 1]} : vector<8x96xf32> to vector<1x32xf32>
    %251 = vector.extract_strided_slice %244 {offsets = [6, 0], sizes = [1, 64], strides = [1, 1]} : vector<8x96xf32> to vector<1x64xf32>
    %252 = vector.extract_strided_slice %244 {offsets = [7, 0], sizes = [1, 32], strides = [1, 1]} : vector<8x96xf32> to vector<1x32xf32>
    %c1_63 = arith.constant 1 : index
    %c0_64 = arith.constant 0 : index
    %c0_65 = arith.constant 0 : index
    %253 = vector.load %arg3[%c1_63, %c0_64, %c0_65] : memref<2x32x128xbf16, #tpu.memory_space<vmem>>, vector<1x32x128xbf16>
    %254 = vector.shape_cast %253 : vector<1x32x128xbf16> to vector<32x128xbf16>
    %255 = vector.extract_strided_slice %254 {offsets = [0, 0], sizes = [32, 96], strides = [1, 1]} : vector<32x128xbf16> to vector<32x96xbf16>
    %256 = vector.extract_strided_slice %254 {offsets = [0, 96], sizes = [32, 32], strides = [1, 1]} : vector<32x128xbf16> to vector<32x32xbf16>
    %cst_66 = arith.constant dense<0.000000e+00> : vector<40xf32>
    %257 = vector.multi_reduction <add>, %242, %cst_66 [1] : vector<40x32xf32> to vector<40xf32>
    %258 = vector.shape_cast %257 : vector<40xf32> to vector<40x1xf32>
    %cst_67 = arith.constant 3.200000e+01 : f32
    %259 = vector.broadcast %cst_67 : f32 to vector<40x1xf32>
    %260 = arith.divf %258, %259 : vector<40x1xf32>
    %261 = arith.mulf %242, %242 : vector<40x32xf32>
    %cst_68 = arith.constant dense<0.000000e+00> : vector<40xf32>
    %262 = vector.multi_reduction <add>, %261, %cst_68 [1] : vector<40x32xf32> to vector<40xf32>
    %263 = vector.shape_cast %262 : vector<40xf32> to vector<40x1xf32>
    %cst_69 = arith.constant 3.200000e+01 : f32
    %264 = vector.broadcast %cst_69 : f32 to vector<40x1xf32>
    %265 = arith.divf %263, %264 : vector<40x1xf32>
    %266 = arith.mulf %260, %260 : vector<40x1xf32>
    %267 = arith.subf %265, %266 : vector<40x1xf32>
    %268 = vector.broadcast %260 : vector<40x1xf32> to vector<40x32xf32>
    %269 = arith.subf %242, %268 : vector<40x32xf32>
    %cst_70 = arith.constant 9.99999997E-7 : f32
    %270 = vector.broadcast %cst_70 : f32 to vector<40x1xf32>
    %271 = arith.addf %267, %270 : vector<40x1xf32>
    %272 = math.rsqrt %271 : vector<40x1xf32>
    %273 = vector.broadcast %272 : vector<40x1xf32> to vector<40x32xf32>
    %274 = arith.mulf %269, %273 : vector<40x32xf32>
    %275 = vector.broadcast %245 : vector<1x32xf32> to vector<40x32xf32>
    %276 = arith.mulf %274, %275 : vector<40x32xf32>
    %277 = vector.broadcast %246 : vector<1x32xf32> to vector<40x32xf32>
    %278 = arith.addf %276, %277 : vector<40x32xf32>
    %279 = arith.truncf %278 : vector<40x32xf32> to vector<40x32xbf16>
    %cst_71 = arith.constant dense<0.000000e+00> : vector<40x96xf32>
    %280 = tpu.matmul %279, %255, %cst_71 {dimension_numbers = #tpu.dot_dimension_numbers<[1], [0], [0], [1], [0, 0, 1, 1], [], []>} : vector<40x32xbf16>, vector<32x96xbf16>, vector<40x96xf32> -> vector<40x96xf32>
    %281 = vector.broadcast %247 : vector<1x96xf32> to vector<40x96xf32>
    %282 = arith.addf %280, %281 : vector<40x96xf32>
    %283 = vector.extract_strided_slice %282 {offsets = [0, 0], sizes = [40, 8], strides = [1, 1]} : vector<40x96xf32> to vector<40x8xf32>
    %284 = vector.extract_strided_slice %282 {offsets = [0, 32], sizes = [40, 8], strides = [1, 1]} : vector<40x96xf32> to vector<40x8xf32>
    %285 = vector.extract_strided_slice %282 {offsets = [0, 64], sizes = [40, 8], strides = [1, 1]} : vector<40x96xf32> to vector<40x8xf32>
    %286 = arith.truncf %283 : vector<40x8xf32> to vector<40x8xbf16>
    %287 = arith.truncf %284 : vector<40x8xf32> to vector<40x8xbf16>
    %cst_72 = arith.constant dense<0.000000e+00> : vector<40x40xf32>
    %288 = tpu.matmul %286, %287, %cst_72 {dimension_numbers = #tpu.dot_dimension_numbers<[1], [1], [0], [0], [0, 0, 1, 0], [], []>} : vector<40x8xbf16>, vector<40x8xbf16>, vector<40x40xf32> -> vector<40x40xf32>
    %289 = arith.addf %288, %68 : vector<40x40xf32>
    %cst_73 = arith.constant dense<0xFF800000> : vector<40xf32>
    %290 = vector.multi_reduction <maximumf>, %289, %cst_73 [1] : vector<40x40xf32> to vector<40xf32>
    %291 = vector.shape_cast %290 : vector<40xf32> to vector<40x1xf32>
    %292 = vector.broadcast %291 : vector<40x1xf32> to vector<40x40xf32>
    %293 = arith.subf %289, %292 : vector<40x40xf32>
    %294 = math.exp %293 : vector<40x40xf32>
    %cst_74 = arith.constant dense<0.000000e+00> : vector<40xf32>
    %295 = vector.multi_reduction <add>, %294, %cst_74 [1] : vector<40x40xf32> to vector<40xf32>
    %296 = vector.shape_cast %295 : vector<40xf32> to vector<40x1xf32>
    %297 = tpu.reciprocal %296 {approx = true} : vector<40x1xf32> -> vector<40x1xf32>
    %298 = vector.broadcast %297 : vector<40x1xf32> to vector<40x40xf32>
    %299 = arith.mulf %294, %298 : vector<40x40xf32>
    %300 = arith.truncf %299 : vector<40x40xf32> to vector<40x40xbf16>
    %301 = arith.truncf %285 : vector<40x8xf32> to vector<40x8xbf16>
    %cst_75 = arith.constant dense<0.000000e+00> : vector<40x8xf32>
    %302 = tpu.matmul %300, %301, %cst_75 {dimension_numbers = #tpu.dot_dimension_numbers<[1], [0], [0], [1], [0, 0, 1, 1], [], []>} : vector<40x40xbf16>, vector<40x8xbf16>, vector<40x8xf32> -> vector<40x8xf32>
    %303 = vector.extract_strided_slice %282 {offsets = [0, 8], sizes = [40, 8], strides = [1, 1]} : vector<40x96xf32> to vector<40x8xf32>
    %304 = vector.extract_strided_slice %282 {offsets = [0, 40], sizes = [40, 8], strides = [1, 1]} : vector<40x96xf32> to vector<40x8xf32>
    %305 = vector.extract_strided_slice %282 {offsets = [0, 72], sizes = [40, 8], strides = [1, 1]} : vector<40x96xf32> to vector<40x8xf32>
    %306 = arith.truncf %303 : vector<40x8xf32> to vector<40x8xbf16>
    %307 = arith.truncf %304 : vector<40x8xf32> to vector<40x8xbf16>
    %cst_76 = arith.constant dense<0.000000e+00> : vector<40x40xf32>
    %308 = tpu.matmul %306, %307, %cst_76 {dimension_numbers = #tpu.dot_dimension_numbers<[1], [1], [0], [0], [0, 0, 1, 0], [], []>} : vector<40x8xbf16>, vector<40x8xbf16>, vector<40x40xf32> -> vector<40x40xf32>
    %309 = arith.addf %308, %68 : vector<40x40xf32>
    %cst_77 = arith.constant dense<0xFF800000> : vector<40xf32>
    %310 = vector.multi_reduction <maximumf>, %309, %cst_77 [1] : vector<40x40xf32> to vector<40xf32>
    %311 = vector.shape_cast %310 : vector<40xf32> to vector<40x1xf32>
    %312 = vector.broadcast %311 : vector<40x1xf32> to vector<40x40xf32>
    %313 = arith.subf %309, %312 : vector<40x40xf32>
    %314 = math.exp %313 : vector<40x40xf32>
    %cst_78 = arith.constant dense<0.000000e+00> : vector<40xf32>
    %315 = vector.multi_reduction <add>, %314, %cst_78 [1] : vector<40x40xf32> to vector<40xf32>
    %316 = vector.shape_cast %315 : vector<40xf32> to vector<40x1xf32>
    %317 = tpu.reciprocal %316 {approx = true} : vector<40x1xf32> -> vector<40x1xf32>
    %318 = vector.broadcast %317 : vector<40x1xf32> to vector<40x40xf32>
    %319 = arith.mulf %314, %318 : vector<40x40xf32>
    %320 = arith.truncf %319 : vector<40x40xf32> to vector<40x40xbf16>
    %321 = arith.truncf %305 : vector<40x8xf32> to vector<40x8xbf16>
    %cst_79 = arith.constant dense<0.000000e+00> : vector<40x8xf32>
    %322 = tpu.matmul %320, %321, %cst_79 {dimension_numbers = #tpu.dot_dimension_numbers<[1], [0], [0], [1], [0, 0, 1, 1], [], []>} : vector<40x40xbf16>, vector<40x8xbf16>, vector<40x8xf32> -> vector<40x8xf32>
    %323 = vector.extract_strided_slice %282 {offsets = [0, 16], sizes = [40, 8], strides = [1, 1]} : vector<40x96xf32> to vector<40x8xf32>
    %324 = vector.extract_strided_slice %282 {offsets = [0, 48], sizes = [40, 8], strides = [1, 1]} : vector<40x96xf32> to vector<40x8xf32>
    %325 = vector.extract_strided_slice %282 {offsets = [0, 80], sizes = [40, 8], strides = [1, 1]} : vector<40x96xf32> to vector<40x8xf32>
    %326 = arith.truncf %323 : vector<40x8xf32> to vector<40x8xbf16>
    %327 = arith.truncf %324 : vector<40x8xf32> to vector<40x8xbf16>
    %cst_80 = arith.constant dense<0.000000e+00> : vector<40x40xf32>
    %328 = tpu.matmul %326, %327, %cst_80 {dimension_numbers = #tpu.dot_dimension_numbers<[1], [1], [0], [0], [0, 0, 1, 0], [], []>} : vector<40x8xbf16>, vector<40x8xbf16>, vector<40x40xf32> -> vector<40x40xf32>
    %329 = arith.addf %328, %68 : vector<40x40xf32>
    %cst_81 = arith.constant dense<0xFF800000> : vector<40xf32>
    %330 = vector.multi_reduction <maximumf>, %329, %cst_81 [1] : vector<40x40xf32> to vector<40xf32>
    %331 = vector.shape_cast %330 : vector<40xf32> to vector<40x1xf32>
    %332 = vector.broadcast %331 : vector<40x1xf32> to vector<40x40xf32>
    %333 = arith.subf %329, %332 : vector<40x40xf32>
    %334 = math.exp %333 : vector<40x40xf32>
    %cst_82 = arith.constant dense<0.000000e+00> : vector<40xf32>
    %335 = vector.multi_reduction <add>, %334, %cst_82 [1] : vector<40x40xf32> to vector<40xf32>
    %336 = vector.shape_cast %335 : vector<40xf32> to vector<40x1xf32>
    %337 = tpu.reciprocal %336 {approx = true} : vector<40x1xf32> -> vector<40x1xf32>
    %338 = vector.broadcast %337 : vector<40x1xf32> to vector<40x40xf32>
    %339 = arith.mulf %334, %338 : vector<40x40xf32>
    %340 = arith.truncf %339 : vector<40x40xf32> to vector<40x40xbf16>
    %341 = arith.truncf %325 : vector<40x8xf32> to vector<40x8xbf16>
    %cst_83 = arith.constant dense<0.000000e+00> : vector<40x8xf32>
    %342 = tpu.matmul %340, %341, %cst_83 {dimension_numbers = #tpu.dot_dimension_numbers<[1], [0], [0], [1], [0, 0, 1, 1], [], []>} : vector<40x40xbf16>, vector<40x8xbf16>, vector<40x8xf32> -> vector<40x8xf32>
    %343 = vector.extract_strided_slice %282 {offsets = [0, 24], sizes = [40, 8], strides = [1, 1]} : vector<40x96xf32> to vector<40x8xf32>
    %344 = vector.extract_strided_slice %282 {offsets = [0, 56], sizes = [40, 8], strides = [1, 1]} : vector<40x96xf32> to vector<40x8xf32>
    %345 = vector.extract_strided_slice %282 {offsets = [0, 88], sizes = [40, 8], strides = [1, 1]} : vector<40x96xf32> to vector<40x8xf32>
    %346 = arith.truncf %343 : vector<40x8xf32> to vector<40x8xbf16>
    %347 = arith.truncf %344 : vector<40x8xf32> to vector<40x8xbf16>
    %cst_84 = arith.constant dense<0.000000e+00> : vector<40x40xf32>
    %348 = tpu.matmul %346, %347, %cst_84 {dimension_numbers = #tpu.dot_dimension_numbers<[1], [1], [0], [0], [0, 0, 1, 0], [], []>} : vector<40x8xbf16>, vector<40x8xbf16>, vector<40x40xf32> -> vector<40x40xf32>
    %349 = arith.addf %348, %68 : vector<40x40xf32>
    %cst_85 = arith.constant dense<0xFF800000> : vector<40xf32>
    %350 = vector.multi_reduction <maximumf>, %349, %cst_85 [1] : vector<40x40xf32> to vector<40xf32>
    %351 = vector.shape_cast %350 : vector<40xf32> to vector<40x1xf32>
    %352 = vector.broadcast %351 : vector<40x1xf32> to vector<40x40xf32>
    %353 = arith.subf %349, %352 : vector<40x40xf32>
    %354 = math.exp %353 : vector<40x40xf32>
    %cst_86 = arith.constant dense<0.000000e+00> : vector<40xf32>
    %355 = vector.multi_reduction <add>, %354, %cst_86 [1] : vector<40x40xf32> to vector<40xf32>
    %356 = vector.shape_cast %355 : vector<40xf32> to vector<40x1xf32>
    %357 = tpu.reciprocal %356 {approx = true} : vector<40x1xf32> -> vector<40x1xf32>
    %358 = vector.broadcast %357 : vector<40x1xf32> to vector<40x40xf32>
    %359 = arith.mulf %354, %358 : vector<40x40xf32>
    %360 = arith.truncf %359 : vector<40x40xf32> to vector<40x40xbf16>
    %361 = arith.truncf %345 : vector<40x8xf32> to vector<40x8xbf16>
    %cst_87 = arith.constant dense<0.000000e+00> : vector<40x8xf32>
    %362 = tpu.matmul %360, %361, %cst_87 {dimension_numbers = #tpu.dot_dimension_numbers<[1], [0], [0], [1], [0, 0, 1, 1], [], []>} : vector<40x40xbf16>, vector<40x8xbf16>, vector<40x8xf32> -> vector<40x8xf32>
    %363 = tpu.concatenate %302, %322, %342, %362 in 1 : vector<40x8xf32>, vector<40x8xf32>, vector<40x8xf32>, vector<40x8xf32> -> vector<40x32xf32>
    %364 = arith.truncf %363 : vector<40x32xf32> to vector<40x32xbf16>
    %cst_88 = arith.constant dense<0.000000e+00> : vector<40x32xf32>
    %365 = tpu.matmul %364, %256, %cst_88 {dimension_numbers = #tpu.dot_dimension_numbers<[1], [0], [0], [1], [0, 0, 1, 1], [], []>} : vector<40x32xbf16>, vector<32x32xbf16>, vector<40x32xf32> -> vector<40x32xf32>
    %366 = arith.addf %242, %365 : vector<40x32xf32>
    %367 = vector.broadcast %248 : vector<1x32xf32> to vector<40x32xf32>
    %368 = arith.addf %366, %367 : vector<40x32xf32>
    %cst_89 = arith.constant dense<0.000000e+00> : vector<40xf32>
    %369 = vector.multi_reduction <add>, %368, %cst_89 [1] : vector<40x32xf32> to vector<40xf32>
    %370 = vector.shape_cast %369 : vector<40xf32> to vector<40x1xf32>
    %cst_90 = arith.constant 3.200000e+01 : f32
    %371 = vector.broadcast %cst_90 : f32 to vector<40x1xf32>
    %372 = arith.divf %370, %371 : vector<40x1xf32>
    %373 = arith.mulf %368, %368 : vector<40x32xf32>
    %cst_91 = arith.constant dense<0.000000e+00> : vector<40xf32>
    %374 = vector.multi_reduction <add>, %373, %cst_91 [1] : vector<40x32xf32> to vector<40xf32>
    %375 = vector.shape_cast %374 : vector<40xf32> to vector<40x1xf32>
    %cst_92 = arith.constant 3.200000e+01 : f32
    %376 = vector.broadcast %cst_92 : f32 to vector<40x1xf32>
    %377 = arith.divf %375, %376 : vector<40x1xf32>
    %378 = arith.mulf %372, %372 : vector<40x1xf32>
    %379 = arith.subf %377, %378 : vector<40x1xf32>
    %380 = vector.broadcast %372 : vector<40x1xf32> to vector<40x32xf32>
    %381 = arith.subf %368, %380 : vector<40x32xf32>
    %cst_93 = arith.constant 9.99999997E-7 : f32
    %382 = vector.broadcast %cst_93 : f32 to vector<40x1xf32>
    %383 = arith.addf %379, %382 : vector<40x1xf32>
    %384 = math.rsqrt %383 : vector<40x1xf32>
    %385 = vector.broadcast %384 : vector<40x1xf32> to vector<40x32xf32>
    %386 = arith.mulf %381, %385 : vector<40x32xf32>
    %387 = vector.broadcast %249 : vector<1x32xf32> to vector<40x32xf32>
    %388 = arith.mulf %386, %387 : vector<40x32xf32>
    %389 = vector.broadcast %250 : vector<1x32xf32> to vector<40x32xf32>
    %390 = arith.addf %388, %389 : vector<40x32xf32>
    %391 = arith.truncf %390 : vector<40x32xf32> to vector<40x32xbf16>
    %c1_94 = arith.constant 1 : index
    %c0_95 = arith.constant 0 : index
    %c0_96 = arith.constant 0 : index
    %392 = vector.load %arg4[%c1_94, %c0_95, %c0_96] : memref<2x32x64xbf16, #tpu.memory_space<vmem>>, vector<1x32x64xbf16>
    %393 = vector.shape_cast %392 : vector<1x32x64xbf16> to vector<32x64xbf16>
    %cst_97 = arith.constant dense<0.000000e+00> : vector<40x64xf32>
    %394 = tpu.matmul %391, %393, %cst_97 {dimension_numbers = #tpu.dot_dimension_numbers<[1], [0], [0], [1], [0, 0, 1, 1], [], []>} : vector<40x32xbf16>, vector<32x64xbf16>, vector<40x64xf32> -> vector<40x64xf32>
    %395 = vector.broadcast %251 : vector<1x64xf32> to vector<40x64xf32>
    %396 = arith.addf %394, %395 : vector<40x64xf32>
    %cst_98 = arith.constant 5.000000e-01 : f32
    %397 = vector.broadcast %cst_98 : f32 to vector<40x64xf32>
    %398 = arith.mulf %397, %396 : vector<40x64xf32>
    %cst_99 = arith.constant 4.471500e-02 : f32
    %399 = vector.broadcast %cst_99 : f32 to vector<40x64xf32>
    %400 = arith.mulf %399, %396 : vector<40x64xf32>
    %401 = arith.mulf %400, %396 : vector<40x64xf32>
    %402 = arith.mulf %401, %396 : vector<40x64xf32>
    %403 = arith.addf %396, %402 : vector<40x64xf32>
    %cst_100 = arith.constant 0.797884583 : f32
    %404 = vector.broadcast %cst_100 : f32 to vector<40x64xf32>
    %405 = arith.mulf %404, %403 : vector<40x64xf32>
    %406 = math.tanh %405 : vector<40x64xf32>
    %cst_101 = arith.constant 1.000000e+00 : f32
    %407 = vector.broadcast %cst_101 : f32 to vector<40x64xf32>
    %408 = arith.addf %407, %406 : vector<40x64xf32>
    %409 = arith.mulf %398, %408 : vector<40x64xf32>
    %410 = arith.truncf %409 : vector<40x64xf32> to vector<40x64xbf16>
    %c1_102 = arith.constant 1 : index
    %c0_103 = arith.constant 0 : index
    %c0_104 = arith.constant 0 : index
    %411 = vector.load %arg5[%c1_102, %c0_103, %c0_104] : memref<2x64x32xbf16, #tpu.memory_space<vmem>>, vector<1x64x32xbf16>
    %412 = vector.shape_cast %411 : vector<1x64x32xbf16> to vector<64x32xbf16>
    %cst_105 = arith.constant dense<0.000000e+00> : vector<40x32xf32>
    %413 = tpu.matmul %410, %412, %cst_105 {dimension_numbers = #tpu.dot_dimension_numbers<[1], [0], [0], [1], [0, 0, 1, 1], [], []>} : vector<40x64xbf16>, vector<64x32xbf16>, vector<40x32xf32> -> vector<40x32xf32>
    %414 = vector.broadcast %252 : vector<1x32xf32> to vector<40x32xf32>
    %415 = arith.addf %413, %414 : vector<40x32xf32>
    %416 = arith.addf %368, %415 : vector<40x32xf32>
    %c2 = arith.constant 2 : index
    %c0_106 = arith.constant 0 : index
    %c0_107 = arith.constant 0 : index
    %417 = vector.load %arg6[%c2, %c0_106, %c0_107] : memref<3x8x96xf32, #tpu.memory_space<vmem>>, vector<1x8x96xf32>
    %418 = vector.shape_cast %417 : vector<1x8x96xf32> to vector<8x96xf32>
    %419 = vector.extract_strided_slice %418 {offsets = [0, 0], sizes = [1, 32], strides = [1, 1]} : vector<8x96xf32> to vector<1x32xf32>
    %420 = vector.extract_strided_slice %418 {offsets = [1, 0], sizes = [1, 32], strides = [1, 1]} : vector<8x96xf32> to vector<1x32xf32>
    %421 = vector.extract_strided_slice %418 {offsets = [2, 0], sizes = [1, 32], strides = [1, 1]} : vector<8x96xf32> to vector<1x32xf32>
    %422 = vector.extract_strided_slice %418 {offsets = [3, 0], sizes = [1, 1], strides = [1, 1]} : vector<8x96xf32> to vector<1x1xf32>
    %423 = tpu.iota {dimensions = array<i32: 0>} : vector<8x40xi32>
    %424 = tpu.iota {dimensions = array<i32: 1>} : vector<8x40xi32>
    %c5_i32_108 = arith.constant 5 : i32
    %425 = vector.broadcast %c5_i32_108 : i32 to vector<8x40xi32>
    %426 = arith.muli %423, %425 : vector<8x40xi32>
    %427 = arith.cmpi eq, %424, %426 : vector<8x40xi32>
    %428 = arith.extui %427 : vector<8x40xi1> to vector<8x40xi32>
    %429 = arith.sitofp %428 : vector<8x40xi32> to vector<8x40xf32>
    %cst_109 = arith.constant dense<0.000000e+00> : vector<8x32xf32>
    %430 = tpu.matmul %429, %416, %cst_109 {dimension_numbers = #tpu.dot_dimension_numbers<[1], [0], [0], [1], [0, 0, 1, 1], [], []>} : vector<8x40xf32>, vector<40x32xf32>, vector<8x32xf32> -> vector<8x32xf32>
    %cst_110 = arith.constant dense<0.000000e+00> : vector<8xf32>
    %431 = vector.multi_reduction <add>, %430, %cst_110 [1] : vector<8x32xf32> to vector<8xf32>
    %432 = vector.shape_cast %431 : vector<8xf32> to vector<8x1xf32>
    %cst_111 = arith.constant 3.200000e+01 : f32
    %433 = vector.broadcast %cst_111 : f32 to vector<8x1xf32>
    %434 = arith.divf %432, %433 : vector<8x1xf32>
    %435 = arith.mulf %430, %430 : vector<8x32xf32>
    %cst_112 = arith.constant dense<0.000000e+00> : vector<8xf32>
    %436 = vector.multi_reduction <add>, %435, %cst_112 [1] : vector<8x32xf32> to vector<8xf32>
    %437 = vector.shape_cast %436 : vector<8xf32> to vector<8x1xf32>
    %cst_113 = arith.constant 3.200000e+01 : f32
    %438 = vector.broadcast %cst_113 : f32 to vector<8x1xf32>
    %439 = arith.divf %437, %438 : vector<8x1xf32>
    %440 = arith.mulf %434, %434 : vector<8x1xf32>
    %441 = arith.subf %439, %440 : vector<8x1xf32>
    %442 = vector.broadcast %434 : vector<8x1xf32> to vector<8x32xf32>
    %443 = arith.subf %430, %442 : vector<8x32xf32>
    %cst_114 = arith.constant 9.99999997E-7 : f32
    %444 = vector.broadcast %cst_114 : f32 to vector<8x1xf32>
    %445 = arith.addf %441, %444 : vector<8x1xf32>
    %446 = math.rsqrt %445 : vector<8x1xf32>
    %447 = vector.broadcast %446 : vector<8x1xf32> to vector<8x32xf32>
    %448 = arith.mulf %443, %447 : vector<8x32xf32>
    %449 = vector.broadcast %419 : vector<1x32xf32> to vector<8x32xf32>
    %450 = arith.mulf %448, %449 : vector<8x32xf32>
    %451 = vector.broadcast %420 : vector<1x32xf32> to vector<8x32xf32>
    %452 = arith.addf %450, %451 : vector<8x32xf32>
    %453 = vector.broadcast %421 : vector<1x32xf32> to vector<8x32xf32>
    %454 = arith.mulf %452, %453 : vector<8x32xf32>
    %cst_115 = arith.constant dense<0.000000e+00> : vector<8xf32>
    %455 = vector.multi_reduction <add>, %454, %cst_115 [1] : vector<8x32xf32> to vector<8xf32>
    %456 = vector.shape_cast %455 : vector<8xf32> to vector<8x1xf32>
    %457 = vector.broadcast %422 : vector<1x1xf32> to vector<8x1xf32>
    %458 = arith.addf %456, %457 : vector<8x1xf32>
    %c0_116 = arith.constant 0 : index
    %c0_117 = arith.constant 0 : index
    %459 = vector.load %arg7[%c0_116, %c0_117] : memref<8x1xf32, #tpu.memory_space<vmem>>, vector<8x1xf32>
    tpu.vector_store %arg7[%c0_116, %c0_117], %458 {strides = array<i32>} : memref<8x1xf32, #tpu.memory_space<vmem>>, vector<8x1xf32>,
    return
  }
}

</mosaic_0001>

<llo_original>
// kernel: tile.9
$region0: #{tile.9}
  %s0 = inlined_call_operand.vmem [shape: f32[8,5,32], index: 0, kind: input, shape index: {}]
  %s1 = inlined_call_operand.vmem [shape: f32[40,32], index: 1, kind: output, shape index: {}]
  %v2 = vld [vmem:[%s0] sm:$0x1f]
  %vm3 = vcmask 261120
  %4 = vst.msk [vmem:[%s1] sm:$0x1f] %vm3, %v2
  %s5 = scalar_lea.vmem %s0, 8
  %v6 = vld [vmem:[%s5] sm:$0x1f]
  %vm7 = vcmask 261120
  %s8 = scalar_lea.vmem %s1, 5
  %9 = vst.msk [vmem:[%s8] sm:$0x1f] %vm7, %v6
  %s10 = scalar_lea.vmem %s0, 16
  %v11 = vld [vmem:[%s10] sm:$0x1f]
  %vm12 = vcmask 261120
  %s13 = scalar_lea.vmem %s1, 10
  %14 = vst.msk [vmem:[%s13] sm:$0x1f] %vm12, %v11
  %s15 = scalar_lea.vmem %s0, 24
  %v16 = vld [vmem:[%s15] sm:$0x1f]
  %vm17 = vcmask 261120
  %s18 = scalar_lea.vmem %s1, 15
  %19 = vst.msk [vmem:[%s18] sm:$0x1f] %vm17, %v16
  %s20 = scalar_lea.vmem %s0, 32
  %v21 = vld [vmem:[%s20] sm:$0x1f]
  %vm22 = vcmask 261120
  %s23 = scalar_lea.vmem %s1, 20
  %24 = vst.msk [vmem:[%s23] sm:$0x1f] %vm22, %v21
  %s25 = scalar_lea.vmem %s0, 40
  %v26 = vld [vmem:[%s25] sm:$0x1f]
  %vm27 = vcmask 261120
  %s28 = scalar_lea.vmem %s1, 25
  %29 = vst.msk [vmem:[%s28] sm:$0x1f] %vm27, %v26
  %s30 = scalar_lea.vmem %s0, 48
  %v31 = vld [vmem:[%s30] sm:$0x1f]
  %vm32 = vcmask 261120
  %s33 = scalar_lea.vmem %s1, 30
  %34 = vst.msk [vmem:[%s33] sm:$0x1f] %vm32, %v31
  %s35 = scalar_lea.vmem %s0, 56
  %v36 = vld [vmem:[%s35] sm:$0x1f]
  %vm37 = vcmask 261120
  %s38 = scalar_lea.vmem %s1, 35
  %39 = vst.msk [vmem:[%s38] sm:$0x1f] %vm37, %v36

// kernel: vit_forward.1
$region0: #{vit_forward.1}
  #allocation0 [shape = 'u32[]', space=smem, size = 0x4, offset = 0x4, fixed_abs, tag = 'smem constant byte address 0x4 - core index']
  #allocation1 [shape = 'u32[72,128]{1,0:T(1,128)}', space=vmem, size = 0x9000, scoped, tag = 'internal scratch']
  %s0 = inlined_call_operand.vmem [shape: bf16[40,768], index: 0, kind: input, shape index: {}]
  %s1 = inlined_call_operand.vmem [shape: f32[40,32], index: 1, kind: input, shape index: {}]
  %s2 = inlined_call_operand.vmem [shape: bf16[768,32], index: 2, kind: input, shape index: {}]
  %s3 = inlined_call_operand.vmem [shape: bf16[2,32,128], index: 3, kind: input, shape index: {}]
  %s4 = inlined_call_operand.vmem [shape: bf16[2,32,64], index: 4, kind: input, shape index: {}]
  %s5 = inlined_call_operand.vmem [shape: bf16[2,64,32], index: 5, kind: input, shape index: {}]
  %s6 = inlined_call_operand.vmem [shape: f32[3,8,96], index: 6, kind: input, shape index: {}]
  %s7 = inlined_call_operand.vmem [shape: f32[8,1], index: 7, kind: output, shape index: {}]
  %s8 = sld [smem:[#allocation0]]
  $region38: #{vit_forward.1} parent=0
    _
  %s10 = ssub.s32 1, %s8
  %s11 = scalar_select 0, %s10, %s8
  // Predicated region
  $region2: #{vit_forward.1} parent=0 // pred_check
    _
  $region3: #{vit_forward.1} parent=0 // pred_check_branch
    %13 = sbr.rel (0) target = $region5
  $region4: #{vit_forward.1} parent=0 // pred_region
    _
  $region5: #{vit_forward.1} parent=0 // pred_fallthru
    _
  // Predicated region
  $region6: #{vit_forward.1} parent=0 // pred_check
    _
  $region7: #{vit_forward.1} parent=0 // pred_check_branch
    %15 = sbr.rel (0) target = $region9
  $region8: #{vit_forward.1} parent=0 // pred_region
    _
  $region9: #{vit_forward.1} parent=0 // pred_fallthru
    _
  // Predicated region
  $region10: #{vit_forward.1} parent=0 // pred_check
    _
  $region11: #{vit_forward.1} parent=0 // pred_check_branch
    %17 = sbr.rel (0) target = $region13
  $region12: #{vit_forward.1} parent=0 // pred_region
    _
  $region13: #{vit_forward.1} parent=0 // pred_fallthru
    _
  // Predicated region
  $region14: #{vit_forward.1} parent=0 // pred_check
    _
  $region15: #{vit_forward.1} parent=0 // pred_check_branch
    %19 = sbr.rel (0) target = $region17
  $region16: #{vit_forward.1} parent=0 // pred_region
    _
  $region17: #{vit_forward.1} parent=0 // pred_fallthru
    _
  // Predicated region
  $region18: #{vit_forward.1} parent=0 // pred_check
    _
  $region19: #{vit_forward.1} parent=0 // pred_check_branch
    %21 = sbr.rel (0) target = $region21
  $region20: #{vit_forward.1} parent=0 // pred_region
    _
  $region21: #{vit_forward.1} parent=0 // pred_fallthru
    _
  // Predicated region
  $region22: #{vit_forward.1} parent=0 // pred_check
    _
  $region23: #{vit_forward.1} parent=0 // pred_check_branch
    %23 = sbr.rel (0) target = $region25
  $region24: #{vit_forward.1} parent=0 // pred_region
    _
  $region25: #{vit_forward.1} parent=0 // pred_fallthru
    _
  // Predicated region
  $region26: #{vit_forward.1} parent=0 // pred_check
    _
  $region27: #{vit_forward.1} parent=0 // pred_check_branch
    %25 = sbr.rel (0) target = $region29
  $region28: #{vit_forward.1} parent=0 // pred_region
    _
  $region29: #{vit_forward.1} parent=0 // pred_fallthru
    _
  %v27 = vld [vmem:[%s0] sm:$0xff]
  %v28 = vld [vmem:[%s0 + $0x8] sm:$0xff]
  %v29 = vld [vmem:[%s0 + $0x10] sm:$0xff]
  %v30 = vld [vmem:[%s0 + $0x18] sm:$0xff]
  %v31 = vld [vmem:[%s0 + $0x20] sm:$0xff]
  %v32 = vld [vmem:[%s0 + $0x28] sm:$0xff]
  %v33 = vld [vmem:[%s0 + $0x30] sm:$0xff]
  %v34 = vld [vmem:[%s0 + $0x38] sm:$0xff]
  %v35 = vld [vmem:[%s0 + $0x40] sm:$0xff]
  %v36 = vld [vmem:[%s0 + $0x48] sm:$0xff]
  %v37 = vld [vmem:[%s0 + $0x50] sm:$0xff]
  %v38 = vld [vmem:[%s0 + $0x58] sm:$0xff]
  %v39 = vld [vmem:[%s0 + $0x60] sm:$0xff]
  %v40 = vld [vmem:[%s0 + $0x68] sm:$0xff]
  %v41 = vld [vmem:[%s0 + $0x70] sm:$0xff]
  %v42 = vld [vmem:[%s2] sm:$0xf]
  %v43 = vld [vmem:[%s2 + $0x4] sm:$0xf]
  %v44 = vld [vmem:[%s2 + $0x8] sm:$0xf]
  %v45 = vld [vmem:[%s2 + $0xc] sm:$0xf]
  %v46 = vld [vmem:[%s2 + $0x10] sm:$0xf]
  %v47 = vld [vmem:[%s2 + $0x14] sm:$0xf]
  %v48 = vld [vmem:[%s2 + $0x18] sm:$0xf]
  %v49 = vld [vmem:[%s2 + $0x1c] sm:$0xf]
  %v50 = vld [vmem:[%s2 + $0x20] sm:$0xf]
  %v51 = vld [vmem:[%s2 + $0x24] sm:$0xf]
  %v52 = vld [vmem:[%s2 + $0x28] sm:$0xf]
  %v53 = vld [vmem:[%s2 + $0x2c] sm:$0xf]
  %v54 = vld [vmem:[%s2 + $0x30] sm:$0xf]
  %v55 = vld [vmem:[%s2 + $0x34] sm:$0xf]
  %v56 = vld [vmem:[%s2 + $0x38] sm:$0xf]
  %v57 = vld [vmem:[%s2 + $0x3c] sm:$0xf]
  %v58 = vld [vmem:[%s2 + $0x40] sm:$0xf]
  %v59 = vld [vmem:[%s2 + $0x44] sm:$0xf]
  %v60 = vld [vmem:[%s2 + $0x48] sm:$0xf]
  %v61 = vld [vmem:[%s2 + $0x4c] sm:$0xf]
  %v62 = vld [vmem:[%s2 + $0x50] sm:$0xf]
  %v63 = vld [vmem:[%s2 + $0x54] sm:$0xf]
  %v64 = vld [vmem:[%s2 + $0x58] sm:$0xf]
  %v65 = vld [vmem:[%s2 + $0x5c] sm:$0xf]
  %v66 = vld [vmem:[%s2 + $0x60] sm:$0xf]
  %v67 = vld [vmem:[%s2 + $0x64] sm:$0xf]
  %v68 = vld [vmem:[%s2 + $0x68] sm:$0xf]
  %v69 = vld [vmem:[%s2 + $0x6c] sm:$0xf]
  %v70 = vld [vmem:[%s2 + $0x70] sm:$0xf]
  %v71 = vld [vmem:[%s2 + $0x74] sm:$0xf]
  %v72 = vld [vmem:[%s2 + $0x78] sm:$0xf]
  %v73 = vld [vmem:[%s2 + $0x7c] sm:$0xf]
  %v74 = vld [vmem:[%s2 + $0x80] sm:$0xf]
  %v75 = vld [vmem:[%s2 + $0x84] sm:$0xf]
  %v76 = vld [vmem:[%s2 + $0x88] sm:$0xf]
  %v77 = vld [vmem:[%s2 + $0x8c] sm:$0xf]
  %v78 = vld [vmem:[%s2 + $0x90] sm:$0xf]
  %v79 = vld [vmem:[%s2 + $0x94] sm:$0xf]
  %v80 = vld [vmem:[%s2 + $0x98] sm:$0xf]
  %v81 = vld [vmem:[%s2 + $0x9c] sm:$0xf]
  %v82 = vld [vmem:[%s2 + $0xa0] sm:$0xf]
  %v83 = vld [vmem:[%s2 + $0xa4] sm:$0xf]
  %v84 = vld [vmem:[%s2 + $0xa8] sm:$0xf]
  %v85 = vld [vmem:[%s2 + $0xac] sm:$0xf]
  %v86 = vld [vmem:[%s2 + $0xb0] sm:$0xf]
  %v87 = vld [vmem:[%s2 + $0xb4] sm:$0xf]
  %v88 = vld [vmem:[%s2 + $0xb8] sm:$0xf]
  %v89 = vld [vmem:[%s2 + $0xbc] sm:$0xf]
  %v90 = vld [vmem:[%s2 + $0xc0] sm:$0xf]
  %v91 = vld [vmem:[%s2 + $0xc4] sm:$0xf]
  %v92 = vld [vmem:[%s2 + $0xc8] sm:$0xf]
  %v93 = vld [vmem:[%s2 + $0xcc] sm:$0xf]
  %v94 = vld [vmem:[%s2 + $0xd0] sm:$0xf]
  %v95 = vld [vmem:[%s2 + $0xd4] sm:$0xf]
  %v96 = vld [vmem:[%s2 + $0xd8] sm:$0xf]
  %v97 = vld [vmem:[%s2 + $0xdc] sm:$0xf]
  %v98 = vld [vmem:[%s2 + $0xe0] sm:$0xf]
  %v99 = vld [vmem:[%s2 + $0xe4] sm:$0xf]
  %v100 = vld [vmem:[%s2 + $0xe8] sm:$0xf]
  %v101 = vld [vmem:[%s2 + $0xec] sm:$0xf]
  %v102 = vld [vmem:[%s2 + $0xf0] sm:$0xf]
  %v103 = vld [vmem:[%s2 + $0xf4] sm:$0xf]
  %v104 = vld [vmem:[%s2 + $0xf8] sm:$0xf]
  %v105 = vld [vmem:[%s2 + $0xfc] sm:$0xf]
  %v106 = vld [vmem:[%s2 + $0x100] sm:$0xf]
  %v107 = vld [vmem:[%s2 + $0x104] sm:$0xf]
  %v108 = vld [vmem:[%s2 + $0x108] sm:$0xf]
  %v109 = vld [vmem:[%s2 + $0x10c] sm:$0xf]
  %v110 = vld [vmem:[%s2 + $0x110] sm:$0xf]
  %v111 = vld [vmem:[%s2 + $0x114] sm:$0xf]
  %v112 = vld [vmem:[%s2 + $0x118] sm:$0xf]
  %v113 = vld [vmem:[%s2 + $0x11c] sm:$0xf]
  %v114 = vld [vmem:[%s2 + $0x120] sm:$0xf]
  %v115 = vld [vmem:[%s2 + $0x124] sm:$0xf]
  %v116 = vld [vmem:[%s2 + $0x128] sm:$0xf]
  %v117 = vld [vmem:[%s2 + $0x12c] sm:$0xf]
  %v118 = vld [vmem:[%s2 + $0x130] sm:$0xf]
  %v119 = vld [vmem:[%s2 + $0x134] sm:$0xf]
  %v120 = vld [vmem:[%s2 + $0x138] sm:$0xf]
  %v121 = vld [vmem:[%s2 + $0x13c] sm:$0xf]
  %v122 = vld [vmem:[%s2 + $0x140] sm:$0xf]
  %v123 = vld [vmem:[%s2 + $0x144] sm:$0xf]
  %v124 = vld [vmem:[%s2 + $0x148] sm:$0xf]
  %v125 = vld [vmem:[%s2 + $0x14c] sm:$0xf]
  %v126 = vld [vmem:[%s2 + $0x150] sm:$0xf]
  %v127 = vld [vmem:[%s2 + $0x154] sm:$0xf]
  %v128 = vld [vmem:[%s2 + $0x158] sm:$0xf]
  %v129 = vld [vmem:[%s2 + $0x15c] sm:$0xf]
  %v130 = vld [vmem:[%s2 + $0x160] sm:$0xf]
  %v131 = vld [vmem:[%s2 + $0x164] sm:$0xf]
  %v132 = vld [vmem:[%s2 + $0x168] sm:$0xf]
  %v133 = vld [vmem:[%s2 + $0x16c] sm:$0xf]
  %v134 = vld [vmem:[%s2 + $0x170] sm:$0xf]
  %v135 = vld [vmem:[%s2 + $0x174] sm:$0xf]
  %v136 = vld [vmem:[%s2 + $0x178] sm:$0xf]
  %v137 = vld [vmem:[%s2 + $0x17c] sm:$0xf]
  %v138 = vld [vmem:[%s1] sm:$0xff]
  %v139 = vld [vmem:[%s1 + $0x8] sm:$0xff]
  %v140 = vld [vmem:[%s1 + $0x10] sm:$0xff]
  %v141 = vld [vmem:[%s1 + $0x18] sm:$0xff]
  %v142 = vld [vmem:[%s1 + $0x20] sm:$0xff]
  %v158 = vunpack.c.l.b16 %v27
  %v159 = vunpack.c.h.b16 %v27
  %v160 = vunpack.c.l.b16 %v28
  %v161 = vunpack.c.h.b16 %v28
  %v162 = vunpack.c.l.b16 %v29
  %v163 = vunpack.c.h.b16 %v29
  %v164 = vunpack.c.l.b16 %v30
  %v165 = vunpack.c.h.b16 %v30
  %v166 = vunpack.c.l.b16 %v31
  %v167 = vunpack.c.h.b16 %v31
  %v168 = vunpack.c.l.b16 %v32
  %v169 = vunpack.c.h.b16 %v32
  %v170 = vunpack.c.l.b16 %v33
  %v171 = vunpack.c.h.b16 %v33
  %v172 = vunpack.c.l.b16 %v34
  %v173 = vunpack.c.h.b16 %v34
  %v174 = vunpack.c.l.b16 %v35
  %v175 = vunpack.c.h.b16 %v35
  %v176 = vunpack.c.l.b16 %v36
  %v177 = vunpack.c.h.b16 %v36
  %v178 = vunpack.c.l.b16 %v37
  %v179 = vunpack.c.h.b16 %v37
  %v180 = vunpack.c.l.b16 %v38
  %v181 = vunpack.c.h.b16 %v38
  %v182 = vunpack.c.l.b16 %v39
  %v183 = vunpack.c.h.b16 %v39
  %v184 = vunpack.c.l.b16 %v40
  %v185 = vunpack.c.h.b16 %v40
  %v186 = vunpack.c.l.b16 %v41
  %v187 = vunpack.c.h.b16 %v41
  %v188 = vpack.c.b16 %v164, %v158
  %v189 = vpack.c.b16 %v165, %v159
  %v190 = vpack.c.b16 %v166, %v160
  %v191 = vpack.c.b16 %v167, %v161
  %v192 = vpack.c.b16 %v168, %v162
  %v193 = vpack.c.b16 %v169, %v163
  %v194 = vpack.c.b16 %v176, %v170
  %v195 = vpack.c.b16 %v177, %v171
  %v196 = vpack.c.b16 %v178, %v172
  %v197 = vpack.c.b16 %v179, %v173
  %v198 = vpack.c.b16 %v180, %v174
  %v199 = vpack.c.b16 %v181, %v175
  %v200 = vpack.c.b16 %v182, %v182
  %v201 = vpack.c.b16 %v183, %v183
  %v202 = vpack.c.b16 %v184, %v184
  %v203 = vpack.c.b16 %v185, %v185
  %v204 = vpack.c.b16 %v186, %v186
  %v205 = vpack.c.b16 %v187, %v187
  %v320 = vunpack.c.l.b16 %v42
  %v321 = vunpack.c.l.b16 %v43
  %v322 = vunpack.c.l.b16 %v44
  %v323 = vunpack.c.l.b16 %v45
  %v324 = vunpack.c.l.b16 %v46
  %v325 = vunpack.c.l.b16 %v47
  %v326 = vunpack.c.l.b16 %v48
  %v327 = vunpack.c.l.b16 %v49
  %v328 = vunpack.c.l.b16 %v50
  %v329 = vunpack.c.l.b16 %v51
  %v330 = vunpack.c.l.b16 %v52
  %v331 = vunpack.c.l.b16 %v53
  %v332 = vunpack.c.l.b16 %v54
  %v333 = vunpack.c.l.b16 %v55
  %v334 = vunpack.c.l.b16 %v56
  %v335 = vunpack.c.l.b16 %v57
  %v336 = vunpack.c.l.b16 %v58
  %v337 = vunpack.c.l.b16 %v59
  %v338 = vunpack.c.l.b16 %v60
  %v339 = vunpack.c.l.b16 %v61
  %v340 = vunpack.c.l.b16 %v62
  %v341 = vunpack.c.l.b16 %v63
  %v342 = vunpack.c.l.b16 %v64
  %v343 = vunpack.c.l.b16 %v65
  %v344 = vunpack.c.l.b16 %v66
  %v345 = vunpack.c.l.b16 %v67
  %v346 = vunpack.c.l.b16 %v68
  %v347 = vunpack.c.l.b16 %v69
  %v348 = vunpack.c.l.b16 %v70
  %v349 = vunpack.c.l.b16 %v71
  %v350 = vunpack.c.l.b16 %v72
  %v351 = vunpack.c.l.b16 %v73
  %v352 = vunpack.c.l.b16 %v74
  %v353 = vunpack.c.l.b16 %v75
  %v354 = vunpack.c.l.b16 %v76
  %v355 = vunpack.c.l.b16 %v77
  %v356 = vunpack.c.l.b16 %v78
  %v357 = vunpack.c.l.b16 %v79
  %v358 = vunpack.c.l.b16 %v80
  %v359 = vunpack.c.l.b16 %v81
  %v360 = vunpack.c.l.b16 %v82
  %v361 = vunpack.c.l.b16 %v83
  %v362 = vunpack.c.l.b16 %v84
  %v363 = vunpack.c.l.b16 %v85
  %v364 = vunpack.c.l.b16 %v86
  %v365 = vunpack.c.l.b16 %v87
  %v366 = vunpack.c.l.b16 %v88
  %v367 = vunpack.c.l.b16 %v89
  %v368 = vunpack.c.l.b16 %v90
  %v369 = vunpack.c.l.b16 %v91
  %v370 = vunpack.c.l.b16 %v92
  %v371 = vunpack.c.l.b16 %v93
  %v372 = vunpack.c.l.b16 %v94
  %v373 = vunpack.c.l.b16 %v95
  %v374 = vunpack.c.l.b16 %v96
  %v375 = vunpack.c.l.b16 %v97
  %v376 = vunpack.c.l.b16 %v98
  %v377 = vunpack.c.l.b16 %v99
  %v378 = vunpack.c.l.b16 %v100
  %v379 = vunpack.c.l.b16 %v101
  %v380 = vunpack.c.l.b16 %v102
  %v381 = vunpack.c.l.b16 %v103
  %v382 = vunpack.c.l.b16 %v104
  %v383 = vunpack.c.l.b16 %v105
  %v384 = vunpack.c.l.b16 %v106
  %v385 = vunpack.c.l.b16 %v107
  %v386 = vunpack.c.l.b16 %v108
  %v387 = vunpack.c.l.b16 %v109
  %v388 = vunpack.c.l.b16 %v110
  %v389 = vunpack.c.l.b16 %v111
  %v390 = vunpack.c.l.b16 %v112
  %v391 = vunpack.c.l.b16 %v113
  %v392 = vunpack.c.l.b16 %v114
  %v393 = vunpack.c.l.b16 %v115
  %v394 = vunpack.c.l.b16 %v116
  %v395 = vunpack.c.l.b16 %v117
  %v396 = vunpack.c.l.b16 %v118
  %v397 = vunpack.c.l.b16 %v119
  %v398 = vunpack.c.l.b16 %v120
  %v399 = vunpack.c.l.b16 %v121
  %v400 = vunpack.c.l.b16 %v122
  %v401 = vunpack.c.l.b16 %v123
  %v402 = vunpack.c.l.b16 %v124
  %v403 = vunpack.c.l.b16 %v125
  %v404 = vunpack.c.l.b16 %v126
  %v405 = vunpack.c.l.b16 %v127
  %v406 = vunpack.c.l.b16 %v128
  %v407 = vunpack.c.l.b16 %v129
  %v408 = vunpack.c.l.b16 %v130
  %v409 = vunpack.c.l.b16 %v131
  %v410 = vunpack.c.l.b16 %v132
  %v411 = vunpack.c.l.b16 %v133
  %v412 = vunpack.c.l.b16 %v134
  %v413 = vunpack.c.l.b16 %v135
  %v414 = vunpack.c.l.b16 %v136
  %v415 = vunpack.c.l.b16 %v137
  %v416 = vpack.c.b16 %v321, %v320
  %v417 = vpack.c.b16 %v323, %v322
  %v418 = vpack.c.b16 %v325, %v324
  %v419 = vpack.c.b16 %v327, %v326
  %v420 = vpack.c.b16 %v329, %v328
  %v421 = vpack.c.b16 %v331, %v330
  %v422 = vpack.c.b16 %v333, %v332
  %v423 = vpack.c.b16 %v335, %v334
  %v424 = vpack.c.b16 %v337, %v336
  %v425 = vpack.c.b16 %v339, %v338
  %v426 = vpack.c.b16 %v341, %v340
  %v427 = vpack.c.b16 %v343, %v342
  %v428 = vpack.c.b16 %v345, %v344
  %v429 = vpack.c.b16 %v347, %v346
  %v430 = vpack.c.b16 %v349, %v348
  %v431 = vpack.c.b16 %v351, %v350
  %v432 = vpack.c.b16 %v353, %v352
  %v433 = vpack.c.b16 %v355, %v354
  %v434 = vpack.c.b16 %v357, %v356
  %v435 = vpack.c.b16 %v359, %v358
  %v436 = vpack.c.b16 %v361, %v360
  %v437 = vpack.c.b16 %v363, %v362
  %v438 = vpack.c.b16 %v365, %v364
  %v439 = vpack.c.b16 %v367, %v366
  %v440 = vpack.c.b16 %v369, %v368
  %v441 = vpack.c.b16 %v371, %v370
  %v442 = vpack.c.b16 %v373, %v372
  %v443 = vpack.c.b16 %v375, %v374
  %v444 = vpack.c.b16 %v377, %v376
  %v445 = vpack.c.b16 %v379, %v378
  %v446 = vpack.c.b16 %v381, %v380
  %v447 = vpack.c.b16 %v383, %v382
  %v448 = vpack.c.b16 %v385, %v384
  %v449 = vpack.c.b16 %v387, %v386
  %v450 = vpack.c.b16 %v389, %v388
  %v451 = vpack.c.b16 %v391, %v390
  %v452 = vpack.c.b16 %v393, %v392
  %v453 = vpack.c.b16 %v395, %v394
  %v454 = vpack.c.b16 %v397, %v396
  %v455 = vpack.c.b16 %v399, %v398
  %v456 = vpack.c.b16 %v401, %v400
  %v457 = vpack.c.b16 %v403, %v402
  %v458 = vpack.c.b16 %v405, %v404
  %v459 = vpack.c.b16 %v407, %v406
  %v460 = vpack.c.b16 %v409, %v408
  %v461 = vpack.c.b16 %v411, %v410
  %v462 = vpack.c.b16 %v413, %v412
  %v463 = vpack.c.b16 %v415, %v414
  %512 = vmatpush.bf16.msra.mxu0 %v423
  %513 = vmatpush.bf16.msra.mxu0 %v422
  %514 = vmatpush.bf16.msra.mxu0 %v421
  %515 = vmatpush.bf16.msra.mxu0 %v420
  %516 = vmatpush.bf16.msra.mxu0 %v419
  %517 = vmatpush.bf16.msra.mxu0 %v418
  %518 = vmatpush.bf16.msra.mxu0 %v417
  %519 = vmatpush.bf16.msra.mxu0 %v416
  %520 = vmatmul.bf16.gmra.mxu0 %v188
  %v521 = vpop.f32.mrf.mxu0
  %v522 = vadd.f32 %v138, %v521
  %v523 = vpop.f32.mrf.mxu0
  %v524 = vadd.f32 %v139, %v523
  %525 = vmatmul.bf16.gmra.mxu0 %v194
  %v526 = vpop.f32.mrf.mxu0
  %v527 = vadd.f32 %v140, %v526
  %v528 = vpop.f32.mrf.mxu0
  %v529 = vadd.f32 %v141, %v528
  %530 = vmatmul.bf16.gmra.mxu0 %v200
  %v531 = vpop.f32.mrf.mxu0
  %v532 = vadd.f32 %v142, %v531
  %v533 = vpop.f32.mrf.mxu0
  %534 = vdwg.mxu0
  %535 = vmatpush.bf16.msra.mxu0 %v431
  %536 = vmatpush.bf16.msra.mxu0 %v430
  %537 = vmatpush.bf16.msra.mxu0 %v429
  %538 = vmatpush.bf16.msra.mxu0 %v428
  %539 = vmatpush.bf16.msra.mxu0 %v427
  %540 = vmatpush.bf16.msra.mxu0 %v426
  %541 = vmatpush.bf16.msra.mxu0 %v425
  %542 = vmatpush.bf16.msra.mxu0 %v424
  %543 = vmatmul.bf16.gmra.mxu0 %v189
  %v544 = vpop.f32.mrf.mxu0
  %v545 = vadd.f32 %v522, %v544
  %v546 = vpop.f32.mrf.mxu0
  %v547 = vadd.f32 %v524, %v546
  %548 = vmatmul.bf16.gmra.mxu0 %v195
  %v549 = vpop.f32.mrf.mxu0
  %v550 = vadd.f32 %v527, %v549
  %v551 = vpop.f32.mrf.mxu0
  %v552 = vadd.f32 %v529, %v551
  %553 = vmatmul.bf16.gmra.mxu0 %v201
  %v554 = vpop.f32.mrf.mxu0
  %v555 = vadd.f32 %v532, %v554
  %v556 = vpop.f32.mrf.mxu0
  %557 = vdwg.mxu0
  %558 = vmatpush.bf16.msra.mxu0 %v439
  %559 = vmatpush.bf16.msra.mxu0 %v438
  %560 = vmatpush.bf16.msra.mxu0 %v437
  %561 = vmatpush.bf16.msra.mxu0 %v436
  %562 = vmatpush.bf16.msra.mxu0 %v435
  %563 = vmatpush.bf16.msra.mxu0 %v434
  %564 = vmatpush.bf16.msra.mxu0 %v433
  %565 = vmatpush.bf16.msra.mxu0 %v432
  %566 = vmatmul.bf16.gmra.mxu0 %v190
  %v567 = vpop.f32.mrf.mxu0
  %v568 = vadd.f32 %v545, %v567
  %v569 = vpop.f32.mrf.mxu0
  %v570 = vadd.f32 %v547, %v569
  %571 = vmatmul.bf16.gmra.mxu0 %v196
  %v572 = vpop.f32.mrf.mxu0
  %v573 = vadd.f32 %v550, %v572
  %v574 = vpop.f32.mrf.mxu0
  %v575 = vadd.f32 %v552, %v574
  %576 = vmatmul.bf16.gmra.mxu0 %v202
  %v577 = vpop.f32.mrf.mxu0
  %v578 = vadd.f32 %v555, %v577
  %v579 = vpop.f32.mrf.mxu0
  %580 = vdwg.mxu0
  %581 = vmatpush.bf16.msra.mxu0 %v447
  %582 = vmatpush.bf16.msra.mxu0 %v446
  %583 = vmatpush.bf16.msra.mxu0 %v445
  %584 = vmatpush.bf16.msra.mxu0 %v444
  %585 = vmatpush.bf16.msra.mxu0 %v443
  %586 = vmatpush.bf16.msra.mxu0 %v442
  %587 = vmatpush.bf16.msra.mxu0 %v441
  %588 = vmatpush.bf16.msra.mxu0 %v440
  %589 = vmatmul.bf16.gmra.mxu0 %v191
  %v590 = vpop.f32.mrf.mxu0
  %v591 = vadd.f32 %v568, %v590
  %v592 = vpop.f32.mrf.mxu0
  %v593 = vadd.f32 %v570, %v592
  %594 = vmatmul.bf16.gmra.mxu0 %v197
  %v595 = vpop.f32.mrf.mxu0
  %v596 = vadd.f32 %v573, %v595
  %v597 = vpop.f32.mrf.mxu0
  %v598 = vadd.f32 %v575, %v597
  %599 = vmatmul.bf16.gmra.mxu0 %v203
  %v600 = vpop.f32.mrf.mxu0
  %v601 = vadd.f32 %v578, %v600
  %v602 = vpop.f32.mrf.mxu0
  %603 = vdwg.mxu0
  %604 = vmatpush.bf16.msra.mxu0 %v455
  %605 = vmatpush.bf16.msra.mxu0 %v454
  %606 = vmatpush.bf16.msra.mxu0 %v453
  %607 = vmatpush.bf16.msra.mxu0 %v452
  %608 = vmatpush.bf16.msra.mxu0 %v451
  %609 = vmatpush.bf16.msra.mxu0 %v450
  %610 = vmatpush.bf16.msra.mxu0 %v449
  %611 = vmatpush.bf16.msra.mxu0 %v448
  %612 = vmatmul.bf16.gmra.mxu0 %v192
  %v613 = vpop.f32.mrf.mxu0
  %v614 = vadd.f32 %v591, %v613
  %v615 = vpop.f32.mrf.mxu0
  %v616 = vadd.f32 %v593, %v615
  %617 = vmatmul.bf16.gmra.mxu0 %v198
  %v618 = vpop.f32.mrf.mxu0
  %v619 = vadd.f32 %v596, %v618
  %v620 = vpop.f32.mrf.mxu0
  %v621 = vadd.f32 %v598, %v620
  %622 = vmatmul.bf16.gmra.mxu0 %v204
  %v623 = vpop.f32.mrf.mxu0
  %v624 = vadd.f32 %v601, %v623
  %v625 = vpop.f32.mrf.mxu0
  %626 = vdwg.mxu0
  %627 = vmatpush.bf16.msra.mxu0 %v463
  %628 = vmatpush.bf16.msra.mxu0 %v462
  %629 = vmatpush.bf16.msra.mxu0 %v461
  %630 = vmatpush.bf16.msra.mxu0 %v460
  %631 = vmatpush.bf16.msra.mxu0 %v459
  %632 = vmatpush.bf16.msra.mxu0 %v458
  %633 = vmatpush.bf16.msra.mxu0 %v457
  %634 = vmatpush.bf16.msra.mxu0 %v456
  %635 = vmatmul.bf16.gmra.mxu0 %v193
  %v636 = vpop.f32.mrf.mxu0
  %v637 = vadd.f32 %v614, %v636
  %v638 = vpop.f32.mrf.mxu0
  %v639 = vadd.f32 %v616, %v638
  %640 = vmatmul.bf16.gmra.mxu0 %v199
  %v641 = vpop.f32.mrf.mxu0
  %v642 = vadd.f32 %v619, %v641
  %v643 = vpop.f32.mrf.mxu0
  %v644 = vadd.f32 %v621, %v643
  %645 = vmatmul.bf16.gmra.mxu0 %v205
  %v646 = vpop.f32.mrf.mxu0
  %v647 = vadd.f32 %v624, %v646
  %v648 = vpop.f32.mrf.mxu0
  %649 = vdwg.mxu0
  %v650 = vlaneseq
  %v651 = vshrl.u32 %v650, 7
  %v652 = vadd.s32 %v651, 8
  %v653 = vadd.s32 %v651, 16
  %v654 = vadd.s32 %v651, 24
  %v655 = vadd.s32 %v651, 32
  %v656 = vlaneseq
  %v657 = vand.u32 %v656, 127
  %vm658 = vcmp.ge.s32.totalorder %v651, 5
  %vm659 = vcmp.ge.s32.totalorder %v652, 5
  %vm660 = vcmp.ge.s32.totalorder %v653, 5
  %vm661 = vcmp.ge.s32.totalorder %v654, 5
  %vm662 = vcmp.ge.s32.totalorder %v655, 5
  %v663 = vsel %vm658, 1, 0
  %v664 = vsel %vm659, 1, 0
  %v665 = vsel %vm660, 1, 0
  %v666 = vsel %vm661, 1, 0
  %v667 = vsel %vm662, 1, 0
  %vm668 = vcmp.ge.s32.totalorder %v657, 5
  %v669 = vsel %vm668, 1, 0
  %vm670 = vcmp.ge.s32.totalorder %v651, 10
  %vm671 = vcmp.ge.s32.totalorder %v652, 10
  %vm672 = vcmp.ge.s32.totalorder %v653, 10
  %vm673 = vcmp.ge.s32.totalorder %v654, 10
  %vm674 = vcmp.ge.s32.totalorder %v655, 10
  %v675 = vsel %vm670, 1, 0
  %v676 = vsel %vm671, 1, 0
  %v677 = vsel %vm672, 1, 0
  %v678 = vsel %vm673, 1, 0
  %v679 = vsel %vm674, 1, 0
  %v680 = vadd.s32 %v663, %v675
  %v681 = vadd.s32 %v664, %v676
  %v682 = vadd.s32 %v665, %v677
  %v683 = vadd.s32 %v666, %v678
  %v684 = vadd.s32 %v667, %v679
  %vm685 = vcmp.ge.s32.totalorder %v657, 10
  %v686 = vsel %vm685, 1, 0
  %v687 = vadd.s32 %v669, %v686
  %vm688 = vcmp.ge.s32.totalorder %v651, 15
  %vm689 = vcmp.ge.s32.totalorder %v652, 15
  %vm690 = vcmp.ge.s32.totalorder %v653, 15
  %vm691 = vcmp.ge.s32.totalorder %v654, 15
  %vm692 = vcmp.ge.s32.totalorder %v655, 15
  %v693 = vsel %vm688, 1, 0
  %v694 = vsel %vm689, 1, 0
  %v695 = vsel %vm690, 1, 0
  %v696 = vsel %vm691, 1, 0
  %v697 = vsel %vm692, 1, 0
  %v698 = vadd.s32 %v680, %v693
  %v699 = vadd.s32 %v681, %v694
  %v700 = vadd.s32 %v682, %v695
  %v701 = vadd.s32 %v683, %v696
  %v702 = vadd.s32 %v684, %v697
  %vm703 = vcmp.ge.s32.totalorder %v657, 15
  %v704 = vsel %vm703, 1, 0
  %v705 = vadd.s32 %v687, %v704
  %vm706 = vcmp.ge.s32.totalorder %v651, 20
  %vm707 = vcmp.ge.s32.totalorder %v652, 20
  %vm708 = vcmp.ge.s32.totalorder %v653, 20
  %vm709 = vcmp.ge.s32.totalorder %v654, 20
  %vm710 = vcmp.ge.s32.totalorder %v655, 20
  %v711 = vsel %vm706, 1, 0
  %v712 = vsel %vm707, 1, 0
  %v713 = vsel %vm708, 1, 0
  %v714 = vsel %vm709, 1, 0
  %v715 = vsel %vm710, 1, 0
  %v716 = vadd.s32 %v698, %v711
  %v717 = vadd.s32 %v699, %v712
  %v718 = vadd.s32 %v700, %v713
  %v719 = vadd.s32 %v701, %v714
  %v720 = vadd.s32 %v702, %v715
  %vm721 = vcmp.ge.s32.totalorder %v657, 20
  %v722 = vsel %vm721, 1, 0
  %v723 = vadd.s32 %v705, %v722
  %vm724 = vcmp.ge.s32.totalorder %v651, 25
  %vm725 = vcmp.ge.s32.totalorder %v652, 25
  %vm726 = vcmp.ge.s32.totalorder %v653, 25
  %vm727 = vcmp.ge.s32.totalorder %v654, 25
  %vm728 = vcmp.ge.s32.totalorder %v655, 25
  %v729 = vsel %vm724, 1, 0
  %v730 = vsel %vm725, 1, 0
  %v731 = vsel %vm726, 1, 0
  %v732 = vsel %vm727, 1, 0
  %v733 = vsel %vm728, 1, 0
  %v734 = vadd.s32 %v716, %v729
  %v735 = vadd.s32 %v717, %v730
  %v736 = vadd.s32 %v718, %v731
  %v737 = vadd.s32 %v719, %v732
  %v738 = vadd.s32 %v720, %v733
  %vm739 = vcmp.ge.s32.totalorder %v657, 25
  %v740 = vsel %vm739, 1, 0
  %v741 = vadd.s32 %v723, %v740
  %vm742 = vcmp.ge.s32.totalorder %v651, 30
  %vm743 = vcmp.ge.s32.totalorder %v652, 30
  %vm744 = vcmp.ge.s32.totalorder %v653, 30
  %vm745 = vcmp.ge.s32.totalorder %v654, 30
  %vm746 = vcmp.ge.s32.totalorder %v655, 30
  %v747 = vsel %vm742, 1, 0
  %v748 = vsel %vm743, 1, 0
  %v749 = vsel %vm744, 1, 0
  %v750 = vsel %vm745, 1, 0
  %v751 = vsel %vm746, 1, 0
  %v752 = vadd.s32 %v734, %v747
  %v753 = vadd.s32 %v735, %v748
  %v754 = vadd.s32 %v736, %v749
  %v755 = vadd.s32 %v737, %v750
  %v756 = vadd.s32 %v738, %v751
  %vm757 = vcmp.ge.s32.totalorder %v657, 30
  %v758 = vsel %vm757, 1, 0
  %v759 = vadd.s32 %v741, %v758
  %vm760 = vcmp.ge.s32.totalorder %v651, 35
  %vm761 = vcmp.ge.s32.totalorder %v652, 35
  %vm762 = vcmp.ge.s32.totalorder %v653, 35
  %vm763 = vcmp.ge.s32.totalorder %v654, 35
  %vm764 = vcmp.ge.s32.totalorder %v655, 35
  %v765 = vsel %vm760, 1, 0
  %v766 = vsel %vm761, 1, 0
  %v767 = vsel %vm762, 1, 0
  %v768 = vsel %vm763, 1, 0
  %v769 = vsel %vm764, 1, 0
  %v770 = vadd.s32 %v752, %v765
  %v771 = vadd.s32 %v753, %v766
  %v772 = vadd.s32 %v754, %v767
  %v773 = vadd.s32 %v755, %v768
  %v774 = vadd.s32 %v756, %v769
  %vm775 = vcmp.ge.s32.totalorder %v657, 35
  %v776 = vsel %vm775, 1, 0
  %v777 = vadd.s32 %v759, %v776
  %vm778 = vcmp.eq.s32.totalorder %v770, %v777
  %vm779 = vcmp.eq.s32.totalorder %v771, %v777
  %vm780 = vcmp.eq.s32.totalorder %v772, %v777
  %vm781 = vcmp.eq.s32.totalorder %v773, %v777
  %vm782 = vcmp.eq.s32.totalorder %v774, %v777
  %v783 = vsel %vm778, 0.0, -1e+30
  %v784 = vsel %vm779, 0.0, -1e+30
  %v785 = vsel %vm780, 0.0, -1e+30
  %v786 = vsel %vm781, 0.0, -1e+30
  %v787 = vsel %vm782, 0.0, -1e+30
  %v788 = vld [vmem:[%s6] sm:$0xff]
  %v789 = vld [vmem:[%s3] sm:$0xf]
  %v790 = vld [vmem:[%s3 + $0x4] sm:$0xf]
  %v791 = vld [vmem:[%s3 + $0x8] sm:$0xf]
  %v792 = vld [vmem:[%s3 + $0xc] sm:$0xf]
  %vm793 = vcmask 261120
  %v794 = vsel %vm793, %v637, 0.0
  %795 = vadd.xlane.f32.xlu0 %v794
  %v796 = vpop.xlane.xlu0 %795
  %v797 = vsel %vm793, %v639, 0.0
  %798 = vadd.xlane.f32.xlu0 %v797
  %v799 = vpop.xlane.xlu0 %798
  %v800 = vsel %vm793, %v642, 0.0
  %801 = vadd.xlane.f32.xlu0 %v800
  %v802 = vpop.xlane.xlu0 %801
  %v803 = vsel %vm793, %v644, 0.0
  %804 = vadd.xlane.f32.xlu0 %v803
  %v805 = vpop.xlane.xlu0 %804
  %v806 = vsel %vm793, %v647, 0.0
  %807 = vadd.xlane.f32.xlu0 %v806
  %v808 = vpop.xlane.xlu0 %807
  %v809 = vrcp.pop 32.0
  %v810 = vmul.f32 32.0, %v809
  %v811 = vsub.f32 1.0, %v810
  %v812 = vmul.f32 %v809, %v811
  %v813 = vadd.f32 %v809, %v812
  %vm814 = vweird.f32 %v809
  %v815 = vsel %vm814, %v809, %v813
  %v816 = vmul.f32 %v796, %v815
  %v817 = vmul.f32 %v799, %v815
  %v818 = vmul.f32 %v802, %v815
  %v819 = vmul.f32 %v805, %v815
  %v820 = vmul.f32 %v808, %v815
  %v821 = vmul.f32 %v637, %v637
  %v822 = vmul.f32 %v639, %v639
  %v823 = vmul.f32 %v642, %v642
  %v824 = vmul.f32 %v644, %v644
  %v825 = vmul.f32 %v647, %v647
  %v826 = vsel %vm793, %v821, 0.0
  %827 = vadd.xlane.f32.xlu0 %v826
  %v828 = vpop.xlane.xlu0 %827
  %v829 = vsel %vm793, %v822, 0.0
  %830 = vadd.xlane.f32.xlu0 %v829
  %v831 = vpop.xlane.xlu0 %830
  %v832 = vsel %vm793, %v823, 0.0
  %833 = vadd.xlane.f32.xlu0 %v832
  %v834 = vpop.xlane.xlu0 %833
  %v835 = vsel %vm793, %v824, 0.0
  %836 = vadd.xlane.f32.xlu0 %v835
  %v837 = vpop.xlane.xlu0 %836
  %v838 = vsel %vm793, %v825, 0.0
  %839 = vadd.xlane.f32.xlu0 %v838
  %v840 = vpop.xlane.xlu0 %839
  %v841 = vmul.f32 %v828, %v815
  %v842 = vmul.f32 %v831, %v815
  %v843 = vmul.f32 %v834, %v815
  %v844 = vmul.f32 %v837, %v815
  %v845 = vmul.f32 %v840, %v815
  %v846 = vmul.f32 %v816, %v816
  %v847 = vmul.f32 %v817, %v817
  %v848 = vmul.f32 %v818, %v818
  %v849 = vmul.f32 %v819, %v819
  %v850 = vmul.f32 %v820, %v820
  %v851 = vsub.f32 %v841, %v846
  %v852 = vsub.f32 %v842, %v847
  %v853 = vsub.f32 %v843, %v848
  %v854 = vsub.f32 %v844, %v849
  %v855 = vsub.f32 %v845, %v850
  %v856 = vsub.f32 %v637, %v816
  %v857 = vsub.f32 %v639, %v817
  %v858 = vsub.f32 %v642, %v818
  %v859 = vsub.f32 %v644, %v819
  %v860 = vsub.f32 %v647, %v820
  %v861 = vadd.f32 %v851, 1e-06
  %v862 = vadd.f32 %v852, 1e-06
  %v863 = vadd.f32 %v853, 1e-06
  %v864 = vadd.f32 %v854, 1e-06
  %v865 = vadd.f32 %v855, 1e-06
  %v866 = vrsqrt.pop %v861
  %v867 = vmul.f32 %v866, %v861
  %v868 = vmul.f32 %v867, %v866
  %v869 = vmul.f32 0.5, %v868
  %v870 = vsub.f32 1.5, %v869
  %v871 = vmul.f32 %v866, %v870
  %vm872 = vweird.f32 %v861
  %vm873 = vweird.f32 %v866
  %vm874 = vmor %vm872, %vm873
  %v875 = vsel %vm874, %v866, %v871
  %v876 = vrsqrt.pop %v862
  %v877 = vmul.f32 %v876, %v862
  %v878 = vmul.f32 %v877, %v876
  %v879 = vmul.f32 0.5, %v878
  %v880 = vsub.f32 1.5, %v879
  %v881 = vmul.f32 %v876, %v880
  %vm882 = vweird.f32 %v862
  %vm883 = vweird.f32 %v876
  %vm884 = vmor %vm882, %vm883
  %v885 = vsel %vm884, %v876, %v881
  %v886 = vrsqrt.pop %v863
  %v887 = vmul.f32 %v886, %v863
  %v888 = vmul.f32 %v887, %v886
  %v889 = vmul.f32 0.5, %v888
  %v890 = vsub.f32 1.5, %v889
  %v891 = vmul.f32 %v886, %v890
  %vm892 = vweird.f32 %v863
  %vm893 = vweird.f32 %v886
  %vm894 = vmor %vm892, %vm893
  %v895 = vsel %vm894, %v886, %v891
  %v896 = vrsqrt.pop %v864
  %v897 = vmul.f32 %v896, %v864
  %v898 = vmul.f32 %v897, %v896
  %v899 = vmul.f32 0.5, %v898
  %v900 = vsub.f32 1.5, %v899
  %v901 = vmul.f32 %v896, %v900
  %vm902 = vweird.f32 %v864
  %vm903 = vweird.f32 %v896
  %vm904 = vmor %vm902, %vm903
  %v905 = vsel %vm904, %v896, %v901
  %v906 = vrsqrt.pop %v865
  %v907 = vmul.f32 %v906, %v865
  %v908 = vmul.f32 %v907, %v906
  %v909 = vmul.f32 0.5, %v908
  %v910 = vsub.f32 1.5, %v909
  %v911 = vmul.f32 %v906, %v910
  %vm912 = vweird.f32 %v865
  %vm913 = vweird.f32 %v906
  %vm914 = vmor %vm912, %vm913
  %v915 = vsel %vm914, %v906, %v911
  %v916 = vmul.f32 %v856, %v875
  %v917 = vmul.f32 %v857, %v885
  %v918 = vmul.f32 %v858, %v895
  %v919 = vmul.f32 %v859, %v905
  %v920 = vmul.f32 %v860, %v915
  %v921 = vperm.slane %v788, 0
  %v922 = vmul.f32 %v916, %v921
  %v923 = vmul.f32 %v917, %v921
  %v924 = vmul.f32 %v918, %v921
  %v925 = vmul.f32 %v919, %v921
  %v926 = vmul.f32 %v920, %v921
  %v927 = vperm.slane %v788, 1
  %v928 = vadd.f32 %v922, %v927
  %v929 = vadd.f32 %v923, %v927
  %v930 = vadd.f32 %v924, %v927
  %v931 = vadd.f32 %v925, %v927
  %v932 = vadd.f32 %v926, %v927
  %v933 = vpack.c.bf16 %v929, %v928
  %v934 = vpack.c.bf16 %v931, %v930
  %v935 = vpack.c.bf16 %v932, %v932
  %v936 = vperm.slane %v788, 2
  %v941 = vunpack.c.l.b16 %v789
  %v942 = vunpack.c.l.b16 %v790
  %v943 = vunpack.c.l.b16 %v791
  %v944 = vunpack.c.l.b16 %v792
  %v945 = vpack.c.b16 %v942, %v941
  %v946 = vpack.c.b16 %v944, %v943
  %v950 = vsel %vm793, %v933, 0
  %v953 = vsel %vm793, %v934, 0
  %v956 = vsel %vm793, %v935, 0
  %958 = vmatpush.bf16.msra.mxu0 0
  %959 = vmatpush.bf16.msra.mxu0 0
  %960 = vmatpush.bf16.msra.mxu0 0
  %961 = vmatpush.bf16.msra.mxu0 0
  %962 = vmatpush.bf16.msra.mxu0 0
  %963 = vmatpush.bf16.msra.mxu0 0
  %964 = vmatpush.bf16.msra.mxu0 %v946
  %965 = vmatpush.bf16.msra.mxu0 %v945
  %966 = vmatmul.bf16.gmra.mxu0 %v950
  %v967 = vpop.f32.mrf.mxu0
  %v968 = vadd.f32 %v936, %v967
  %v969 = vpop.f32.mrf.mxu0
  %v970 = vadd.f32 %v936, %v969
  %971 = vmatmul.bf16.gmra.mxu0 %v953
  %v972 = vpop.f32.mrf.mxu0
  %v973 = vadd.f32 %v936, %v972
  %v974 = vpop.f32.mrf.mxu0
  %v975 = vadd.f32 %v936, %v974
  %976 = vmatmul.bf16.gmra.mxu0 %v956
  %v977 = vpop.f32.mrf.mxu0
  %v978 = vadd.f32 %v936, %v977
  %v979 = vpop.f32.mrf.mxu0
  %980 = vdwg.mxu0
  %v981 = vpack.c.bf16 %v970, %v968
  %v982 = vpack.c.bf16 %v975, %v973
  %v983 = vpack.c.bf16 %v978, %v978
  %987 = vrot.lane.b32.xlu0 %v981, 96
  %v988 = vpop.permute.xlu0 %987
  %989 = vrot.lane.b32.xlu0 %v982, 96
  %v990 = vpop.permute.xlu0 %989
  %991 = vrot.lane.b32.xlu0 %v983, 96
  %v992 = vpop.permute.xlu0 %991
  %vm993 = vcmask 64512
  %v995 = vsel %vm993, %v981, 0
  %v998 = vsel %vm993, %v982, 0
  %v1001 = vsel %vm993, %v983, 0
  %v1004 = vsel %vm993, %v988, 0
  %v1007 = vsel %vm993, %v990, 0
  %v1010 = vsel %vm993, %v992, 0
  %1012 = vmatpush.bf16.xpose.msra.mxu0 0
  %1013 = vmatpush.bf16.xpose.msra.mxu0 0
  %1014 = vmatpush.bf16.xpose.msra.mxu0 0
  %1015 = vmatpush.bf16.xpose.msra.mxu0 0
  %1016 = vmatpush.bf16.xpose.msra.mxu0 0
  %1017 = vmatpush.bf16.xpose.msra.mxu0 %v1010
  %1018 = vmatpush.bf16.xpose.msra.mxu0 %v1007
  %1019 = vmatpush.bf16.xpose.msra.mxu0 %v1004
  %1020 = vmatmul.bf16.gmra.mxu0 %v995
  %v1021 = vpop.f32.mrf.mxu0
  %v1022 = vadd.f32 %v783, %v1021
  %v1023 = vpop.f32.mrf.mxu0
  %v1024 = vadd.f32 %v784, %v1023
  %1025 = vmatmul.bf16.gmra.mxu0 %v998
  %v1026 = vpop.f32.mrf.mxu0
  %v1027 = vadd.f32 %v785, %v1026
  %v1028 = vpop.f32.mrf.mxu0
  %v1029 = vadd.f32 %v786, %v1028
  %1030 = vmatmul.bf16.gmra.mxu0 %v1001
  %v1031 = vpop.f32.mrf.mxu0
  %v1032 = vadd.f32 %v787, %v1031
  %v1033 = vpop.f32.mrf.mxu0
  %1034 = vdwg.mxu0
  %vm1035 = vcmask 326656
  %v1036 = vsel %vm1035, %v1022, -inf
  %1037 = vmax.xlane.f32.xlu0 %v1036
  %v1038 = vpop.xlane.xlu0 %1037
  %v1039 = vsel %vm1035, %v1024, -inf
  %1040 = vmax.xlane.f32.xlu0 %v1039
  %v1041 = vpop.xlane.xlu0 %1040
  %v1042 = vsel %vm1035, %v1027, -inf
  %1043 = vmax.xlane.f32.xlu0 %v1042
  %v1044 = vpop.xlane.xlu0 %1043
  %v1045 = vsel %vm1035, %v1029, -inf
  %1046 = vmax.xlane.f32.xlu0 %v1045
  %v1047 = vpop.xlane.xlu0 %1046
  %v1048 = vsel %vm1035, %v1032, -inf
  %1049 = vmax.xlane.f32.xlu0 %v1048
  %v1050 = vpop.xlane.xlu0 %1049
  %v1051 = vsub.f32 %v1022, %v1038
  %v1052 = vsub.f32 %v1024, %v1041
  %v1053 = vsub.f32 %v1027, %v1044
  %v1054 = vsub.f32 %v1029, %v1047
  %v1055 = vsub.f32 %v1032, %v1050
  %v1056 = vmul.f32 %v1051, 1.442695
  %v1057 = vpow.pop %v1056
  %v1058 = vmul.f32 %v1052, 1.442695
  %v1059 = vpow.pop %v1058
  %v1060 = vmul.f32 %v1053, 1.442695
  %v1061 = vpow.pop %v1060
  %v1062 = vmul.f32 %v1054, 1.442695
  %v1063 = vpow.pop %v1062
  %v1064 = vmul.f32 %v1055, 1.442695
  %v1065 = vpow.pop %v1064
  %v1066 = vsel %vm1035, %v1057, 0.0
  %1067 = vadd.xlane.f32.xlu0 %v1066
  %v1068 = vpop.xlane.xlu0 %1067
  %v1069 = vsel %vm1035, %v1059, 0.0
  %1070 = vadd.xlane.f32.xlu0 %v1069
  %v1071 = vpop.xlane.xlu0 %1070
  %v1072 = vsel %vm1035, %v1061, 0.0
  %1073 = vadd.xlane.f32.xlu0 %v1072
  %v1074 = vpop.xlane.xlu0 %1073
  %v1075 = vsel %vm1035, %v1063, 0.0
  %1076 = vadd.xlane.f32.xlu0 %v1075
  %v1077 = vpop.xlane.xlu0 %1076
  %v1078 = vsel %vm1035, %v1065, 0.0
  %1079 = vadd.xlane.f32.xlu0 %v1078
  %v1080 = vpop.xlane.xlu0 %1079
  %v1081 = vrcp.pop %v1068
  %v1082 = vrcp.pop %v1071
  %v1083 = vrcp.pop %v1074
  %v1084 = vrcp.pop %v1077
  %v1085 = vrcp.pop %v1080
  %v1086 = vmul.f32 %v1057, %v1081
  %v1087 = vmul.f32 %v1059, %v1082
  %v1088 = vmul.f32 %v1061, %v1083
  %v1089 = vmul.f32 %v1063, %v1084
  %v1090 = vmul.f32 %v1065, %v1085
  %v1091 = vpack.c.bf16 %v1087, %v1086
  %v1092 = vpack.c.bf16 %v1089, %v1088
  %v1093 = vpack.c.bf16 %v1090, %v1090
  %1094 = vrot.lane.b32.xlu0 %v981, 64
  %v1095 = vpop.permute.xlu0 %1094
  %1096 = vrot.lane.b32.xlu0 %v982, 64
  %v1097 = vpop.permute.xlu0 %1096
  %1098 = vrot.lane.b32.xlu0 %v983, 64
  %v1099 = vpop.permute.xlu0 %1098
  %v1103 = vsel %vm1035, %v1091, 0
  %v1106 = vsel %vm1035, %v1092, 0
  %v1109 = vsel %vm1035, %v1093, 0
  %vm1111 = vcmask 1043456
  %v1113 = vsel %vm1111, %v1099, 0
  %1115 = vmatpush.bf16.msra.mxu0 0
  %1116 = vmatpush.bf16.msra.mxu0 0
  %1117 = vmatpush.bf16.msra.mxu0 0
  %1118 = vmatpush.bf16.msra.mxu0 0
  %1119 = vmatpush.bf16.msra.mxu0 0
  %1120 = vmatpush.bf16.msra.mxu0 %v1113
  %1121 = vmatpush.bf16.msra.mxu0 %v1097
  %1122 = vmatpush.bf16.msra.mxu0 %v1095
  %1123 = vmatmul.bf16.gmra.mxu0 %v1103
  %v1124 = vpop.f32.mrf.mxu0
  %v1125 = vadd.f32 0.0, %v1124
  %v1126 = vpop.f32.mrf.mxu0
  %v1127 = vadd.f32 0.0, %v1126
  %1128 = vmatmul.bf16.gmra.mxu0 %v1106
  %v1129 = vpop.f32.mrf.mxu0
  %v1130 = vadd.f32 0.0, %v1129
  %v1131 = vpop.f32.mrf.mxu0
  %v1132 = vadd.f32 0.0, %v1131
  %1133 = vmatmul.bf16.gmra.mxu0 %v1109
  %v1134 = vpop.f32.mrf.mxu0
  %v1135 = vadd.f32 0.0, %v1134
  %v1136 = vpop.f32.mrf.mxu0
  %1137 = vdwg.mxu0
  %1138 = vrot.lane.b32.xlu0 %v981, 120
  %v1139 = vpop.permute.xlu0 %1138
  %1140 = vrot.lane.b32.xlu0 %v982, 120
  %v1141 = vpop.permute.xlu0 %1140
  %1142 = vrot.lane.b32.xlu0 %v983, 120
  %v1143 = vpop.permute.xlu0 %1142
  %1144 = vrot.lane.b32.xlu0 %v981, 88
  %v1145 = vpop.permute.xlu0 %1144
  %1146 = vrot.lane.b32.xlu0 %v982, 88
  %v1147 = vpop.permute.xlu0 %1146
  %1148 = vrot.lane.b32.xlu0 %v983, 88
  %v1149 = vpop.permute.xlu0 %1148
  %v1151 = vsel %vm993, %v1139, 0
  %v1154 = vsel %vm993, %v1141, 0
  %v1157 = vsel %vm993, %v1143, 0
  %v1160 = vsel %vm993, %v1145, 0
  %v1163 = vsel %vm993, %v1147, 0
  %v1166 = vsel %vm993, %v1149, 0
  %1168 = vmatpush.bf16.xpose.msra.mxu0 0
  %1169 = vmatpush.bf16.xpose.msra.mxu0 0
  %1170 = vmatpush.bf16.xpose.msra.mxu0 0
  %1171 = vmatpush.bf16.xpose.msra.mxu0 0
  %1172 = vmatpush.bf16.xpose.msra.mxu0 0
  %1173 = vmatpush.bf16.xpose.msra.mxu0 %v1166
  %1174 = vmatpush.bf16.xpose.msra.mxu0 %v1163
  %1175 = vmatpush.bf16.xpose.msra.mxu0 %v1160
  %1176 = vmatmul.bf16.gmra.mxu0 %v1151
  %v1177 = vpop.f32.mrf.mxu0
  %v1178 = vadd.f32 %v783, %v1177
  %v1179 = vpop.f32.mrf.mxu0
  %v1180 = vadd.f32 %v784, %v1179
  %1181 = vmatmul.bf16.gmra.mxu0 %v1154
  %v1182 = vpop.f32.mrf.mxu0
  %v1183 = vadd.f32 %v785, %v1182
  %v1184 = vpop.f32.mrf.mxu0
  %v1185 = vadd.f32 %v786, %v1184
  %1186 = vmatmul.bf16.gmra.mxu0 %v1157
  %v1187 = vpop.f32.mrf.mxu0
  %v1188 = vadd.f32 %v787, %v1187
  %v1189 = vpop.f32.mrf.mxu0
  %1190 = vdwg.mxu0
  %v1191 = vsel %vm1035, %v1178, -inf
  %1192 = vmax.xlane.f32.xlu0 %v1191
  %v1193 = vpop.xlane.xlu0 %1192
  %v1194 = vsel %vm1035, %v1180, -inf
  %1195 = vmax.xlane.f32.xlu0 %v1194
  %v1196 = vpop.xlane.xlu0 %1195
  %v1197 = vsel %vm1035, %v1183, -inf
  %1198 = vmax.xlane.f32.xlu0 %v1197
  %v1199 = vpop.xlane.xlu0 %1198
  %v1200 = vsel %vm1035, %v1185, -inf
  %1201 = vmax.xlane.f32.xlu0 %v1200
  %v1202 = vpop.xlane.xlu0 %1201
  %v1203 = vsel %vm1035, %v1188, -inf
  %1204 = vmax.xlane.f32.xlu0 %v1203
  %v1205 = vpop.xlane.xlu0 %1204
  %v1206 = vsub.f32 %v1178, %v1193
  %v1207 = vsub.f32 %v1180, %v1196
  %v1208 = vsub.f32 %v1183, %v1199
  %v1209 = vsub.f32 %v1185, %v1202
  %v1210 = vsub.f32 %v1188, %v1205
  %v1211 = vmul.f32 %v1206, 1.442695
  %v1212 = vpow.pop %v1211
  %v1213 = vmul.f32 %v1207, 1.442695
  %v1214 = vpow.pop %v1213
  %v1215 = vmul.f32 %v1208, 1.442695
  %v1216 = vpow.pop %v1215
  %v1217 = vmul.f32 %v1209, 1.442695
  %v1218 = vpow.pop %v1217
  %v1219 = vmul.f32 %v1210, 1.442695
  %v1220 = vpow.pop %v1219
  %v1221 = vsel %vm1035, %v1212, 0.0
  %1222 = vadd.xlane.f32.xlu0 %v1221
  %v1223 = vpop.xlane.xlu0 %1222
  %v1224 = vsel %vm1035, %v1214, 0.0
  %1225 = vadd.xlane.f32.xlu0 %v1224
  %v1226 = vpop.xlane.xlu0 %1225
  %v1227 = vsel %vm1035, %v1216, 0.0
  %1228 = vadd.xlane.f32.xlu0 %v1227
  %v1229 = vpop.xlane.xlu0 %1228
  %v1230 = vsel %vm1035, %v1218, 0.0
  %1231 = vadd.xlane.f32.xlu0 %v1230
  %v1232 = vpop.xlane.xlu0 %1231
  %v1233 = vsel %vm1035, %v1220, 0.0
  %1234 = vadd.xlane.f32.xlu0 %v1233
  %v1235 = vpop.xlane.xlu0 %1234
  %v1236 = vrcp.pop %v1223
  %v1237 = vrcp.pop %v1226
  %v1238 = vrcp.pop %v1229
  %v1239 = vrcp.pop %v1232
  %v1240 = vrcp.pop %v1235
  %v1241 = vmul.f32 %v1212, %v1236
  %v1242 = vmul.f32 %v1214, %v1237
  %v1243 = vmul.f32 %v1216, %v1238
  %v1244 = vmul.f32 %v1218, %v1239
  %v1245 = vmul.f32 %v1220, %v1240
  %v1246 = vpack.c.bf16 %v1242, %v1241
  %v1247 = vpack.c.bf16 %v1244, %v1243
  %v1248 = vpack.c.bf16 %v1245, %v1245
  %1249 = vrot.lane.b32.xlu0 %v981, 56
  %v1250 = vpop.permute.xlu0 %1249
  %1251 = vrot.lane.b32.xlu0 %v982, 56
  %v1252 = vpop.permute.xlu0 %1251
  %1253 = vrot.lane.b32.xlu0 %v983, 56
  %v1254 = vpop.permute.xlu0 %1253
  %v1258 = vsel %vm1035, %v1246, 0
  %v1261 = vsel %vm1035, %v1247, 0
  %v1264 = vsel %vm1035, %v1248, 0
  %v1267 = vsel %vm1111, %v1254, 0
  %1269 = vmatpush.bf16.msra.mxu0 0
  %1270 = vmatpush.bf16.msra.mxu0 0
  %1271 = vmatpush.bf16.msra.mxu0 0
  %1272 = vmatpush.bf16.msra.mxu0 0
  %1273 = vmatpush.bf16.msra.mxu0 0
  %1274 = vmatpush.bf16.msra.mxu0 %v1267
  %1275 = vmatpush.bf16.msra.mxu0 %v1252
  %1276 = vmatpush.bf16.msra.mxu0 %v1250
  %1277 = vmatmul.bf16.gmra.mxu0 %v1258
  %v1278 = vpop.f32.mrf.mxu0
  %v1279 = vadd.f32 0.0, %v1278
  %v1280 = vpop.f32.mrf.mxu0
  %v1281 = vadd.f32 0.0, %v1280
  %1282 = vmatmul.bf16.gmra.mxu0 %v1261
  %v1283 = vpop.f32.mrf.mxu0
  %v1284 = vadd.f32 0.0, %v1283
  %v1285 = vpop.f32.mrf.mxu0
  %v1286 = vadd.f32 0.0, %v1285
  %1287 = vmatmul.bf16.gmra.mxu0 %v1264
  %v1288 = vpop.f32.mrf.mxu0
  %v1289 = vadd.f32 0.0, %v1288
  %v1290 = vpop.f32.mrf.mxu0
  %1291 = vdwg.mxu0
  %1292 = vrot.lane.b32.xlu0 %v981, 112
  %v1293 = vpop.permute.xlu0 %1292
  %1294 = vrot.lane.b32.xlu0 %v982, 112
  %v1295 = vpop.permute.xlu0 %1294
  %1296 = vrot.lane.b32.xlu0 %v983, 112
  %v1297 = vpop.permute.xlu0 %1296
  %1298 = vrot.lane.b32.xlu0 %v981, 80
  %v1299 = vpop.permute.xlu0 %1298
  %1300 = vrot.lane.b32.xlu0 %v982, 80
  %v1301 = vpop.permute.xlu0 %1300
  %1302 = vrot.lane.b32.xlu0 %v983, 80
  %v1303 = vpop.permute.xlu0 %1302
  %v1305 = vsel %vm993, %v1293, 0
  %v1308 = vsel %vm993, %v1295, 0
  %v1311 = vsel %vm993, %v1297, 0
  %v1314 = vsel %vm993, %v1299, 0
  %v1317 = vsel %vm993, %v1301, 0
  %v1320 = vsel %vm993, %v1303, 0
  %1322 = vmatpush.bf16.xpose.msra.mxu0 0
  %1323 = vmatpush.bf16.xpose.msra.mxu0 0
  %1324 = vmatpush.bf16.xpose.msra.mxu0 0
  %1325 = vmatpush.bf16.xpose.msra.mxu0 0
  %1326 = vmatpush.bf16.xpose.msra.mxu0 0
  %1327 = vmatpush.bf16.xpose.msra.mxu0 %v1320
  %1328 = vmatpush.bf16.xpose.msra.mxu0 %v1317
  %1329 = vmatpush.bf16.xpose.msra.mxu0 %v1314
  %1330 = vmatmul.bf16.gmra.mxu0 %v1305
  %v1331 = vpop.f32.mrf.mxu0
  %v1332 = vadd.f32 %v783, %v1331
  %v1333 = vpop.f32.mrf.mxu0
  %v1334 = vadd.f32 %v784, %v1333
  %1335 = vmatmul.bf16.gmra.mxu0 %v1308
  %v1336 = vpop.f32.mrf.mxu0
  %v1337 = vadd.f32 %v785, %v1336
  %v1338 = vpop.f32.mrf.mxu0
  %v1339 = vadd.f32 %v786, %v1338
  %1340 = vmatmul.bf16.gmra.mxu0 %v1311
  %v1341 = vpop.f32.mrf.mxu0
  %v1342 = vadd.f32 %v787, %v1341
  %v1343 = vpop.f32.mrf.mxu0
  %1344 = vdwg.mxu0
  %v1345 = vsel %vm1035, %v1332, -inf
  %1346 = vmax.xlane.f32.xlu0 %v1345
  %v1347 = vpop.xlane.xlu0 %1346
  %v1348 = vsel %vm1035, %v1334, -inf
  %1349 = vmax.xlane.f32.xlu0 %v1348
  %v1350 = vpop.xlane.xlu0 %1349
  %v1351 = vsel %vm1035, %v1337, -inf
  %1352 = vmax.xlane.f32.xlu0 %v1351
  %v1353 = vpop.xlane.xlu0 %1352
  %v1354 = vsel %vm1035, %v1339, -inf
  %1355 = vmax.xlane.f32.xlu0 %v1354
  %v1356 = vpop.xlane.xlu0 %1355
  %v1357 = vsel %vm1035, %v1342, -inf
  %1358 = vmax.xlane.f32.xlu0 %v1357
  %v1359 = vpop.xlane.xlu0 %1358
  %v1360 = vsub.f32 %v1332, %v1347
  %v1361 = vsub.f32 %v1334, %v1350
  %v1362 = vsub.f32 %v1337, %v1353
  %v1363 = vsub.f32 %v1339, %v1356
  %v1364 = vsub.f32 %v1342, %v1359
  %v1365 = vmul.f32 %v1360, 1.442695
  %v1366 = vpow.pop %v1365
  %v1367 = vmul.f32 %v1361, 1.442695
  %v1368 = vpow.pop %v1367
  %v1369 = vmul.f32 %v1362, 1.442695
  %v1370 = vpow.pop %v1369
  %v1371 = vmul.f32 %v1363, 1.442695
  %v1372 = vpow.pop %v1371
  %v1373 = vmul.f32 %v1364, 1.442695
  %v1374 = vpow.pop %v1373
  %v1375 = vsel %vm1035, %v1366, 0.0
  %1376 = vadd.xlane.f32.xlu0 %v1375
  %v1377 = vpop.xlane.xlu0 %1376
  %v1378 = vsel %vm1035, %v1368, 0.0
  %1379 = vadd.xlane.f32.xlu0 %v1378
  %v1380 = vpop.xlane.xlu0 %1379
  %v1381 = vsel %vm1035, %v1370, 0.0
  %1382 = vadd.xlane.f32.xlu0 %v1381
  %v1383 = vpop.xlane.xlu0 %1382
  %v1384 = vsel %vm1035, %v1372, 0.0
  %1385 = vadd.xlane.f32.xlu0 %v1384
  %v1386 = vpop.xlane.xlu0 %1385
  %v1387 = vsel %vm1035, %v1374, 0.0
  %1388 = vadd.xlane.f32.xlu0 %v1387
  %v1389 = vpop.xlane.xlu0 %1388
  %v1390 = vrcp.pop %v1377
  %v1391 = vrcp.pop %v1380
  %v1392 = vrcp.pop %v1383
  %v1393 = vrcp.pop %v1386
  %v1394 = vrcp.pop %v1389
  %v1395 = vmul.f32 %v1366, %v1390
  %v1396 = vmul.f32 %v1368, %v1391
  %v1397 = vmul.f32 %v1370, %v1392
  %v1398 = vmul.f32 %v1372, %v1393
  %v1399 = vmul.f32 %v1374, %v1394
  %v1400 = vpack.c.bf16 %v1396, %v1395
  %v1401 = vpack.c.bf16 %v1398, %v1397
  %v1402 = vpack.c.bf16 %v1399, %v1399
  %1403 = vrot.lane.b32.xlu0 %v981, 48
  %v1404 = vpop.permute.xlu0 %1403
  %1405 = vrot.lane.b32.xlu0 %v982, 48
  %v1406 = vpop.permute.xlu0 %1405
  %1407 = vrot.lane.b32.xlu0 %v983, 48
  %v1408 = vpop.permute.xlu0 %1407
  %v1412 = vsel %vm1035, %v1400, 0
  %v1415 = vsel %vm1035, %v1401, 0
  %v1418 = vsel %vm1035, %v1402, 0
  %v1421 = vsel %vm1111, %v1408, 0
  %1423 = vmatpush.bf16.msra.mxu0 0
  %1424 = vmatpush.bf16.msra.mxu0 0
  %1425 = vmatpush.bf16.msra.mxu0 0
  %1426 = vmatpush.bf16.msra.mxu0 0
  %1427 = vmatpush.bf16.msra.mxu0 0
  %1428 = vmatpush.bf16.msra.mxu0 %v1421
  %1429 = vmatpush.bf16.msra.mxu0 %v1406
  %1430 = vmatpush.bf16.msra.mxu0 %v1404
  %1431 = vmatmul.bf16.gmra.mxu0 %v1412
  %v1432 = vpop.f32.mrf.mxu0
  %v1433 = vadd.f32 0.0, %v1432
  %v1434 = vpop.f32.mrf.mxu0
  %v1435 = vadd.f32 0.0, %v1434
  %1436 = vmatmul.bf16.gmra.mxu0 %v1415
  %v1437 = vpop.f32.mrf.mxu0
  %v1438 = vadd.f32 0.0, %v1437
  %v1439 = vpop.f32.mrf.mxu0
  %v1440 = vadd.f32 0.0, %v1439
  %1441 = vmatmul.bf16.gmra.mxu0 %v1418
  %v1442 = vpop.f32.mrf.mxu0
  %v1443 = vadd.f32 0.0, %v1442
  %v1444 = vpop.f32.mrf.mxu0
  %1445 = vdwg.mxu0
  %1446 = vrot.lane.b32.xlu0 %v981, 104
  %v1447 = vpop.permute.xlu0 %1446
  %1448 = vrot.lane.b32.xlu0 %v982, 104
  %v1449 = vpop.permute.xlu0 %1448
  %1450 = vrot.lane.b32.xlu0 %v983, 104
  %v1451 = vpop.permute.xlu0 %1450
  %1452 = vrot.lane.b32.xlu0 %v981, 72
  %v1453 = vpop.permute.xlu0 %1452
  %1454 = vrot.lane.b32.xlu0 %v982, 72
  %v1455 = vpop.permute.xlu0 %1454
  %1456 = vrot.lane.b32.xlu0 %v983, 72
  %v1457 = vpop.permute.xlu0 %1456
  %v1459 = vsel %vm993, %v1447, 0
  %v1462 = vsel %vm993, %v1449, 0
  %v1465 = vsel %vm993, %v1451, 0
  %v1468 = vsel %vm993, %v1453, 0
  %v1471 = vsel %vm993, %v1455, 0
  %v1474 = vsel %vm993, %v1457, 0
  %1476 = vmatpush.bf16.xpose.msra.mxu0 0
  %1477 = vmatpush.bf16.xpose.msra.mxu0 0
  %1478 = vmatpush.bf16.xpose.msra.mxu0 0
  %1479 = vmatpush.bf16.xpose.msra.mxu0 0
  %1480 = vmatpush.bf16.xpose.msra.mxu0 0
  %1481 = vmatpush.bf16.xpose.msra.mxu0 %v1474
  %1482 = vmatpush.bf16.xpose.msra.mxu0 %v1471
  %1483 = vmatpush.bf16.xpose.msra.mxu0 %v1468
  %1484 = vmatmul.bf16.gmra.mxu0 %v1459
  %v1485 = vpop.f32.mrf.mxu0
  %v1486 = vadd.f32 %v783, %v1485
  %v1487 = vpop.f32.mrf.mxu0
  %v1488 = vadd.f32 %v784, %v1487
  %1489 = vmatmul.bf16.gmra.mxu0 %v1462
  %v1490 = vpop.f32.mrf.mxu0
  %v1491 = vadd.f32 %v785, %v1490
  %v1492 = vpop.f32.mrf.mxu0
  %v1493 = vadd.f32 %v786, %v1492
  %1494 = vmatmul.bf16.gmra.mxu0 %v1465
  %v1495 = vpop.f32.mrf.mxu0
  %v1496 = vadd.f32 %v787, %v1495
  %v1497 = vpop.f32.mrf.mxu0
  %1498 = vdwg.mxu0
  %v1499 = vsel %vm1035, %v1486, -inf
  %1500 = vmax.xlane.f32.xlu0 %v1499
  %v1501 = vpop.xlane.xlu0 %1500
  %v1502 = vsel %vm1035, %v1488, -inf
  %1503 = vmax.xlane.f32.xlu0 %v1502
  %v1504 = vpop.xlane.xlu0 %1503
  %v1505 = vsel %vm1035, %v1491, -inf
  %1506 = vmax.xlane.f32.xlu0 %v1505
  %v1507 = vpop.xlane.xlu0 %1506
  %v1508 = vsel %vm1035, %v1493, -inf
  %1509 = vmax.xlane.f32.xlu0 %v1508
  %v1510 = vpop.xlane.xlu0 %1509
  %v1511 = vsel %vm1035, %v1496, -inf
  %1512 = vmax.xlane.f32.xlu0 %v1511
  %v1513 = vpop.xlane.xlu0 %1512
  %v1514 = vsub.f32 %v1486, %v1501
  %v1515 = vsub.f32 %v1488, %v1504
  %v1516 = vsub.f32 %v1491, %v1507
  %v1517 = vsub.f32 %v1493, %v1510
  %v1518 = vsub.f32 %v1496, %v1513
  %v1519 = vmul.f32 %v1514, 1.442695
  %v1520 = vpow.pop %v1519
  %v1521 = vmul.f32 %v1515, 1.442695
  %v1522 = vpow.pop %v1521
  %v1523 = vmul.f32 %v1516, 1.442695
  %v1524 = vpow.pop %v1523
  %v1525 = vmul.f32 %v1517, 1.442695
  %v1526 = vpow.pop %v1525
  %v1527 = vmul.f32 %v1518, 1.442695
  %v1528 = vpow.pop %v1527
  %v1529 = vsel %vm1035, %v1520, 0.0
  %1530 = vadd.xlane.f32.xlu0 %v1529
  %v1531 = vpop.xlane.xlu0 %1530
  %v1532 = vsel %vm1035, %v1522, 0.0
  %1533 = vadd.xlane.f32.xlu0 %v1532
  %v1534 = vpop.xlane.xlu0 %1533
  %v1535 = vsel %vm1035, %v1524, 0.0
  %1536 = vadd.xlane.f32.xlu0 %v1535
  %v1537 = vpop.xlane.xlu0 %1536
  %v1538 = vsel %vm1035, %v1526, 0.0
  %1539 = vadd.xlane.f32.xlu0 %v1538
  %v1540 = vpop.xlane.xlu0 %1539
  %v1541 = vsel %vm1035, %v1528, 0.0
  %1542 = vadd.xlane.f32.xlu0 %v1541
  %v1543 = vpop.xlane.xlu0 %1542
  %v1544 = vrcp.pop %v1531
  %v1545 = vrcp.pop %v1534
  %v1546 = vrcp.pop %v1537
  %v1547 = vrcp.pop %v1540
  %v1548 = vrcp.pop %v1543
  %v1549 = vmul.f32 %v1520, %v1544
  %v1550 = vmul.f32 %v1522, %v1545
  %v1551 = vmul.f32 %v1524, %v1546
  %v1552 = vmul.f32 %v1526, %v1547
  %v1553 = vmul.f32 %v1528, %v1548
  %v1554 = vpack.c.bf16 %v1550, %v1549
  %v1555 = vpack.c.bf16 %v1552, %v1551
  %v1556 = vpack.c.bf16 %v1553, %v1553
  %1557 = vrot.lane.b32.xlu0 %v981, 40
  %v1558 = vpop.permute.xlu0 %1557
  %1559 = vrot.lane.b32.xlu0 %v982, 40
  %v1560 = vpop.permute.xlu0 %1559
  %1561 = vrot.lane.b32.xlu0 %v983, 40
  %v1562 = vpop.permute.xlu0 %1561
  %v1566 = vsel %vm1035, %v1554, 0
  %v1569 = vsel %vm1035, %v1555, 0
  %v1572 = vsel %vm1035, %v1556, 0
  %v1575 = vsel %vm1111, %v1562, 0
  %1577 = vmatpush.bf16.msra.mxu0 0
  %1578 = vmatpush.bf16.msra.mxu0 0
  %1579 = vmatpush.bf16.msra.mxu0 0
  %1580 = vmatpush.bf16.msra.mxu0 0
  %1581 = vmatpush.bf16.msra.mxu0 0
  %1582 = vmatpush.bf16.msra.mxu0 %v1575
  %1583 = vmatpush.bf16.msra.mxu0 %v1560
  %1584 = vmatpush.bf16.msra.mxu0 %v1558
  %1585 = vmatmul.bf16.gmra.mxu0 %v1566
  %v1586 = vpop.f32.mrf.mxu0
  %v1587 = vadd.f32 0.0, %v1586
  %v1588 = vpop.f32.mrf.mxu0
  %v1589 = vadd.f32 0.0, %v1588
  %1590 = vmatmul.bf16.gmra.mxu0 %v1569
  %v1591 = vpop.f32.mrf.mxu0
  %v1592 = vadd.f32 0.0, %v1591
  %v1593 = vpop.f32.mrf.mxu0
  %v1594 = vadd.f32 0.0, %v1593
  %1595 = vmatmul.bf16.gmra.mxu0 %v1572
  %v1596 = vpop.f32.mrf.mxu0
  %v1597 = vadd.f32 0.0, %v1596
  %v1598 = vpop.f32.mrf.mxu0
  %1599 = vdwg.mxu0
  %1605 = vrot.lane.b32.xlu0 %v1279, 8
  %v1606 = vpop.permute.xlu0 %1605
  %1607 = vrot.lane.b32.xlu0 %v1281, 8
  %v1608 = vpop.permute.xlu0 %1607
  %1609 = vrot.lane.b32.xlu0 %v1284, 8
  %v1610 = vpop.permute.xlu0 %1609
  %1611 = vrot.lane.b32.xlu0 %v1286, 8
  %v1612 = vpop.permute.xlu0 %1611
  %1613 = vrot.lane.b32.xlu0 %v1289, 8
  %v1614 = vpop.permute.xlu0 %1613
  %1625 = vrot.lane.b32.xlu0 %v1433, 16
  %v1626 = vpop.permute.xlu0 %1625
  %1627 = vrot.lane.b32.xlu0 %v1435, 16
  %v1628 = vpop.permute.xlu0 %1627
  %1629 = vrot.lane.b32.xlu0 %v1438, 16
  %v1630 = vpop.permute.xlu0 %1629
  %1631 = vrot.lane.b32.xlu0 %v1440, 16
  %v1632 = vpop.permute.xlu0 %1631
  %1633 = vrot.lane.b32.xlu0 %v1443, 16
  %v1634 = vpop.permute.xlu0 %1633
  %1645 = vrot.lane.b32.xlu0 %v1587, 24
  %v1646 = vpop.permute.xlu0 %1645
  %1647 = vrot.lane.b32.xlu0 %v1589, 24
  %v1648 = vpop.permute.xlu0 %1647
  %1649 = vrot.lane.b32.xlu0 %v1592, 24
  %v1650 = vpop.permute.xlu0 %1649
  %1651 = vrot.lane.b32.xlu0 %v1594, 24
  %v1652 = vpop.permute.xlu0 %1651
  %1653 = vrot.lane.b32.xlu0 %v1597, 24
  %v1654 = vpop.permute.xlu0 %1653
  %v1660 = vsel %vm993, %v1125, %v1606
  %v1661 = vsel %vm993, %v1127, %v1608
  %v1662 = vsel %vm993, %v1130, %v1610
  %v1663 = vsel %vm993, %v1132, %v1612
  %v1664 = vsel %vm993, %v1135, %v1614
  %vm1665 = vcmask 130048
  %v1666 = vsel %vm1665, %v1660, %v1626
  %v1667 = vsel %vm1665, %v1661, %v1628
  %v1668 = vsel %vm1665, %v1662, %v1630
  %v1669 = vsel %vm1665, %v1663, %v1632
  %v1670 = vsel %vm1665, %v1664, %v1634
  %vm1671 = vcmask 195584
  %v1672 = vsel %vm1671, %v1666, %v1646
  %v1673 = vsel %vm1671, %v1667, %v1648
  %v1674 = vsel %vm1671, %v1668, %v1650
  %v1675 = vsel %vm1671, %v1669, %v1652
  %v1676 = vsel %vm1671, %v1670, %v1654
  %v1677 = vpack.c.bf16 %v1673, %v1672
  %v1678 = vpack.c.bf16 %v1675, %v1674
  %v1679 = vpack.c.bf16 %v1676, %v1676
  %1680 = vrot.lane.b32.xlu0 %v945, 32
  %v1681 = vpop.permute.xlu0 %1680
  %1682 = vrot.lane.b32.xlu0 %v946, 32
  %v1683 = vpop.permute.xlu0 %1682
  %v1687 = vsel %vm793, %v1677, 0
  %v1690 = vsel %vm793, %v1678, 0
  %v1693 = vsel %vm793, %v1679, 0
  %1695 = vmatpush.bf16.msra.mxu0 0
  %1696 = vmatpush.bf16.msra.mxu0 0
  %1697 = vmatpush.bf16.msra.mxu0 0
  %1698 = vmatpush.bf16.msra.mxu0 0
  %1699 = vmatpush.bf16.msra.mxu0 0
  %1700 = vmatpush.bf16.msra.mxu0 0
  %1701 = vmatpush.bf16.msra.mxu0 %v1683
  %1702 = vmatpush.bf16.msra.mxu0 %v1681
  %1703 = vmatmul.bf16.gmra.mxu0 %v1687
  %v1704 = vpop.f32.mrf.mxu0
  %v1705 = vadd.f32 0.0, %v1704
  %v1706 = vpop.f32.mrf.mxu0
  %v1707 = vadd.f32 0.0, %v1706
  %1708 = vmatmul.bf16.gmra.mxu0 %v1690
  %v1709 = vpop.f32.mrf.mxu0
  %v1710 = vadd.f32 0.0, %v1709
  %v1711 = vpop.f32.mrf.mxu0
  %v1712 = vadd.f32 0.0, %v1711
  %1713 = vmatmul.bf16.gmra.mxu0 %v1693
  %v1714 = vpop.f32.mrf.mxu0
  %v1715 = vadd.f32 0.0, %v1714
  %v1716 = vpop.f32.mrf.mxu0
  %1717 = vdwg.mxu0
  %v1718 = vadd.f32 %v637, %v1705
  %v1719 = vadd.f32 %v639, %v1707
  %v1720 = vadd.f32 %v642, %v1710
  %v1721 = vadd.f32 %v644, %v1712
  %v1722 = vadd.f32 %v647, %v1715
  %v1723 = vperm.slane %v788, 3
  %v1724 = vadd.f32 %v1718, %v1723
  %v1725 = vadd.f32 %v1719, %v1723
  %v1726 = vadd.f32 %v1720, %v1723
  %v1727 = vadd.f32 %v1721, %v1723
  %v1728 = vadd.f32 %v1722, %v1723
  %v1729 = vsel %vm793, %v1724, 0.0
  %1730 = vadd.xlane.f32.xlu0 %v1729
  %v1731 = vpop.xlane.xlu0 %1730
  %v1732 = vsel %vm793, %v1725, 0.0
  %1733 = vadd.xlane.f32.xlu0 %v1732
  %v1734 = vpop.xlane.xlu0 %1733
  %v1735 = vsel %vm793, %v1726, 0.0
  %1736 = vadd.xlane.f32.xlu0 %v1735
  %v1737 = vpop.xlane.xlu0 %1736
  %v1738 = vsel %vm793, %v1727, 0.0
  %1739 = vadd.xlane.f32.xlu0 %v1738
  %v1740 = vpop.xlane.xlu0 %1739
  %v1741 = vsel %vm793, %v1728, 0.0
  %1742 = vadd.xlane.f32.xlu0 %v1741
  %v1743 = vpop.xlane.xlu0 %1742
  %v1744 = vmul.f32 %v1731, %v815
  %v1745 = vmul.f32 %v1734, %v815
  %v1746 = vmul.f32 %v1737, %v815
  %v1747 = vmul.f32 %v1740, %v815
  %v1748 = vmul.f32 %v1743, %v815
  %v1749 = vmul.f32 %v1724, %v1724
  %v1750 = vmul.f32 %v1725, %v1725
  %v1751 = vmul.f32 %v1726, %v1726
  %v1752 = vmul.f32 %v1727, %v1727
  %v1753 = vmul.f32 %v1728, %v1728
  %v1754 = vsel %vm793, %v1749, 0.0
  %1755 = vadd.xlane.f32.xlu0 %v1754
  %v1756 = vpop.xlane.xlu0 %1755
  %v1757 = vsel %vm793, %v1750, 0.0
  %1758 = vadd.xlane.f32.xlu0 %v1757
  %v1759 = vpop.xlane.xlu0 %1758
  %v1760 = vsel %vm793, %v1751, 0.0
  %1761 = vadd.xlane.f32.xlu0 %v1760
  %v1762 = vpop.xlane.xlu0 %1761
  %v1763 = vsel %vm793, %v1752, 0.0
  %1764 = vadd.xlane.f32.xlu0 %v1763
  %v1765 = vpop.xlane.xlu0 %1764
  %v1766 = vsel %vm793, %v1753, 0.0
  %1767 = vadd.xlane.f32.xlu0 %v1766
  %v1768 = vpop.xlane.xlu0 %1767
  %v1769 = vmul.f32 %v1756, %v815
  %v1770 = vmul.f32 %v1759, %v815
  %v1771 = vmul.f32 %v1762, %v815
  %v1772 = vmul.f32 %v1765, %v815
  %v1773 = vmul.f32 %v1768, %v815
  %v1774 = vmul.f32 %v1744, %v1744
  %v1775 = vmul.f32 %v1745, %v1745
  %v1776 = vmul.f32 %v1746, %v1746
  %v1777 = vmul.f32 %v1747, %v1747
  %v1778 = vmul.f32 %v1748, %v1748
  %v1779 = vsub.f32 %v1769, %v1774
  %v1780 = vsub.f32 %v1770, %v1775
  %v1781 = vsub.f32 %v1771, %v1776
  %v1782 = vsub.f32 %v1772, %v1777
  %v1783 = vsub.f32 %v1773, %v1778
  %v1784 = vsub.f32 %v1724, %v1744
  %v1785 = vsub.f32 %v1725, %v1745
  %v1786 = vsub.f32 %v1726, %v1746
  %v1787 = vsub.f32 %v1727, %v1747
  %v1788 = vsub.f32 %v1728, %v1748
  %v1789 = vadd.f32 %v1779, 1e-06
  %v1790 = vadd.f32 %v1780, 1e-06
  %v1791 = vadd.f32 %v1781, 1e-06
  %v1792 = vadd.f32 %v1782, 1e-06
  %v1793 = vadd.f32 %v1783, 1e-06
  %v1794 = vrsqrt.pop %v1789
  %v1795 = vmul.f32 %v1794, %v1789
  %v1796 = vmul.f32 %v1795, %v1794
  %v1797 = vmul.f32 0.5, %v1796
  %v1798 = vsub.f32 1.5, %v1797
  %v1799 = vmul.f32 %v1794, %v1798
  %vm1800 = vweird.f32 %v1789
  %vm1801 = vweird.f32 %v1794
  %vm1802 = vmor %vm1800, %vm1801
  %v1803 = vsel %vm1802, %v1794, %v1799
  %v1804 = vrsqrt.pop %v1790
  %v1805 = vmul.f32 %v1804, %v1790
  %v1806 = vmul.f32 %v1805, %v1804
  %v1807 = vmul.f32 0.5, %v1806
  %v1808 = vsub.f32 1.5, %v1807
  %v1809 = vmul.f32 %v1804, %v1808
  %vm1810 = vweird.f32 %v1790
  %vm1811 = vweird.f32 %v1804
  %vm1812 = vmor %vm1810, %vm1811
  %v1813 = vsel %vm1812, %v1804, %v1809
  %v1814 = vrsqrt.pop %v1791
  %v1815 = vmul.f32 %v1814, %v1791
  %v1816 = vmul.f32 %v1815, %v1814
  %v1817 = vmul.f32 0.5, %v1816
  %v1818 = vsub.f32 1.5, %v1817
  %v1819 = vmul.f32 %v1814, %v1818
  %vm1820 = vweird.f32 %v1791
  %vm1821 = vweird.f32 %v1814
  %vm1822 = vmor %vm1820, %vm1821
  %v1823 = vsel %vm1822, %v1814, %v1819
  %v1824 = vrsqrt.pop %v1792
  %v1825 = vmul.f32 %v1824, %v1792
  %v1826 = vmul.f32 %v1825, %v1824
  %v1827 = vmul.f32 0.5, %v1826
  %v1828 = vsub.f32 1.5, %v1827
  %v1829 = vmul.f32 %v1824, %v1828
  %vm1830 = vweird.f32 %v1792
  %vm1831 = vweird.f32 %v1824
  %vm1832 = vmor %vm1830, %vm1831
  %v1833 = vsel %vm1832, %v1824, %v1829
  %v1834 = vrsqrt.pop %v1793
  %v1835 = vmul.f32 %v1834, %v1793
  %v1836 = vmul.f32 %v1835, %v1834
  %v1837 = vmul.f32 0.5, %v1836
  %v1838 = vsub.f32 1.5, %v1837
  %v1839 = vmul.f32 %v1834, %v1838
  %vm1840 = vweird.f32 %v1793
  %vm1841 = vweird.f32 %v1834
  %vm1842 = vmor %vm1840, %vm1841
  %v1843 = vsel %vm1842, %v1834, %v1839
  %v1844 = vmul.f32 %v1784, %v1803
  %v1845 = vmul.f32 %v1785, %v1813
  %v1846 = vmul.f32 %v1786, %v1823
  %v1847 = vmul.f32 %v1787, %v1833
  %v1848 = vmul.f32 %v1788, %v1843
  %v1849 = vperm.slane %v788, 4
  %v1850 = vmul.f32 %v1844, %v1849
  %v1851 = vmul.f32 %v1845, %v1849
  %v1852 = vmul.f32 %v1846, %v1849
  %v1853 = vmul.f32 %v1847, %v1849
  %v1854 = vmul.f32 %v1848, %v1849
  %v1855 = vperm.slane %v788, 5
  %v1856 = vadd.f32 %v1850, %v1855
  %v1857 = vadd.f32 %v1851, %v1855
  %v1858 = vadd.f32 %v1852, %v1855
  %v1859 = vadd.f32 %v1853, %v1855
  %v1860 = vadd.f32 %v1854, %v1855
  %v1861 = vpack.c.bf16 %v1857, %v1856
  %v1862 = vpack.c.bf16 %v1859, %v1858
  %v1863 = vpack.c.bf16 %v1860, %v1860
  %v1864 = vld [vmem:[%s4] sm:$0xf]
  %v1865 = vld [vmem:[%s4 + $0x4] sm:$0xf]
  %v1866 = vld [vmem:[%s4 + $0x8] sm:$0xf]
  %v1867 = vld [vmem:[%s4 + $0xc] sm:$0xf]
  %v1868 = vperm.slane %v788, 6
  %v1873 = vunpack.c.l.b16 %v1864
  %v1874 = vunpack.c.l.b16 %v1865
  %v1875 = vunpack.c.l.b16 %v1866
  %v1876 = vunpack.c.l.b16 %v1867
  %v1877 = vpack.c.b16 %v1874, %v1873
  %v1878 = vpack.c.b16 %v1876, %v1875
  %v1882 = vsel %vm793, %v1861, 0
  %v1885 = vsel %vm793, %v1862, 0
  %v1888 = vsel %vm793, %v1863, 0
  %1890 = vmatpush.bf16.msra.mxu0 0
  %1891 = vmatpush.bf16.msra.mxu0 0
  %1892 = vmatpush.bf16.msra.mxu0 0
  %1893 = vmatpush.bf16.msra.mxu0 0
  %1894 = vmatpush.bf16.msra.mxu0 0
  %1895 = vmatpush.bf16.msra.mxu0 0
  %1896 = vmatpush.bf16.msra.mxu0 %v1878
  %1897 = vmatpush.bf16.msra.mxu0 %v1877
  %1898 = vmatmul.bf16.gmra.mxu0 %v1882
  %v1899 = vpop.f32.mrf.mxu0
  %v1900 = vadd.f32 %v1868, %v1899
  %v1901 = vpop.f32.mrf.mxu0
  %v1902 = vadd.f32 %v1868, %v1901
  %1903 = vmatmul.bf16.gmra.mxu0 %v1885
  %v1904 = vpop.f32.mrf.mxu0
  %v1905 = vadd.f32 %v1868, %v1904
  %v1906 = vpop.f32.mrf.mxu0
  %v1907 = vadd.f32 %v1868, %v1906
  %1908 = vmatmul.bf16.gmra.mxu0 %v1888
  %v1909 = vpop.f32.mrf.mxu0
  %v1910 = vadd.f32 %v1868, %v1909
  %v1911 = vpop.f32.mrf.mxu0
  %1912 = vdwg.mxu0
  %v1913 = vmul.f32 %v1900, 0.5
  %v1914 = vmul.f32 %v1902, 0.5
  %v1915 = vmul.f32 %v1905, 0.5
  %v1916 = vmul.f32 %v1907, 0.5
  %v1917 = vmul.f32 %v1910, 0.5
  %v1918 = vmul.f32 %v1900, 0.044715
  %v1919 = vmul.f32 %v1902, 0.044715
  %v1920 = vmul.f32 %v1905, 0.044715
  %v1921 = vmul.f32 %v1907, 0.044715
  %v1922 = vmul.f32 %v1910, 0.044715
  %v1923 = vmul.f32 %v1918, %v1900
  %v1924 = vmul.f32 %v1919, %v1902
  %v1925 = vmul.f32 %v1920, %v1905
  %v1926 = vmul.f32 %v1921, %v1907
  %v1927 = vmul.f32 %v1922, %v1910
  %v1928 = vmul.f32 %v1923, %v1900
  %v1929 = vmul.f32 %v1924, %v1902
  %v1930 = vmul.f32 %v1925, %v1905
  %v1931 = vmul.f32 %v1926, %v1907
  %v1932 = vmul.f32 %v1927, %v1910
  %v1933 = vadd.f32 %v1900, %v1928
  %v1934 = vadd.f32 %v1902, %v1929
  %v1935 = vadd.f32 %v1905, %v1930
  %v1936 = vadd.f32 %v1907, %v1931
  %v1937 = vadd.f32 %v1910, %v1932
  %v1938 = vmul.f32 %v1933, 0.7978846
  %v1939 = vmul.f32 %v1934, 0.7978846
  %v1940 = vmul.f32 %v1935, 0.7978846
  %v1941 = vmul.f32 %v1936, 0.7978846
  %v1942 = vmul.f32 %v1937, 0.7978846
  %v1943 = vtanh.pop %v1938
  %v1944 = vtanh.pop %v1939
  %v1945 = vtanh.pop %v1940
  %v1946 = vtanh.pop %v1941
  %v1947 = vtanh.pop %v1942
  %v1948 = vadd.f32 %v1943, 1.0
  %v1949 = vadd.f32 %v1944, 1.0
  %v1950 = vadd.f32 %v1945, 1.0
  %v1951 = vadd.f32 %v1946, 1.0
  %v1952 = vadd.f32 %v1947, 1.0
  %v1953 = vmul.f32 %v1913, %v1948
  %v1954 = vmul.f32 %v1914, %v1949
  %v1955 = vmul.f32 %v1915, %v1950
  %v1956 = vmul.f32 %v1916, %v1951
  %v1957 = vmul.f32 %v1917, %v1952
  %v1958 = vpack.c.bf16 %v1954, %v1953
  %v1959 = vpack.c.bf16 %v1956, %v1955
  %v1960 = vpack.c.bf16 %v1957, %v1957
  %v1961 = vld [vmem:[%s5] sm:$0xf]
  %v1962 = vld [vmem:[%s5 + $0x4] sm:$0xf]
  %v1963 = vld [vmem:[%s5 + $0x8] sm:$0xf]
  %v1964 = vld [vmem:[%s5 + $0xc] sm:$0xf]
  %v1965 = vld [vmem:[%s5 + $0x10] sm:$0xf]
  %v1966 = vld [vmem:[%s5 + $0x14] sm:$0xf]
  %v1967 = vld [vmem:[%s5 + $0x18] sm:$0xf]
  %v1968 = vld [vmem:[%s5 + $0x1c] sm:$0xf]
  %v1969 = vperm.slane %v788, 7
  %v1978 = vunpack.c.l.b16 %v1961
  %v1979 = vunpack.c.l.b16 %v1962
  %v1980 = vunpack.c.l.b16 %v1963
  %v1981 = vunpack.c.l.b16 %v1964
  %v1982 = vunpack.c.l.b16 %v1965
  %v1983 = vunpack.c.l.b16 %v1966
  %v1984 = vunpack.c.l.b16 %v1967
  %v1985 = vunpack.c.l.b16 %v1968
  %v1986 = vpack.c.b16 %v1979, %v1978
  %v1987 = vpack.c.b16 %v1981, %v1980
  %v1988 = vpack.c.b16 %v1983, %v1982
  %v1989 = vpack.c.b16 %v1985, %v1984
  %vm1994 = vcmask 523264
  %v1996 = vsel %vm1994, %v1958, 0
  %v1999 = vsel %vm1994, %v1959, 0
  %v2002 = vsel %vm1994, %v1960, 0
  %2004 = vmatpush.bf16.msra.mxu0 0
  %2005 = vmatpush.bf16.msra.mxu0 0
  %2006 = vmatpush.bf16.msra.mxu0 0
  %2007 = vmatpush.bf16.msra.mxu0 0
  %2008 = vmatpush.bf16.msra.mxu0 %v1989
  %2009 = vmatpush.bf16.msra.mxu0 %v1988
  %2010 = vmatpush.bf16.msra.mxu0 %v1987
  %2011 = vmatpush.bf16.msra.mxu0 %v1986
  %2012 = vmatmul.bf16.gmra.mxu0 %v1996
  %v2013 = vpop.f32.mrf.mxu0
  %v2014 = vadd.f32 %v1969, %v2013
  %v2015 = vpop.f32.mrf.mxu0
  %v2016 = vadd.f32 %v1969, %v2015
  %2017 = vmatmul.bf16.gmra.mxu0 %v1999
  %v2018 = vpop.f32.mrf.mxu0
  %v2019 = vadd.f32 %v1969, %v2018
  %v2020 = vpop.f32.mrf.mxu0
  %v2021 = vadd.f32 %v1969, %v2020
  %2022 = vmatmul.bf16.gmra.mxu0 %v2002
  %v2023 = vpop.f32.mrf.mxu0
  %v2024 = vadd.f32 %v1969, %v2023
  %v2025 = vpop.f32.mrf.mxu0
  %2026 = vdwg.mxu0
  %v2027 = vadd.f32 %v1724, %v2014
  %v2028 = vadd.f32 %v1725, %v2016
  %v2029 = vadd.f32 %v1726, %v2019
  %v2030 = vadd.f32 %v1727, %v2021
  %v2031 = vadd.f32 %v1728, %v2024
  %s2032 = scalar_lea.vmem %s6, 8
  %v2033 = vld [vmem:[%s2032] sm:$0xff]
  %s2034 = scalar_lea.vmem %s3, 16
  %v2035 = vld [vmem:[%s2034] sm:$0xf]
  %v2036 = vld [vmem:[%s2034 + $0x4] sm:$0xf]
  %v2037 = vld [vmem:[%s2034 + $0x8] sm:$0xf]
  %v2038 = vld [vmem:[%s2034 + $0xc] sm:$0xf]
  %v2039 = vsel %vm793, %v2027, 0.0
  %2040 = vadd.xlane.f32.xlu0 %v2039
  %v2041 = vpop.xlane.xlu0 %2040
  %v2042 = vsel %vm793, %v2028, 0.0
  %2043 = vadd.xlane.f32.xlu0 %v2042
  %v2044 = vpop.xlane.xlu0 %2043
  %v2045 = vsel %vm793, %v2029, 0.0
  %2046 = vadd.xlane.f32.xlu0 %v2045
  %v2047 = vpop.xlane.xlu0 %2046
  %v2048 = vsel %vm793, %v2030, 0.0
  %2049 = vadd.xlane.f32.xlu0 %v2048
  %v2050 = vpop.xlane.xlu0 %2049
  %v2051 = vsel %vm793, %v2031, 0.0
  %2052 = vadd.xlane.f32.xlu0 %v2051
  %v2053 = vpop.xlane.xlu0 %2052
  %v2054 = vmul.f32 %v2041, %v815
  %v2055 = vmul.f32 %v2044, %v815
  %v2056 = vmul.f32 %v2047, %v815
  %v2057 = vmul.f32 %v2050, %v815
  %v2058 = vmul.f32 %v2053, %v815
  %v2059 = vmul.f32 %v2027, %v2027
  %v2060 = vmul.f32 %v2028, %v2028
  %v2061 = vmul.f32 %v2029, %v2029
  %v2062 = vmul.f32 %v2030, %v2030
  %v2063 = vmul.f32 %v2031, %v2031
  %v2064 = vsel %vm793, %v2059, 0.0
  %2065 = vadd.xlane.f32.xlu0 %v2064
  %v2066 = vpop.xlane.xlu0 %2065
  %v2067 = vsel %vm793, %v2060, 0.0
  %2068 = vadd.xlane.f32.xlu0 %v2067
  %v2069 = vpop.xlane.xlu0 %2068
  %v2070 = vsel %vm793, %v2061, 0.0
  %2071 = vadd.xlane.f32.xlu0 %v2070
  %v2072 = vpop.xlane.xlu0 %2071
  %v2073 = vsel %vm793, %v2062, 0.0
  %2074 = vadd.xlane.f32.xlu0 %v2073
  %v2075 = vpop.xlane.xlu0 %2074
  %v2076 = vsel %vm793, %v2063, 0.0
  %2077 = vadd.xlane.f32.xlu0 %v2076
  %v2078 = vpop.xlane.xlu0 %2077
  %v2079 = vmul.f32 %v2066, %v815
  %v2080 = vmul.f32 %v2069, %v815
  %v2081 = vmul.f32 %v2072, %v815
  %v2082 = vmul.f32 %v2075, %v815
  %v2083 = vmul.f32 %v2078, %v815
  %v2084 = vmul.f32 %v2054, %v2054
  %v2085 = vmul.f32 %v2055, %v2055
  %v2086 = vmul.f32 %v2056, %v2056
  %v2087 = vmul.f32 %v2057, %v2057
  %v2088 = vmul.f32 %v2058, %v2058
  %v2089 = vsub.f32 %v2079, %v2084
  %v2090 = vsub.f32 %v2080, %v2085
  %v2091 = vsub.f32 %v2081, %v2086
  %v2092 = vsub.f32 %v2082, %v2087
  %v2093 = vsub.f32 %v2083, %v2088
  %v2094 = vsub.f32 %v2027, %v2054
  %v2095 = vsub.f32 %v2028, %v2055
  %v2096 = vsub.f32 %v2029, %v2056
  %v2097 = vsub.f32 %v2030, %v2057
  %v2098 = vsub.f32 %v2031, %v2058
  %v2099 = vadd.f32 %v2089, 1e-06
  %v2100 = vadd.f32 %v2090, 1e-06
  %v2101 = vadd.f32 %v2091, 1e-06
  %v2102 = vadd.f32 %v2092, 1e-06
  %v2103 = vadd.f32 %v2093, 1e-06
  %v2104 = vrsqrt.pop %v2099
  %v2105 = vmul.f32 %v2104, %v2099
  %v2106 = vmul.f32 %v2105, %v2104
  %v2107 = vmul.f32 0.5, %v2106
  %v2108 = vsub.f32 1.5, %v2107
  %v2109 = vmul.f32 %v2104, %v2108
  %vm2110 = vweird.f32 %v2099
  %vm2111 = vweird.f32 %v2104
  %vm2112 = vmor %vm2110, %vm2111
  %v2113 = vsel %vm2112, %v2104, %v2109
  %v2114 = vrsqrt.pop %v2100
  %v2115 = vmul.f32 %v2114, %v2100
  %v2116 = vmul.f32 %v2115, %v2114
  %v2117 = vmul.f32 0.5, %v2116
  %v2118 = vsub.f32 1.5, %v2117
  %v2119 = vmul.f32 %v2114, %v2118
  %vm2120 = vweird.f32 %v2100
  %vm2121 = vweird.f32 %v2114
  %vm2122 = vmor %vm2120, %vm2121
  %v2123 = vsel %vm2122, %v2114, %v2119
  %v2124 = vrsqrt.pop %v2101
  %v2125 = vmul.f32 %v2124, %v2101
  %v2126 = vmul.f32 %v2125, %v2124
  %v2127 = vmul.f32 0.5, %v2126
  %v2128 = vsub.f32 1.5, %v2127
  %v2129 = vmul.f32 %v2124, %v2128
  %vm2130 = vweird.f32 %v2101
  %vm2131 = vweird.f32 %v2124
  %vm2132 = vmor %vm2130, %vm2131
  %v2133 = vsel %vm2132, %v2124, %v2129
  %v2134 = vrsqrt.pop %v2102
  %v2135 = vmul.f32 %v2134, %v2102
  %v2136 = vmul.f32 %v2135, %v2134
  %v2137 = vmul.f32 0.5, %v2136
  %v2138 = vsub.f32 1.5, %v2137
  %v2139 = vmul.f32 %v2134, %v2138
  %vm2140 = vweird.f32 %v2102
  %vm2141 = vweird.f32 %v2134
  %vm2142 = vmor %vm2140, %vm2141
  %v2143 = vsel %vm2142, %v2134, %v2139
  %v2144 = vrsqrt.pop %v2103
  %v2145 = vmul.f32 %v2144, %v2103
  %v2146 = vmul.f32 %v2145, %v2144
  %v2147 = vmul.f32 0.5, %v2146
  %v2148 = vsub.f32 1.5, %v2147
  %v2149 = vmul.f32 %v2144, %v2148
  %vm2150 = vweird.f32 %v2103
  %vm2151 = vweird.f32 %v2144
  %vm2152 = vmor %vm2150, %vm2151
  %v2153 = vsel %vm2152, %v2144, %v2149
  %v2154 = vmul.f32 %v2094, %v2113
  %v2155 = vmul.f32 %v2095, %v2123
  %v2156 = vmul.f32 %v2096, %v2133
  %v2157 = vmul.f32 %v2097, %v2143
  %v2158 = vmul.f32 %v2098, %v2153
  %v2159 = vperm.slane %v2033, 0
  %v2160 = vmul.f32 %v2154, %v2159
  %v2161 = vmul.f32 %v2155, %v2159
  %v2162 = vmul.f32 %v2156, %v2159
  %v2163 = vmul.f32 %v2157, %v2159
  %v2164 = vmul.f32 %v2158, %v2159
  %v2165 = vperm.slane %v2033, 1
  %v2166 = vadd.f32 %v2160, %v2165
  %v2167 = vadd.f32 %v2161, %v2165
  %v2168 = vadd.f32 %v2162, %v2165
  %v2169 = vadd.f32 %v2163, %v2165
  %v2170 = vadd.f32 %v2164, %v2165
  %v2171 = vpack.c.bf16 %v2167, %v2166
  %v2172 = vpack.c.bf16 %v2169, %v2168
  %v2173 = vpack.c.bf16 %v2170, %v2170
  %v2174 = vperm.slane %v2033, 2
  %v2179 = vunpack.c.l.b16 %v2035
  %v2180 = vunpack.c.l.b16 %v2036
  %v2181 = vunpack.c.l.b16 %v2037
  %v2182 = vunpack.c.l.b16 %v2038
  %v2183 = vpack.c.b16 %v2180, %v2179
  %v2184 = vpack.c.b16 %v2182, %v2181
  %v2188 = vsel %vm793, %v2171, 0
  %v2191 = vsel %vm793, %v2172, 0
  %v2194 = vsel %vm793, %v2173, 0
  %2196 = vmatpush.bf16.msra.mxu0 0
  %2197 = vmatpush.bf16.msra.mxu0 0
  %2198 = vmatpush.bf16.msra.mxu0 0
  %2199 = vmatpush.bf16.msra.mxu0 0
  %2200 = vmatpush.bf16.msra.mxu0 0
  %2201 = vmatpush.bf16.msra.mxu0 0
  %2202 = vmatpush.bf16.msra.mxu0 %v2184
  %2203 = vmatpush.bf16.msra.mxu0 %v2183
  %2204 = vmatmul.bf16.gmra.mxu0 %v2188
  %v2205 = vpop.f32.mrf.mxu0
  %v2206 = vadd.f32 %v2174, %v2205
  %v2207 = vpop.f32.mrf.mxu0
  %v2208 = vadd.f32 %v2174, %v2207
  %2209 = vmatmul.bf16.gmra.mxu0 %v2191
  %v2210 = vpop.f32.mrf.mxu0
  %v2211 = vadd.f32 %v2174, %v2210
  %v2212 = vpop.f32.mrf.mxu0
  %v2213 = vadd.f32 %v2174, %v2212
  %2214 = vmatmul.bf16.gmra.mxu0 %v2194
  %v2215 = vpop.f32.mrf.mxu0
  %v2216 = vadd.f32 %v2174, %v2215
  %v2217 = vpop.f32.mrf.mxu0
  %2218 = vdwg.mxu0
  %v2219 = vpack.c.bf16 %v2208, %v2206
  %v2220 = vpack.c.bf16 %v2213, %v2211
  %v2221 = vpack.c.bf16 %v2216, %v2216
  %2225 = vrot.lane.b32.xlu0 %v2219, 96
  %v2226 = vpop.permute.xlu0 %2225
  %2227 = vrot.lane.b32.xlu0 %v2220, 96
  %v2228 = vpop.permute.xlu0 %2227
  %2229 = vrot.lane.b32.xlu0 %v2221, 96
  %v2230 = vpop.permute.xlu0 %2229
  %v2232 = vsel %vm993, %v2219, 0
  %v2235 = vsel %vm993, %v2220, 0
  %v2238 = vsel %vm993, %v2221, 0
  %v2241 = vsel %vm993, %v2226, 0
  %v2244 = vsel %vm993, %v2228, 0
  %v2247 = vsel %vm993, %v2230, 0
  %2249 = vmatpush.bf16.xpose.msra.mxu0 0
  %2250 = vmatpush.bf16.xpose.msra.mxu0 0
  %2251 = vmatpush.bf16.xpose.msra.mxu0 0
  %2252 = vmatpush.bf16.xpose.msra.mxu0 0
  %2253 = vmatpush.bf16.xpose.msra.mxu0 0
  %2254 = vmatpush.bf16.xpose.msra.mxu0 %v2247
  %2255 = vmatpush.bf16.xpose.msra.mxu0 %v2244
  %2256 = vmatpush.bf16.xpose.msra.mxu0 %v2241
  %2257 = vmatmul.bf16.gmra.mxu0 %v2232
  %v2258 = vpop.f32.mrf.mxu0
  %v2259 = vadd.f32 %v783, %v2258
  %v2260 = vpop.f32.mrf.mxu0
  %v2261 = vadd.f32 %v784, %v2260
  %2262 = vmatmul.bf16.gmra.mxu0 %v2235
  %v2263 = vpop.f32.mrf.mxu0
  %v2264 = vadd.f32 %v785, %v2263
  %v2265 = vpop.f32.mrf.mxu0
  %v2266 = vadd.f32 %v786, %v2265
  %2267 = vmatmul.bf16.gmra.mxu0 %v2238
  %v2268 = vpop.f32.mrf.mxu0
  %v2269 = vadd.f32 %v787, %v2268
  %v2270 = vpop.f32.mrf.mxu0
  %2271 = vdwg.mxu0
  %v2272 = vsel %vm1035, %v2259, -inf
  %2273 = vmax.xlane.f32.xlu0 %v2272
  %v2274 = vpop.xlane.xlu0 %2273
  %v2275 = vsel %vm1035, %v2261, -inf
  %2276 = vmax.xlane.f32.xlu0 %v2275
  %v2277 = vpop.xlane.xlu0 %2276
  %v2278 = vsel %vm1035, %v2264, -inf
  %2279 = vmax.xlane.f32.xlu0 %v2278
  %v2280 = vpop.xlane.xlu0 %2279
  %v2281 = vsel %vm1035, %v2266, -inf
  %2282 = vmax.xlane.f32.xlu0 %v2281
  %v2283 = vpop.xlane.xlu0 %2282
  %v2284 = vsel %vm1035, %v2269, -inf
  %2285 = vmax.xlane.f32.xlu0 %v2284
  %v2286 = vpop.xlane.xlu0 %2285
  %v2287 = vsub.f32 %v2259, %v2274
  %v2288 = vsub.f32 %v2261, %v2277
  %v2289 = vsub.f32 %v2264, %v2280
  %v2290 = vsub.f32 %v2266, %v2283
  %v2291 = vsub.f32 %v2269, %v2286
  %v2292 = vmul.f32 %v2287, 1.442695
  %v2293 = vpow.pop %v2292
  %v2294 = vmul.f32 %v2288, 1.442695
  %v2295 = vpow.pop %v2294
  %v2296 = vmul.f32 %v2289, 1.442695
  %v2297 = vpow.pop %v2296
  %v2298 = vmul.f32 %v2290, 1.442695
  %v2299 = vpow.pop %v2298
  %v2300 = vmul.f32 %v2291, 1.442695
  %v2301 = vpow.pop %v2300
  %v2302 = vsel %vm1035, %v2293, 0.0
  %2303 = vadd.xlane.f32.xlu0 %v2302
  %v2304 = vpop.xlane.xlu0 %2303
  %v2305 = vsel %vm1035, %v2295, 0.0
  %2306 = vadd.xlane.f32.xlu0 %v2305
  %v2307 = vpop.xlane.xlu0 %2306
  %v2308 = vsel %vm1035, %v2297, 0.0
  %2309 = vadd.xlane.f32.xlu0 %v2308
  %v2310 = vpop.xlane.xlu0 %2309
  %v2311 = vsel %vm1035, %v2299, 0.0
  %2312 = vadd.xlane.f32.xlu0 %v2311
  %v2313 = vpop.xlane.xlu0 %2312
  %v2314 = vsel %vm1035, %v2301, 0.0
  %2315 = vadd.xlane.f32.xlu0 %v2314
  %v2316 = vpop.xlane.xlu0 %2315
  %v2317 = vrcp.pop %v2304
  %v2318 = vrcp.pop %v2307
  %v2319 = vrcp.pop %v2310
  %v2320 = vrcp.pop %v2313
  %v2321 = vrcp.pop %v2316
  %v2322 = vmul.f32 %v2293, %v2317
  %v2323 = vmul.f32 %v2295, %v2318
  %v2324 = vmul.f32 %v2297, %v2319
  %v2325 = vmul.f32 %v2299, %v2320
  %v2326 = vmul.f32 %v2301, %v2321
  %v2327 = vpack.c.bf16 %v2323, %v2322
  %v2328 = vpack.c.bf16 %v2325, %v2324
  %v2329 = vpack.c.bf16 %v2326, %v2326
  %2330 = vrot.lane.b32.xlu0 %v2219, 64
  %v2331 = vpop.permute.xlu0 %2330
  %2332 = vrot.lane.b32.xlu0 %v2220, 64
  %v2333 = vpop.permute.xlu0 %2332
  %2334 = vrot.lane.b32.xlu0 %v2221, 64
  %v2335 = vpop.permute.xlu0 %2334
  %v2339 = vsel %vm1035, %v2327, 0
  %v2342 = vsel %vm1035, %v2328, 0
  %v2345 = vsel %vm1035, %v2329, 0
  %v2348 = vsel %vm1111, %v2335, 0
  %2350 = vmatpush.bf16.msra.mxu0 0
  %2351 = vmatpush.bf16.msra.mxu0 0
  %2352 = vmatpush.bf16.msra.mxu0 0
  %2353 = vmatpush.bf16.msra.mxu0 0
  %2354 = vmatpush.bf16.msra.mxu0 0
  %2355 = vmatpush.bf16.msra.mxu0 %v2348
  %2356 = vmatpush.bf16.msra.mxu0 %v2333
  %2357 = vmatpush.bf16.msra.mxu0 %v2331
  %2358 = vmatmul.bf16.gmra.mxu0 %v2339
  %v2359 = vpop.f32.mrf.mxu0
  %v2360 = vadd.f32 0.0, %v2359
  %v2361 = vpop.f32.mrf.mxu0
  %v2362 = vadd.f32 0.0, %v2361
  %2363 = vmatmul.bf16.gmra.mxu0 %v2342
  %v2364 = vpop.f32.mrf.mxu0
  %v2365 = vadd.f32 0.0, %v2364
  %v2366 = vpop.f32.mrf.mxu0
  %v2367 = vadd.f32 0.0, %v2366
  %2368 = vmatmul.bf16.gmra.mxu0 %v2345
  %v2369 = vpop.f32.mrf.mxu0
  %v2370 = vadd.f32 0.0, %v2369
  %v2371 = vpop.f32.mrf.mxu0
  %2372 = vdwg.mxu0
  %2373 = vrot.lane.b32.xlu0 %v2219, 120
  %v2374 = vpop.permute.xlu0 %2373
  %2375 = vrot.lane.b32.xlu0 %v2220, 120
  %v2376 = vpop.permute.xlu0 %2375
  %2377 = vrot.lane.b32.xlu0 %v2221, 120
  %v2378 = vpop.permute.xlu0 %2377
  %2379 = vrot.lane.b32.xlu0 %v2219, 88
  %v2380 = vpop.permute.xlu0 %2379
  %2381 = vrot.lane.b32.xlu0 %v2220, 88
  %v2382 = vpop.permute.xlu0 %2381
  %2383 = vrot.lane.b32.xlu0 %v2221, 88
  %v2384 = vpop.permute.xlu0 %2383
  %v2386 = vsel %vm993, %v2374, 0
  %v2389 = vsel %vm993, %v2376, 0
  %v2392 = vsel %vm993, %v2378, 0
  %v2395 = vsel %vm993, %v2380, 0
  %v2398 = vsel %vm993, %v2382, 0
  %v2401 = vsel %vm993, %v2384, 0
  %2403 = vmatpush.bf16.xpose.msra.mxu0 0
  %2404 = vmatpush.bf16.xpose.msra.mxu0 0
  %2405 = vmatpush.bf16.xpose.msra.mxu0 0
  %2406 = vmatpush.bf16.xpose.msra.mxu0 0
  %2407 = vmatpush.bf16.xpose.msra.mxu0 0
  %2408 = vmatpush.bf16.xpose.msra.mxu0 %v2401
  %2409 = vmatpush.bf16.xpose.msra.mxu0 %v2398
  %2410 = vmatpush.bf16.xpose.msra.mxu0 %v2395
  %2411 = vmatmul.bf16.gmra.mxu0 %v2386
  %v2412 = vpop.f32.mrf.mxu0
  %v2413 = vadd.f32 %v783, %v2412
  %v2414 = vpop.f32.mrf.mxu0
  %v2415 = vadd.f32 %v784, %v2414
  %2416 = vmatmul.bf16.gmra.mxu0 %v2389
  %v2417 = vpop.f32.mrf.mxu0
  %v2418 = vadd.f32 %v785, %v2417
  %v2419 = vpop.f32.mrf.mxu0
  %v2420 = vadd.f32 %v786, %v2419
  %2421 = vmatmul.bf16.gmra.mxu0 %v2392
  %v2422 = vpop.f32.mrf.mxu0
  %v2423 = vadd.f32 %v787, %v2422
  %v2424 = vpop.f32.mrf.mxu0
  %2425 = vdwg.mxu0
  %v2426 = vsel %vm1035, %v2413, -inf
  %2427 = vmax.xlane.f32.xlu0 %v2426
  %v2428 = vpop.xlane.xlu0 %2427
  %v2429 = vsel %vm1035, %v2415, -inf
  %2430 = vmax.xlane.f32.xlu0 %v2429
  %v2431 = vpop.xlane.xlu0 %2430
  %v2432 = vsel %vm1035, %v2418, -inf
  %2433 = vmax.xlane.f32.xlu0 %v2432
  %v2434 = vpop.xlane.xlu0 %2433
  %v2435 = vsel %vm1035, %v2420, -inf
  %2436 = vmax.xlane.f32.xlu0 %v2435
  %v2437 = vpop.xlane.xlu0 %2436
  %v2438 = vsel %vm1035, %v2423, -inf
  %2439 = vmax.xlane.f32.xlu0 %v2438
  %v2440 = vpop.xlane.xlu0 %2439
  %v2441 = vsub.f32 %v2413, %v2428
  %v2442 = vsub.f32 %v2415, %v2431
  %v2443 = vsub.f32 %v2418, %v2434
  %v2444 = vsub.f32 %v2420, %v2437
  %v2445 = vsub.f32 %v2423, %v2440
  %v2446 = vmul.f32 %v2441, 1.442695
  %v2447 = vpow.pop %v2446
  %v2448 = vmul.f32 %v2442, 1.442695
  %v2449 = vpow.pop %v2448
  %v2450 = vmul.f32 %v2443, 1.442695
  %v2451 = vpow.pop %v2450
  %v2452 = vmul.f32 %v2444, 1.442695
  %v2453 = vpow.pop %v2452
  %v2454 = vmul.f32 %v2445, 1.442695
  %v2455 = vpow.pop %v2454
  %v2456 = vsel %vm1035, %v2447, 0.0
  %2457 = vadd.xlane.f32.xlu0 %v2456
  %v2458 = vpop.xlane.xlu0 %2457
  %v2459 = vsel %vm1035, %v2449, 0.0
  %2460 = vadd.xlane.f32.xlu0 %v2459
  %v2461 = vpop.xlane.xlu0 %2460
  %v2462 = vsel %vm1035, %v2451, 0.0
  %2463 = vadd.xlane.f32.xlu0 %v2462
  %v2464 = vpop.xlane.xlu0 %2463
  %v2465 = vsel %vm1035, %v2453, 0.0
  %2466 = vadd.xlane.f32.xlu0 %v2465
  %v2467 = vpop.xlane.xlu0 %2466
  %v2468 = vsel %vm1035, %v2455, 0.0
  %2469 = vadd.xlane.f32.xlu0 %v2468
  %v2470 = vpop.xlane.xlu0 %2469
  %v2471 = vrcp.pop %v2458
  %v2472 = vrcp.pop %v2461
  %v2473 = vrcp.pop %v2464
  %v2474 = vrcp.pop %v2467
  %v2475 = vrcp.pop %v2470
  %v2476 = vmul.f32 %v2447, %v2471
  %v2477 = vmul.f32 %v2449, %v2472
  %v2478 = vmul.f32 %v2451, %v2473
  %v2479 = vmul.f32 %v2453, %v2474
  %v2480 = vmul.f32 %v2455, %v2475
  %v2481 = vpack.c.bf16 %v2477, %v2476
  %v2482 = vpack.c.bf16 %v2479, %v2478
  %v2483 = vpack.c.bf16 %v2480, %v2480
  %2484 = vrot.lane.b32.xlu0 %v2219, 56
  %v2485 = vpop.permute.xlu0 %2484
  %2486 = vrot.lane.b32.xlu0 %v2220, 56
  %v2487 = vpop.permute.xlu0 %2486
  %2488 = vrot.lane.b32.xlu0 %v2221, 56
  %v2489 = vpop.permute.xlu0 %2488
  %v2493 = vsel %vm1035, %v2481, 0
  %v2496 = vsel %vm1035, %v2482, 0
  %v2499 = vsel %vm1035, %v2483, 0
  %v2502 = vsel %vm1111, %v2489, 0
  %2504 = vmatpush.bf16.msra.mxu0 0
  %2505 = vmatpush.bf16.msra.mxu0 0
  %2506 = vmatpush.bf16.msra.mxu0 0
  %2507 = vmatpush.bf16.msra.mxu0 0
  %2508 = vmatpush.bf16.msra.mxu0 0
  %2509 = vmatpush.bf16.msra.mxu0 %v2502
  %2510 = vmatpush.bf16.msra.mxu0 %v2487
  %2511 = vmatpush.bf16.msra.mxu0 %v2485
  %2512 = vmatmul.bf16.gmra.mxu0 %v2493
  %v2513 = vpop.f32.mrf.mxu0
  %v2514 = vadd.f32 0.0, %v2513
  %v2515 = vpop.f32.mrf.mxu0
  %v2516 = vadd.f32 0.0, %v2515
  %2517 = vmatmul.bf16.gmra.mxu0 %v2496
  %v2518 = vpop.f32.mrf.mxu0
  %v2519 = vadd.f32 0.0, %v2518
  %v2520 = vpop.f32.mrf.mxu0
  %v2521 = vadd.f32 0.0, %v2520
  %2522 = vmatmul.bf16.gmra.mxu0 %v2499
  %v2523 = vpop.f32.mrf.mxu0
  %v2524 = vadd.f32 0.0, %v2523
  %v2525 = vpop.f32.mrf.mxu0
  %2526 = vdwg.mxu0
  %2527 = vrot.lane.b32.xlu0 %v2219, 112
  %v2528 = vpop.permute.xlu0 %2527
  %2529 = vrot.lane.b32.xlu0 %v2220, 112
  %v2530 = vpop.permute.xlu0 %2529
  %2531 = vrot.lane.b32.xlu0 %v2221, 112
  %v2532 = vpop.permute.xlu0 %2531
  %2533 = vrot.lane.b32.xlu0 %v2219, 80
  %v2534 = vpop.permute.xlu0 %2533
  %2535 = vrot.lane.b32.xlu0 %v2220, 80
  %v2536 = vpop.permute.xlu0 %2535
  %2537 = vrot.lane.b32.xlu0 %v2221, 80
  %v2538 = vpop.permute.xlu0 %2537
  %v2540 = vsel %vm993, %v2528, 0
  %v2543 = vsel %vm993, %v2530, 0
  %v2546 = vsel %vm993, %v2532, 0
  %v2549 = vsel %vm993, %v2534, 0
  %v2552 = vsel %vm993, %v2536, 0
  %v2555 = vsel %vm993, %v2538, 0
  %2557 = vmatpush.bf16.xpose.msra.mxu0 0
  %2558 = vmatpush.bf16.xpose.msra.mxu0 0
  %2559 = vmatpush.bf16.xpose.msra.mxu0 0
  %2560 = vmatpush.bf16.xpose.msra.mxu0 0
  %2561 = vmatpush.bf16.xpose.msra.mxu0 0
  %2562 = vmatpush.bf16.xpose.msra.mxu0 %v2555
  %2563 = vmatpush.bf16.xpose.msra.mxu0 %v2552
  %2564 = vmatpush.bf16.xpose.msra.mxu0 %v2549
  %2565 = vmatmul.bf16.gmra.mxu0 %v2540
  %v2566 = vpop.f32.mrf.mxu0
  %v2567 = vadd.f32 %v783, %v2566
  %v2568 = vpop.f32.mrf.mxu0
  %v2569 = vadd.f32 %v784, %v2568
  %2570 = vmatmul.bf16.gmra.mxu0 %v2543
  %v2571 = vpop.f32.mrf.mxu0
  %v2572 = vadd.f32 %v785, %v2571
  %v2573 = vpop.f32.mrf.mxu0
  %v2574 = vadd.f32 %v786, %v2573
  %2575 = vmatmul.bf16.gmra.mxu0 %v2546
  %v2576 = vpop.f32.mrf.mxu0
  %v2577 = vadd.f32 %v787, %v2576
  %v2578 = vpop.f32.mrf.mxu0
  %2579 = vdwg.mxu0
  %v2580 = vsel %vm1035, %v2567, -inf
  %2581 = vmax.xlane.f32.xlu0 %v2580
  %v2582 = vpop.xlane.xlu0 %2581
  %v2583 = vsel %vm1035, %v2569, -inf
  %2584 = vmax.xlane.f32.xlu0 %v2583
  %v2585 = vpop.xlane.xlu0 %2584
  %v2586 = vsel %vm1035, %v2572, -inf
  %2587 = vmax.xlane.f32.xlu0 %v2586
  %v2588 = vpop.xlane.xlu0 %2587
  %v2589 = vsel %vm1035, %v2574, -inf
  %2590 = vmax.xlane.f32.xlu0 %v2589
  %v2591 = vpop.xlane.xlu0 %2590
  %v2592 = vsel %vm1035, %v2577, -inf
  %2593 = vmax.xlane.f32.xlu0 %v2592
  %v2594 = vpop.xlane.xlu0 %2593
  %v2595 = vsub.f32 %v2567, %v2582
  %v2596 = vsub.f32 %v2569, %v2585
  %v2597 = vsub.f32 %v2572, %v2588
  %v2598 = vsub.f32 %v2574, %v2591
  %v2599 = vsub.f32 %v2577, %v2594
  %v2600 = vmul.f32 %v2595, 1.442695
  %v2601 = vpow.pop %v2600
  %v2602 = vmul.f32 %v2596, 1.442695
  %v2603 = vpow.pop %v2602
  %v2604 = vmul.f32 %v2597, 1.442695
  %v2605 = vpow.pop %v2604
  %v2606 = vmul.f32 %v2598, 1.442695
  %v2607 = vpow.pop %v2606
  %v2608 = vmul.f32 %v2599, 1.442695
  %v2609 = vpow.pop %v2608
  %v2610 = vsel %vm1035, %v2601, 0.0
  %2611 = vadd.xlane.f32.xlu0 %v2610
  %v2612 = vpop.xlane.xlu0 %2611
  %v2613 = vsel %vm1035, %v2603, 0.0
  %2614 = vadd.xlane.f32.xlu0 %v2613
  %v2615 = vpop.xlane.xlu0 %2614
  %v2616 = vsel %vm1035, %v2605, 0.0
  %2617 = vadd.xlane.f32.xlu0 %v2616
  %v2618 = vpop.xlane.xlu0 %2617
  %v2619 = vsel %vm1035, %v2607, 0.0
  %2620 = vadd.xlane.f32.xlu0 %v2619
  %v2621 = vpop.xlane.xlu0 %2620
  %v2622 = vsel %vm1035, %v2609, 0.0
  %2623 = vadd.xlane.f32.xlu0 %v2622
  %v2624 = vpop.xlane.xlu0 %2623
  %v2625 = vrcp.pop %v2612
  %v2626 = vrcp.pop %v2615
  %v2627 = vrcp.pop %v2618
  %v2628 = vrcp.pop %v2621
  %v2629 = vrcp.pop %v2624
  %v2630 = vmul.f32 %v2601, %v2625
  %v2631 = vmul.f32 %v2603, %v2626
  %v2632 = vmul.f32 %v2605, %v2627
  %v2633 = vmul.f32 %v2607, %v2628
  %v2634 = vmul.f32 %v2609, %v2629
  %v2635 = vpack.c.bf16 %v2631, %v2630
  %v2636 = vpack.c.bf16 %v2633, %v2632
  %v2637 = vpack.c.bf16 %v2634, %v2634
  %2638 = vrot.lane.b32.xlu0 %v2219, 48
  %v2639 = vpop.permute.xlu0 %2638
  %2640 = vrot.lane.b32.xlu0 %v2220, 48
  %v2641 = vpop.permute.xlu0 %2640
  %2642 = vrot.lane.b32.xlu0 %v2221, 48
  %v2643 = vpop.permute.xlu0 %2642
  %v2647 = vsel %vm1035, %v2635, 0
  %v2650 = vsel %vm1035, %v2636, 0
  %v2653 = vsel %vm1035, %v2637, 0
  %v2656 = vsel %vm1111, %v2643, 0
  %2658 = vmatpush.bf16.msra.mxu0 0
  %2659 = vmatpush.bf16.msra.mxu0 0
  %2660 = vmatpush.bf16.msra.mxu0 0
  %2661 = vmatpush.bf16.msra.mxu0 0
  %2662 = vmatpush.bf16.msra.mxu0 0
  %2663 = vmatpush.bf16.msra.mxu0 %v2656
  %2664 = vmatpush.bf16.msra.mxu0 %v2641
  %2665 = vmatpush.bf16.msra.mxu0 %v2639
  %2666 = vmatmul.bf16.gmra.mxu0 %v2647
  %v2667 = vpop.f32.mrf.mxu0
  %v2668 = vadd.f32 0.0, %v2667
  %v2669 = vpop.f32.mrf.mxu0
  %v2670 = vadd.f32 0.0, %v2669
  %2671 = vmatmul.bf16.gmra.mxu0 %v2650
  %v2672 = vpop.f32.mrf.mxu0
  %v2673 = vadd.f32 0.0, %v2672
  %v2674 = vpop.f32.mrf.mxu0
  %v2675 = vadd.f32 0.0, %v2674
  %2676 = vmatmul.bf16.gmra.mxu0 %v2653
  %v2677 = vpop.f32.mrf.mxu0
  %v2678 = vadd.f32 0.0, %v2677
  %v2679 = vpop.f32.mrf.mxu0
  %2680 = vdwg.mxu0
  %2681 = vrot.lane.b32.xlu0 %v2219, 104
  %v2682 = vpop.permute.xlu0 %2681
  %2683 = vrot.lane.b32.xlu0 %v2220, 104
  %v2684 = vpop.permute.xlu0 %2683
  %2685 = vrot.lane.b32.xlu0 %v2221, 104
  %v2686 = vpop.permute.xlu0 %2685
  %2687 = vrot.lane.b32.xlu0 %v2219, 72
  %v2688 = vpop.permute.xlu0 %2687
  %2689 = vrot.lane.b32.xlu0 %v2220, 72
  %v2690 = vpop.permute.xlu0 %2689
  %2691 = vrot.lane.b32.xlu0 %v2221, 72
  %v2692 = vpop.permute.xlu0 %2691
  %v2694 = vsel %vm993, %v2682, 0
  %v2697 = vsel %vm993, %v2684, 0
  %v2700 = vsel %vm993, %v2686, 0
  %v2703 = vsel %vm993, %v2688, 0
  %v2706 = vsel %vm993, %v2690, 0
  %v2709 = vsel %vm993, %v2692, 0
  %2711 = vmatpush.bf16.xpose.msra.mxu0 0
  %2712 = vmatpush.bf16.xpose.msra.mxu0 0
  %2713 = vmatpush.bf16.xpose.msra.mxu0 0
  %2714 = vmatpush.bf16.xpose.msra.mxu0 0
  %2715 = vmatpush.bf16.xpose.msra.mxu0 0
  %2716 = vmatpush.bf16.xpose.msra.mxu0 %v2709
  %2717 = vmatpush.bf16.xpose.msra.mxu0 %v2706
  %2718 = vmatpush.bf16.xpose.msra.mxu0 %v2703
  %2719 = vmatmul.bf16.gmra.mxu0 %v2694
  %v2720 = vpop.f32.mrf.mxu0
  %v2721 = vadd.f32 %v783, %v2720
  %v2722 = vpop.f32.mrf.mxu0
  %v2723 = vadd.f32 %v784, %v2722
  %2724 = vmatmul.bf16.gmra.mxu0 %v2697
  %v2725 = vpop.f32.mrf.mxu0
  %v2726 = vadd.f32 %v785, %v2725
  %v2727 = vpop.f32.mrf.mxu0
  %v2728 = vadd.f32 %v786, %v2727
  %2729 = vmatmul.bf16.gmra.mxu0 %v2700
  %v2730 = vpop.f32.mrf.mxu0
  %v2731 = vadd.f32 %v787, %v2730
  %v2732 = vpop.f32.mrf.mxu0
  %2733 = vdwg.mxu0
  %v2734 = vsel %vm1035, %v2721, -inf
  %2735 = vmax.xlane.f32.xlu0 %v2734
  %v2736 = vpop.xlane.xlu0 %2735
  %v2737 = vsel %vm1035, %v2723, -inf
  %2738 = vmax.xlane.f32.xlu0 %v2737
  %v2739 = vpop.xlane.xlu0 %2738
  %v2740 = vsel %vm1035, %v2726, -inf
  %2741 = vmax.xlane.f32.xlu0 %v2740
  %v2742 = vpop.xlane.xlu0 %2741
  %v2743 = vsel %vm1035, %v2728, -inf
  %2744 = vmax.xlane.f32.xlu0 %v2743
  %v2745 = vpop.xlane.xlu0 %2744
  %v2746 = vsel %vm1035, %v2731, -inf
  %2747 = vmax.xlane.f32.xlu0 %v2746
  %v2748 = vpop.xlane.xlu0 %2747
  %v2749 = vsub.f32 %v2721, %v2736
  %v2750 = vsub.f32 %v2723, %v2739
  %v2751 = vsub.f32 %v2726, %v2742
  %v2752 = vsub.f32 %v2728, %v2745
  %v2753 = vsub.f32 %v2731, %v2748
  %v2754 = vmul.f32 %v2749, 1.442695
  %v2755 = vpow.pop %v2754
  %v2756 = vmul.f32 %v2750, 1.442695
  %v2757 = vpow.pop %v2756
  %v2758 = vmul.f32 %v2751, 1.442695
  %v2759 = vpow.pop %v2758
  %v2760 = vmul.f32 %v2752, 1.442695
  %v2761 = vpow.pop %v2760
  %v2762 = vmul.f32 %v2753, 1.442695
  %v2763 = vpow.pop %v2762
  %v2764 = vsel %vm1035, %v2755, 0.0
  %2765 = vadd.xlane.f32.xlu0 %v2764
  %v2766 = vpop.xlane.xlu0 %2765
  %v2767 = vsel %vm1035, %v2757, 0.0
  %2768 = vadd.xlane.f32.xlu0 %v2767
  %v2769 = vpop.xlane.xlu0 %2768
  %v2770 = vsel %vm1035, %v2759, 0.0
  %2771 = vadd.xlane.f32.xlu0 %v2770
  %v2772 = vpop.xlane.xlu0 %2771
  %v2773 = vsel %vm1035, %v2761, 0.0
  %2774 = vadd.xlane.f32.xlu0 %v2773
  %v2775 = vpop.xlane.xlu0 %2774
  %v2776 = vsel %vm1035, %v2763, 0.0
  %2777 = vadd.xlane.f32.xlu0 %v2776
  %v2778 = vpop.xlane.xlu0 %2777
  %v2779 = vrcp.pop %v2766
  %v2780 = vrcp.pop %v2769
  %v2781 = vrcp.pop %v2772
  %v2782 = vrcp.pop %v2775
  %v2783 = vrcp.pop %v2778
  %v2784 = vmul.f32 %v2755, %v2779
  %v2785 = vmul.f32 %v2757, %v2780
  %v2786 = vmul.f32 %v2759, %v2781
  %v2787 = vmul.f32 %v2761, %v2782
  %v2788 = vmul.f32 %v2763, %v2783
  %v2789 = vpack.c.bf16 %v2785, %v2784
  %v2790 = vpack.c.bf16 %v2787, %v2786
  %v2791 = vpack.c.bf16 %v2788, %v2788
  %2792 = vrot.lane.b32.xlu0 %v2219, 40
  %v2793 = vpop.permute.xlu0 %2792
  %2794 = vrot.lane.b32.xlu0 %v2220, 40
  %v2795 = vpop.permute.xlu0 %2794
  %2796 = vrot.lane.b32.xlu0 %v2221, 40
  %v2797 = vpop.permute.xlu0 %2796
  %v2801 = vsel %vm1035, %v2789, 0
  %v2804 = vsel %vm1035, %v2790, 0
  %v2807 = vsel %vm1035, %v2791, 0
  %v2810 = vsel %vm1111, %v2797, 0
  %2812 = vmatpush.bf16.msra.mxu0 0
  %2813 = vmatpush.bf16.msra.mxu0 0
  %2814 = vmatpush.bf16.msra.mxu0 0
  %2815 = vmatpush.bf16.msra.mxu0 0
  %2816 = vmatpush.bf16.msra.mxu0 0
  %2817 = vmatpush.bf16.msra.mxu0 %v2810
  %2818 = vmatpush.bf16.msra.mxu0 %v2795
  %2819 = vmatpush.bf16.msra.mxu0 %v2793
  %2820 = vmatmul.bf16.gmra.mxu0 %v2801
  %v2821 = vpop.f32.mrf.mxu0
  %v2822 = vadd.f32 0.0, %v2821
  %v2823 = vpop.f32.mrf.mxu0
  %v2824 = vadd.f32 0.0, %v2823
  %2825 = vmatmul.bf16.gmra.mxu0 %v2804
  %v2826 = vpop.f32.mrf.mxu0
  %v2827 = vadd.f32 0.0, %v2826
  %v2828 = vpop.f32.mrf.mxu0
  %v2829 = vadd.f32 0.0, %v2828
  %2830 = vmatmul.bf16.gmra.mxu0 %v2807
  %v2831 = vpop.f32.mrf.mxu0
  %v2832 = vadd.f32 0.0, %v2831
  %v2833 = vpop.f32.mrf.mxu0
  %2834 = vdwg.mxu0
  %2840 = vrot.lane.b32.xlu0 %v2514, 8
  %v2841 = vpop.permute.xlu0 %2840
  %2842 = vrot.lane.b32.xlu0 %v2516, 8
  %v2843 = vpop.permute.xlu0 %2842
  %2844 = vrot.lane.b32.xlu0 %v2519, 8
  %v2845 = vpop.permute.xlu0 %2844
  %2846 = vrot.lane.b32.xlu0 %v2521, 8
  %v2847 = vpop.permute.xlu0 %2846
  %2848 = vrot.lane.b32.xlu0 %v2524, 8
  %v2849 = vpop.permute.xlu0 %2848
  %2860 = vrot.lane.b32.xlu0 %v2668, 16
  %v2861 = vpop.permute.xlu0 %2860
  %2862 = vrot.lane.b32.xlu0 %v2670, 16
  %v2863 = vpop.permute.xlu0 %2862
  %2864 = vrot.lane.b32.xlu0 %v2673, 16
  %v2865 = vpop.permute.xlu0 %2864
  %2866 = vrot.lane.b32.xlu0 %v2675, 16
  %v2867 = vpop.permute.xlu0 %2866
  %2868 = vrot.lane.b32.xlu0 %v2678, 16
  %v2869 = vpop.permute.xlu0 %2868
  %2880 = vrot.lane.b32.xlu0 %v2822, 24
  %v2881 = vpop.permute.xlu0 %2880
  %2882 = vrot.lane.b32.xlu0 %v2824, 24
  %v2883 = vpop.permute.xlu0 %2882
  %2884 = vrot.lane.b32.xlu0 %v2827, 24
  %v2885 = vpop.permute.xlu0 %2884
  %2886 = vrot.lane.b32.xlu0 %v2829, 24
  %v2887 = vpop.permute.xlu0 %2886
  %2888 = vrot.lane.b32.xlu0 %v2832, 24
  %v2889 = vpop.permute.xlu0 %2888
  %v2895 = vsel %vm993, %v2360, %v2841
  %v2896 = vsel %vm993, %v2362, %v2843
  %v2897 = vsel %vm993, %v2365, %v2845
  %v2898 = vsel %vm993, %v2367, %v2847
  %v2899 = vsel %vm993, %v2370, %v2849
  %v2900 = vsel %vm1665, %v2895, %v2861
  %v2901 = vsel %vm1665, %v2896, %v2863
  %v2902 = vsel %vm1665, %v2897, %v2865
  %v2903 = vsel %vm1665, %v2898, %v2867
  %v2904 = vsel %vm1665, %v2899, %v2869
  %v2905 = vsel %vm1671, %v2900, %v2881
  %v2906 = vsel %vm1671, %v2901, %v2883
  %v2907 = vsel %vm1671, %v2902, %v2885
  %v2908 = vsel %vm1671, %v2903, %v2887
  %v2909 = vsel %vm1671, %v2904, %v2889
  %v2910 = vpack.c.bf16 %v2906, %v2905
  %v2911 = vpack.c.bf16 %v2908, %v2907
  %v2912 = vpack.c.bf16 %v2909, %v2909
  %2913 = vrot.lane.b32.xlu0 %v2183, 32
  %v2914 = vpop.permute.xlu0 %2913
  %2915 = vrot.lane.b32.xlu0 %v2184, 32
  %v2916 = vpop.permute.xlu0 %2915
  %v2920 = vsel %vm793, %v2910, 0
  %v2923 = vsel %vm793, %v2911, 0
  %v2926 = vsel %vm793, %v2912, 0
  %2928 = vmatpush.bf16.msra.mxu0 0
  %2929 = vmatpush.bf16.msra.mxu0 0
  %2930 = vmatpush.bf16.msra.mxu0 0
  %2931 = vmatpush.bf16.msra.mxu0 0
  %2932 = vmatpush.bf16.msra.mxu0 0
  %2933 = vmatpush.bf16.msra.mxu0 0
  %2934 = vmatpush.bf16.msra.mxu0 %v2916
  %2935 = vmatpush.bf16.msra.mxu0 %v2914
  %2936 = vmatmul.bf16.gmra.mxu0 %v2920
  %v2937 = vpop.f32.mrf.mxu0
  %v2938 = vadd.f32 0.0, %v2937
  %v2939 = vpop.f32.mrf.mxu0
  %v2940 = vadd.f32 0.0, %v2939
  %2941 = vmatmul.bf16.gmra.mxu0 %v2923
  %v2942 = vpop.f32.mrf.mxu0
  %v2943 = vadd.f32 0.0, %v2942
  %v2944 = vpop.f32.mrf.mxu0
  %v2945 = vadd.f32 0.0, %v2944
  %2946 = vmatmul.bf16.gmra.mxu0 %v2926
  %v2947 = vpop.f32.mrf.mxu0
  %v2948 = vadd.f32 0.0, %v2947
  %v2949 = vpop.f32.mrf.mxu0
  %2950 = vdwg.mxu0
  %v2951 = vadd.f32 %v2027, %v2938
  %v2952 = vadd.f32 %v2028, %v2940
  %v2953 = vadd.f32 %v2029, %v2943
  %v2954 = vadd.f32 %v2030, %v2945
  %v2955 = vadd.f32 %v2031, %v2948
  %v2956 = vperm.slane %v2033, 3
  %v2957 = vadd.f32 %v2951, %v2956
  %v2958 = vadd.f32 %v2952, %v2956
  %v2959 = vadd.f32 %v2953, %v2956
  %v2960 = vadd.f32 %v2954, %v2956
  %v2961 = vadd.f32 %v2955, %v2956
  %v2962 = vsel %vm793, %v2957, 0.0
  %2963 = vadd.xlane.f32.xlu0 %v2962
  %v2964 = vpop.xlane.xlu0 %2963
  %v2965 = vsel %vm793, %v2958, 0.0
  %2966 = vadd.xlane.f32.xlu0 %v2965
  %v2967 = vpop.xlane.xlu0 %2966
  %v2968 = vsel %vm793, %v2959, 0.0
  %2969 = vadd.xlane.f32.xlu0 %v2968
  %v2970 = vpop.xlane.xlu0 %2969
  %v2971 = vsel %vm793, %v2960, 0.0
  %2972 = vadd.xlane.f32.xlu0 %v2971
  %v2973 = vpop.xlane.xlu0 %2972
  %v2974 = vsel %vm793, %v2961, 0.0
  %2975 = vadd.xlane.f32.xlu0 %v2974
  %v2976 = vpop.xlane.xlu0 %2975
  %v2977 = vmul.f32 %v2964, %v815
  %v2978 = vmul.f32 %v2967, %v815
  %v2979 = vmul.f32 %v2970, %v815
  %v2980 = vmul.f32 %v2973, %v815
  %v2981 = vmul.f32 %v2976, %v815
  %v2982 = vmul.f32 %v2957, %v2957
  %v2983 = vmul.f32 %v2958, %v2958
  %v2984 = vmul.f32 %v2959, %v2959
  %v2985 = vmul.f32 %v2960, %v2960
  %v2986 = vmul.f32 %v2961, %v2961
  %v2987 = vsel %vm793, %v2982, 0.0
  %2988 = vadd.xlane.f32.xlu0 %v2987
  %v2989 = vpop.xlane.xlu0 %2988
  %v2990 = vsel %vm793, %v2983, 0.0
  %2991 = vadd.xlane.f32.xlu0 %v2990
  %v2992 = vpop.xlane.xlu0 %2991
  %v2993 = vsel %vm793, %v2984, 0.0
  %2994 = vadd.xlane.f32.xlu0 %v2993
  %v2995 = vpop.xlane.xlu0 %2994
  %v2996 = vsel %vm793, %v2985, 0.0
  %2997 = vadd.xlane.f32.xlu0 %v2996
  %v2998 = vpop.xlane.xlu0 %2997
  %v2999 = vsel %vm793, %v2986, 0.0
  %3000 = vadd.xlane.f32.xlu0 %v2999
  %v3001 = vpop.xlane.xlu0 %3000
  %v3002 = vmul.f32 %v2989, %v815
  %v3003 = vmul.f32 %v2992, %v815
  %v3004 = vmul.f32 %v2995, %v815
  %v3005 = vmul.f32 %v2998, %v815
  %v3006 = vmul.f32 %v3001, %v815
  %v3007 = vmul.f32 %v2977, %v2977
  %v3008 = vmul.f32 %v2978, %v2978
  %v3009 = vmul.f32 %v2979, %v2979
  %v3010 = vmul.f32 %v2980, %v2980
  %v3011 = vmul.f32 %v2981, %v2981
  %v3012 = vsub.f32 %v3002, %v3007
  %v3013 = vsub.f32 %v3003, %v3008
  %v3014 = vsub.f32 %v3004, %v3009
  %v3015 = vsub.f32 %v3005, %v3010
  %v3016 = vsub.f32 %v3006, %v3011
  %v3017 = vsub.f32 %v2957, %v2977
  %v3018 = vsub.f32 %v2958, %v2978
  %v3019 = vsub.f32 %v2959, %v2979
  %v3020 = vsub.f32 %v2960, %v2980
  %v3021 = vsub.f32 %v2961, %v2981
  %v3022 = vadd.f32 %v3012, 1e-06
  %v3023 = vadd.f32 %v3013, 1e-06
  %v3024 = vadd.f32 %v3014, 1e-06
  %v3025 = vadd.f32 %v3015, 1e-06
  %v3026 = vadd.f32 %v3016, 1e-06
  %v3027 = vrsqrt.pop %v3022
  %v3028 = vmul.f32 %v3027, %v3022
  %v3029 = vmul.f32 %v3028, %v3027
  %v3030 = vmul.f32 0.5, %v3029
  %v3031 = vsub.f32 1.5, %v3030
  %v3032 = vmul.f32 %v3027, %v3031
  %vm3033 = vweird.f32 %v3022
  %vm3034 = vweird.f32 %v3027
  %vm3035 = vmor %vm3033, %vm3034
  %v3036 = vsel %vm3035, %v3027, %v3032
  %v3037 = vrsqrt.pop %v3023
  %v3038 = vmul.f32 %v3037, %v3023
  %v3039 = vmul.f32 %v3038, %v3037
  %v3040 = vmul.f32 0.5, %v3039
  %v3041 = vsub.f32 1.5, %v3040
  %v3042 = vmul.f32 %v3037, %v3041
  %vm3043 = vweird.f32 %v3023
  %vm3044 = vweird.f32 %v3037
  %vm3045 = vmor %vm3043, %vm3044
  %v3046 = vsel %vm3045, %v3037, %v3042
  %v3047 = vrsqrt.pop %v3024
  %v3048 = vmul.f32 %v3047, %v3024
  %v3049 = vmul.f32 %v3048, %v3047
  %v3050 = vmul.f32 0.5, %v3049
  %v3051 = vsub.f32 1.5, %v3050
  %v3052 = vmul.f32 %v3047, %v3051
  %vm3053 = vweird.f32 %v3024
  %vm3054 = vweird.f32 %v3047
  %vm3055 = vmor %vm3053, %vm3054
  %v3056 = vsel %vm3055, %v3047, %v3052
  %v3057 = vrsqrt.pop %v3025
  %v3058 = vmul.f32 %v3057, %v3025
  %v3059 = vmul.f32 %v3058, %v3057
  %v3060 = vmul.f32 0.5, %v3059
  %v3061 = vsub.f32 1.5, %v3060
  %v3062 = vmul.f32 %v3057, %v3061
  %vm3063 = vweird.f32 %v3025
  %vm3064 = vweird.f32 %v3057
  %vm3065 = vmor %vm3063, %vm3064
  %v3066 = vsel %vm3065, %v3057, %v3062
  %v3067 = vrsqrt.pop %v3026
  %v3068 = vmul.f32 %v3067, %v3026
  %v3069 = vmul.f32 %v3068, %v3067
  %v3070 = vmul.f32 0.5, %v3069
  %v3071 = vsub.f32 1.5, %v3070
  %v3072 = vmul.f32 %v3067, %v3071
  %vm3073 = vweird.f32 %v3026
  %vm3074 = vweird.f32 %v3067
  %vm3075 = vmor %vm3073, %vm3074
  %v3076 = vsel %vm3075, %v3067, %v3072
  %v3077 = vmul.f32 %v3017, %v3036
  %v3078 = vmul.f32 %v3018, %v3046
  %v3079 = vmul.f32 %v3019, %v3056
  %v3080 = vmul.f32 %v3020, %v3066
  %v3081 = vmul.f32 %v3021, %v3076
  %v3082 = vperm.slane %v2033, 4
  %v3083 = vmul.f32 %v3077, %v3082
  %v3084 = vmul.f32 %v3078, %v3082
  %v3085 = vmul.f32 %v3079, %v3082
  %v3086 = vmul.f32 %v3080, %v3082
  %v3087 = vmul.f32 %v3081, %v3082
  %v3088 = vperm.slane %v2033, 5
  %v3089 = vadd.f32 %v3083, %v3088
  %v3090 = vadd.f32 %v3084, %v3088
  %v3091 = vadd.f32 %v3085, %v3088
  %v3092 = vadd.f32 %v3086, %v3088
  %v3093 = vadd.f32 %v3087, %v3088
  %v3094 = vpack.c.bf16 %v3090, %v3089
  %v3095 = vpack.c.bf16 %v3092, %v3091
  %v3096 = vpack.c.bf16 %v3093, %v3093
  %s3097 = scalar_lea.vmem %s4, 16
  %v3098 = vld [vmem:[%s3097] sm:$0xf]
  %v3099 = vld [vmem:[%s3097 + $0x4] sm:$0xf]
  %v3100 = vld [vmem:[%s3097 + $0x8] sm:$0xf]
  %v3101 = vld [vmem:[%s3097 + $0xc] sm:$0xf]
  %v3102 = vperm.slane %v2033, 6
  %v3107 = vunpack.c.l.b16 %v3098
  %v3108 = vunpack.c.l.b16 %v3099
  %v3109 = vunpack.c.l.b16 %v3100
  %v3110 = vunpack.c.l.b16 %v3101
  %v3111 = vpack.c.b16 %v3108, %v3107
  %v3112 = vpack.c.b16 %v3110, %v3109
  %v3116 = vsel %vm793, %v3094, 0
  %v3119 = vsel %vm793, %v3095, 0
  %v3122 = vsel %vm793, %v3096, 0
  %3124 = vmatpush.bf16.msra.mxu0 0
  %3125 = vmatpush.bf16.msra.mxu0 0
  %3126 = vmatpush.bf16.msra.mxu0 0
  %3127 = vmatpush.bf16.msra.mxu0 0
  %3128 = vmatpush.bf16.msra.mxu0 0
  %3129 = vmatpush.bf16.msra.mxu0 0
  %3130 = vmatpush.bf16.msra.mxu0 %v3112
  %3131 = vmatpush.bf16.msra.mxu0 %v3111
  %3132 = vmatmul.bf16.gmra.mxu0 %v3116
  %v3133 = vpop.f32.mrf.mxu0
  %v3134 = vadd.f32 %v3102, %v3133
  %v3135 = vpop.f32.mrf.mxu0
  %v3136 = vadd.f32 %v3102, %v3135
  %3137 = vmatmul.bf16.gmra.mxu0 %v3119
  %v3138 = vpop.f32.mrf.mxu0
  %v3139 = vadd.f32 %v3102, %v3138
  %v3140 = vpop.f32.mrf.mxu0
  %v3141 = vadd.f32 %v3102, %v3140
  %3142 = vmatmul.bf16.gmra.mxu0 %v3122
  %v3143 = vpop.f32.mrf.mxu0
  %v3144 = vadd.f32 %v3102, %v3143
  %v3145 = vpop.f32.mrf.mxu0
  %3146 = vdwg.mxu0
  %v3147 = vmul.f32 %v3134, 0.5
  %v3148 = vmul.f32 %v3136, 0.5
  %v3149 = vmul.f32 %v3139, 0.5
  %v3150 = vmul.f32 %v3141, 0.5
  %v3151 = vmul.f32 %v3144, 0.5
  %v3152 = vmul.f32 %v3134, 0.044715
  %v3153 = vmul.f32 %v3136, 0.044715
  %v3154 = vmul.f32 %v3139, 0.044715
  %v3155 = vmul.f32 %v3141, 0.044715
  %v3156 = vmul.f32 %v3144, 0.044715
  %v3157 = vmul.f32 %v3152, %v3134
  %v3158 = vmul.f32 %v3153, %v3136
  %v3159 = vmul.f32 %v3154, %v3139
  %v3160 = vmul.f32 %v3155, %v3141
  %v3161 = vmul.f32 %v3156, %v3144
  %v3162 = vmul.f32 %v3157, %v3134
  %v3163 = vmul.f32 %v3158, %v3136
  %v3164 = vmul.f32 %v3159, %v3139
  %v3165 = vmul.f32 %v3160, %v3141
  %v3166 = vmul.f32 %v3161, %v3144
  %v3167 = vadd.f32 %v3134, %v3162
  %v3168 = vadd.f32 %v3136, %v3163
  %v3169 = vadd.f32 %v3139, %v3164
  %v3170 = vadd.f32 %v3141, %v3165
  %v3171 = vadd.f32 %v3144, %v3166
  %v3172 = vmul.f32 %v3167, 0.7978846
  %v3173 = vmul.f32 %v3168, 0.7978846
  %v3174 = vmul.f32 %v3169, 0.7978846
  %v3175 = vmul.f32 %v3170, 0.7978846
  %v3176 = vmul.f32 %v3171, 0.7978846
  %v3177 = vtanh.pop %v3172
  %v3178 = vtanh.pop %v3173
  %v3179 = vtanh.pop %v3174
  %v3180 = vtanh.pop %v3175
  %v3181 = vtanh.pop %v3176
  %v3182 = vadd.f32 %v3177, 1.0
  %v3183 = vadd.f32 %v3178, 1.0
  %v3184 = vadd.f32 %v3179, 1.0
  %v3185 = vadd.f32 %v3180, 1.0
  %v3186 = vadd.f32 %v3181, 1.0
  %v3187 = vmul.f32 %v3147, %v3182
  %v3188 = vmul.f32 %v3148, %v3183
  %v3189 = vmul.f32 %v3149, %v3184
  %v3190 = vmul.f32 %v3150, %v3185
  %v3191 = vmul.f32 %v3151, %v3186
  %v3192 = vpack.c.bf16 %v3188, %v3187
  %v3193 = vpack.c.bf16 %v3190, %v3189
  %v3194 = vpack.c.bf16 %v3191, %v3191
  %s3195 = scalar_lea.vmem %s5, 32
  %v3196 = vld [vmem:[%s3195] sm:$0xf]
  %v3197 = vld [vmem:[%s3195 + $0x4] sm:$0xf]
  %v3198 = vld [vmem:[%s3195 + $0x8] sm:$0xf]
  %v3199 = vld [vmem:[%s3195 + $0xc] sm:$0xf]
  %v3200 = vld [vmem:[%s3195 + $0x10] sm:$0xf]
  %v3201 = vld [vmem:[%s3195 + $0x14] sm:$0xf]
  %v3202 = vld [vmem:[%s3195 + $0x18] sm:$0xf]
  %v3203 = vld [vmem:[%s3195 + $0x1c] sm:$0xf]
  %v3204 = vperm.slane %v2033, 7
  %v3213 = vunpack.c.l.b16 %v3196
  %v3214 = vunpack.c.l.b16 %v3197
  %v3215 = vunpack.c.l.b16 %v3198
  %v3216 = vunpack.c.l.b16 %v3199
  %v3217 = vunpack.c.l.b16 %v3200
  %v3218 = vunpack.c.l.b16 %v3201
  %v3219 = vunpack.c.l.b16 %v3202
  %v3220 = vunpack.c.l.b16 %v3203
  %v3221 = vpack.c.b16 %v3214, %v3213
  %v3222 = vpack.c.b16 %v3216, %v3215
  %v3223 = vpack.c.b16 %v3218, %v3217
  %v3224 = vpack.c.b16 %v3220, %v3219
  %v3230 = vsel %vm1994, %v3192, 0
  %v3233 = vsel %vm1994, %v3193, 0
  %v3236 = vsel %vm1994, %v3194, 0
  %3238 = vmatpush.bf16.msra.mxu0 0
  %3239 = vmatpush.bf16.msra.mxu0 0
  %3240 = vmatpush.bf16.msra.mxu0 0
  %3241 = vmatpush.bf16.msra.mxu0 0
  %3242 = vmatpush.bf16.msra.mxu0 %v3224
  %3243 = vmatpush.bf16.msra.mxu0 %v3223
  %3244 = vmatpush.bf16.msra.mxu0 %v3222
  %3245 = vmatpush.bf16.msra.mxu0 %v3221
  %3246 = vmatmul.bf16.gmra.mxu0 %v3230
  %v3247 = vpop.f32.mrf.mxu0
  %v3248 = vadd.f32 %v3204, %v3247
  %v3249 = vpop.f32.mrf.mxu0
  %v3250 = vadd.f32 %v3204, %v3249
  %3251 = vmatmul.bf16.gmra.mxu0 %v3233
  %v3252 = vpop.f32.mrf.mxu0
  %v3253 = vadd.f32 %v3204, %v3252
  %v3254 = vpop.f32.mrf.mxu0
  %v3255 = vadd.f32 %v3204, %v3254
  %3256 = vmatmul.bf16.gmra.mxu0 %v3236
  %v3257 = vpop.f32.mrf.mxu0
  %v3258 = vadd.f32 %v3204, %v3257
  %v3259 = vpop.f32.mrf.mxu0
  %3260 = vdwg.mxu0
  %v3261 = vadd.f32 %v2957, %v3248
  %v3262 = vadd.f32 %v2958, %v3250
  %v3263 = vadd.f32 %v2959, %v3253
  %v3264 = vadd.f32 %v2960, %v3255
  %v3265 = vadd.f32 %v2961, %v3258
  %s3266 = scalar_lea.vmem %s6, 16
  %v3267 = vld [vmem:[%s3266] sm:$0xff]
  %v3268 = vmul.u32 %v651, 5
  %vm3269 = vcmp.eq.s32.totalorder %v657, %v3268
  %v3270 = vsel %vm3269, 1, 0
  %v3271 = vcvt.s32.f32 %v3270
  %v3273 = vsel %vm1035, %v3271, 0
  %3275 = vmatpush.msra.mxu0 0.0
  %3276 = vmatpush.msra.mxu0 0.0
  %3277 = vmatpush.msra.mxu0 0.0
  %3278 = vmatpush.msra.mxu0 0.0
  %3279 = vmatpush.msra.mxu0 0.0
  %3280 = vmatpush.msra.mxu0 0.0
  %3281 = vmatpush.msra.mxu0 0.0
  %3282 = vmatpush.msra.mxu0 0.0
  %3283 = vmatpush.msra.mxu0 0.0
  %3284 = vmatpush.msra.mxu0 0.0
  %3285 = vmatpush.msra.mxu0 0.0
  %3286 = vmatpush.msra.mxu0 %v3265
  %3287 = vmatpush.msra.mxu0 %v3264
  %3288 = vmatpush.msra.mxu0 %v3263
  %3289 = vmatpush.msra.mxu0 %v3262
  %3290 = vmatpush.msra.mxu0 %v3261
  %3291 = vmatmul.f32.gmra.mxu0 %v3273
  %v3292 = vpop.f32.mrf.mxu0
  %v3293 = vadd.f32 0.0, %v3292
  %3294 = vdwg.mxu0
  %v3295 = vsel %vm793, %v3293, 0.0
  %3296 = vadd.xlane.f32.xlu0 %v3295
  %v3297 = vpop.xlane.xlu0 %3296
  %v3298 = vmul.f32 %v3297, %v815
  %v3299 = vmul.f32 %v3293, %v3293
  %v3300 = vsel %vm793, %v3299, 0.0
  %3301 = vadd.xlane.f32.xlu0 %v3300
  %v3302 = vpop.xlane.xlu0 %3301
  %v3303 = vmul.f32 %v3302, %v815
  %v3304 = vmul.f32 %v3298, %v3298
  %v3305 = vsub.f32 %v3303, %v3304
  %v3306 = vsub.f32 %v3293, %v3298
  %v3307 = vadd.f32 %v3305, 1e-06
  %v3308 = vrsqrt.pop %v3307
  %v3309 = vmul.f32 %v3308, %v3307
  %v3310 = vmul.f32 %v3309, %v3308
  %v3311 = vmul.f32 0.5, %v3310
  %v3312 = vsub.f32 1.5, %v3311
  %v3313 = vmul.f32 %v3308, %v3312
  %vm3314 = vweird.f32 %v3307
  %vm3315 = vweird.f32 %v3308
  %vm3316 = vmor %vm3314, %vm3315
  %v3317 = vsel %vm3316, %v3308, %v3313
  %v3318 = vmul.f32 %v3306, %v3317
  %v3319 = vperm.slane %v3267, 0
  %v3320 = vmul.f32 %v3318, %v3319
  %v3321 = vperm.slane %v3267, 1
  %v3322 = vadd.f32 %v3320, %v3321
  %v3323 = vperm.slane %v3267, 2
  %v3324 = vmul.f32 %v3322, %v3323
  %v3325 = vsel %vm793, %v3324, 0.0
  %3326 = vadd.xlane.f32.xlu0 %v3325
  %v3327 = vpop.xlane.xlu0 %3326
  %v3328 = vperm.slane %v3267, 3
  %v3329 = vadd.f32 %v3327, %v3328
  %vm3330 = vcmask 7168
  %3331 = vst.msk [vmem:[%s7] sm:$0xff] %vm3330, %v3329
  // Predicated region
  $region30: #{vit_forward.1} parent=0 // pred_check
    _
  $region31: #{vit_forward.1} parent=0 // pred_check_branch
    %3333 = sbr.rel (0) target = $region33
  $region32: #{vit_forward.1} parent=0 // pred_region
    _
  $region33: #{vit_forward.1} parent=0 // pred_fallthru
    _
  // Predicated region
  $region34: #{vit_forward.1} parent=0 // pred_check
    _
  $region35: #{vit_forward.1} parent=0 // pred_check_branch
    %3335 = sbr.rel (0) target = $region37
  $region36: #{vit_forward.1} parent=0 // pred_region
    _
  $region37: #{vit_forward.1} parent=0 // pred_fallthru
    _

</llo_original>
